<compile_context>
chip_gen: v7x
topology: tpu7x:2x2x1
jax: 0.10.0
libtpu: 0.0.40
codegen_flags: <defaults>
</compile_context>

<pallas_src>
import functools

import jax
import jax.numpy as jnp
from jax import lax
from jax.experimental import pallas as pl
from jax.experimental.pallas import tpu as pltpu


def _round_up(n, m):
    return ((n + m - 1) // m) * m


# -----------------------------------------------------------------------------
# XLA glue: fold-2 space-to-depth of the zero-padded NHWC activation:
#   fold2(x)[b, r, j, (2*s + t)*C + c] == pad1(x)[b, 2r + s, 2j + t, c]
# After this, every 3x3 / stride-2 tap is a *static unit-stride slice* of the
# folded tensor, so the kernels gather conv patches in VMEM instead of reading a
# 2.25x im2col tensor from HBM.
# -----------------------------------------------------------------------------
def _fold2(x):
    B, H, W, C = x.shape
    xp = jnp.pad(x, ((0, 0), (1, 1), (1, 1), (0, 0)))
    xp = xp.reshape(B, (H + 2) // 2, 2, (W + 2) // 2, 2, C)
    xp = jnp.transpose(xp, (0, 1, 3, 2, 4, 5))
    return xp.reshape(B, (H + 2) // 2, (W + 2) // 2, 4 * C)


# -----------------------------------------------------------------------------
# In-kernel im2col: the 9 taps are static slices of the folded block,
# concatenated along lanes -> (Ho, Wo, 9*Cin), columns in (kh, kw, c) order to
# match the weight layout produced by prepare_params.
# -----------------------------------------------------------------------------
def _tap_patches(g_ref, Ho, Wo, cin):
    taps = []
    for kh in range(3):
        for kw in range(3):
            c0 = (2 * (kh % 2) + (kw % 2)) * cin
            taps.append(g_ref[0,
                              kh // 2:kh // 2 + Ho,
                              kw // 2:kw // 2 + Wo,
                              c0:c0 + cin])
    return jnp.concatenate(taps, axis=-1)


def _conv_relu_kernel(g_ref, w_ref, b_ref, o_ref, *, Ho, Wo, cin):
    """out[b] = relu(im2col(x[b]) @ W + b); one spatial row per MXU dot."""
    a = _tap_patches(g_ref, Ho, Wo, cin)                    # (Ho, Wo, 9*cin) bf16
    for ho in range(Ho):
        row = jnp.dot(a[ho], w_ref[...],                    # (Wo, 9*cin)@(9*cin, cout)
                      preferred_element_type=jnp.float32)
        row = jnp.maximum(row + b_ref[...], 0.0)            # f32 epilogue
        o_ref[0, ho * Wo:(ho + 1) * Wo, :] = row.astype(o_ref.dtype)


def _conv_relu_fc_kernel(g_ref, w_ref, b_ref, wfc_ref, bfc_ref, z_ref, *, Ho, Wo, cin):
    """conv3 + ReLU + fused fc_mu/fc_logvar; conv3 output never leaves VMEM."""
    cout = w_ref.shape[1]
    a = _tap_patches(g_ref, Ho, Wo, cin)
    z = bfc_ref[...]                                        # (1, Np) f32 accumulator
    for ho in range(Ho):
        row = jnp.dot(a[ho], w_ref[...], preferred_element_type=jnp.float32)
        row = jnp.maximum(row + b_ref[...], 0.0).astype(jnp.bfloat16)   # (Wo, cout)
        # TODO(synk): for large feature counts this is better as a single flattened dot.
        for wo in range(Wo):
            k0 = (ho * Wo + wo) * cout
            z = z + jnp.dot(row[wo:wo + 1, :], wfc_ref[k0:k0 + cout, :],
                            preferred_element_type=jnp.float32)
    z_ref[0] = z


_COMPILER_PARAMS = pltpu.CompilerParams(
    dimension_semantics=("parallel",),          # batch grid -> megacore on v7x
    vmem_limit_bytes=32 * 1024 * 1024,          # valid on v5e/v6e/v7x; blocks are tiny
)


def conv_relu(g, w, b, *, Ho, Wo):
    B, nbh, nbw, cin4 = g.shape
    cin = cin4 // 4
    K, cout = w.shape
    assert K == 9 * cin
    return pl.pallas_call(
        functools.partial(_conv_relu_kernel, Ho=Ho, Wo=Wo, cin=cin),
        out_shape=jax.ShapeDtypeStruct((B, Ho * Wo, cout), jnp.bfloat16),
        grid=(B,),
        in_specs=[
            pl.BlockSpec((1, nbh, nbw, cin4), lambda bi: (bi, 0, 0, 0)),
            pl.BlockSpec((K, cout), lambda bi: (0, 0)),
            pl.BlockSpec((1, cout), lambda bi: (0, 0)),
        ],
        out_specs=pl.BlockSpec((1, Ho * Wo, cout), lambda bi: (bi, 0, 0)),
        compiler_params=_COMPILER_PARAMS,
    )(g, w, b)


def conv_relu_fc(g, w, b, wfc, bfc, *, Ho, Wo):
    B, nbh, nbw, cin4 = g.shape
    cin = cin4 // 4
    K, cout = w.shape
    F, Np = wfc.shape
    assert K == 9 * cin and F == Ho * Wo * cout
    out = pl.pallas_call(
        functools.partial(_conv_relu_fc_kernel, Ho=Ho, Wo=Wo, cin=cin),
        out_shape=jax.ShapeDtypeStruct((B, 1, Np), jnp.float32),
        grid=(B,),
        in_specs=[
            pl.BlockSpec((1, nbh, nbw, cin4), lambda bi: (bi, 0, 0, 0)),
            pl.BlockSpec((K, cout), lambda bi: (0, 0)),
            pl.BlockSpec((1, cout), lambda bi: (0, 0)),
            pl.BlockSpec((F, Np), lambda bi: (0, 0)),
            pl.BlockSpec((1, Np), lambda bi: (0, 0)),
        ],
        out_specs=pl.BlockSpec((1, 1, Np), lambda bi: (bi, 0, 0)),
        compiler_params=_COMPILER_PARAMS,
    )(g, w, b, wfc, bfc)
    return out.reshape(B, Np)


# -----------------------------------------------------------------------------
# One-time parameter preparation (layout + padding + bf16 cast).
# -----------------------------------------------------------------------------
def prepare_params(params, image_size, latent_dim):
    Hf, Wf = image_size[0] // 8, image_size[1] // 8
    O3 = params["w3"].shape[0]                              # 256

    def prep_conv(w, b):
        O, I, KH, KW = w.shape
        # OIHW -> (KH, KW, I, O) -> (KH*KW*I, O): matches in-kernel (kh, kw, c) tap order.
        wm = jnp.transpose(w, (2, 3, 1, 0)).reshape(KH * KW * I, O)
        return wm.astype(jnp.bfloat16), b.reshape(1, O).astype(jnp.float32)

    w1, b1 = prep_conv(params["w1"], params["b1"])
    w2, b2 = prep_conv(params["w2"], params["b2"])
    w3, b3 = prep_conv(params["w3"], params["b3"])

    # FC: permute columns from PyTorch NCHW flatten (c,h,w) to the kernel's (h,w,c)
    # order, fuse mu/logvar along N, pad N to a lane-dense multiple of 128.
    def perm_fc(w):
        return (w.reshape(latent_dim, O3, Hf, Wf)
                 .transpose(0, 2, 3, 1)
                 .reshape(latent_dim, Hf * Wf * O3))

    wfc = jnp.concatenate([perm_fc(params["w_mu"]), perm_fc(params["w_lv"])], axis=0)
    Np = _round_up(2 * latent_dim, 128)
    wfc = jnp.pad(wfc, ((0, Np - 2 * latent_dim), (0, 0))).T.astype(jnp.bfloat16)
    bfc = jnp.pad(jnp.concatenate([params["b_mu"], params["b_lv"]]),
                  (0, Np - 2 * latent_dim)).reshape(1, Np).astype(jnp.float32)

    return {"w1": w1, "b1": b1, "w2": w2, "b2": b2, "w3": w3, "b3": b3,
            "w_fc": wfc, "b_fc": bfc}


# -----------------------------------------------------------------------------
# Full ImageEncoder forward (NCHW input, PyTorch-equivalent outputs).
# -----------------------------------------------------------------------------
def image_encoder_forward(x, prep, *, latent_dim):
    B, C, H, W = x.shape
    assert H % 8 == 0 and W % 8 == 0
    h = jnp.transpose(x, (0, 2, 3, 1)).astype(jnp.bfloat16)     # NCHW -> NHWC once

    h = conv_relu(_fold2(h), prep["w1"], prep["b1"], Ho=H // 2, Wo=W // 2)
    h = h.reshape(B, H // 2, W // 2, -1)
    h = conv_relu(_fold2(h), prep["w2"], prep["b2"], Ho=H // 4, Wo=W // 4)
    h = h.reshape(B, H // 4, W // 4, -1)
    z = conv_relu_fc(_fold2(h), prep["w3"], prep["b3"], prep["w_fc"], prep["b_fc"],
                     Ho=H // 8, Wo=W // 8)                      # (B, Np) f32
    return z[:, :latent_dim], z[:, latent_dim:2 * latent_dim]


# -----------------------------------------------------------------------------
# Raw (PyTorch-layout) parameter init + pure-JAX f32 reference for validation.
# -----------------------------------------------------------------------------
def init_params(key, in_channels, image_size, latent_dim):
    ks = jax.random.split(key, 10)
    feat = 256 * (image_size[0] // 8) * (image_size[1] // 8)

    def nrm(k, shape, scale=0.05):
        return (scale * jax.random.normal(k, shape)).astype(jnp.float32)

    return {
        "w1": nrm(ks[0], (64, in_channels, 3, 3)), "b1": nrm(ks[1], (64,)),
        "w2": nrm(ks[2], (128, 64, 3, 3)),         "b2": nrm(ks[3], (128,)),
        "w3": nrm(ks[4], (256, 128, 3, 3)),        "b3": nrm(ks[5], (256,)),
        "w_mu": nrm(ks[6], (latent_dim, feat)),    "b_mu": nrm(ks[7], (latent_dim,)),
        "w_lv": nrm(ks[8], (latent_dim, feat)),    "b_lv": nrm(ks[9], (latent_dim,)),
    }


def _reference_forward(x, params):
    def conv(h, w, b):
        out = lax.conv_general_dilated(h, w, window_strides=(2, 2),
                                       padding=((1, 1), (1, 1)),
                                       dimension_numbers=("NCHW", "OIHW", "NCHW"))
        return jnp.maximum(out + b[None, :, None, None], 0.0)

    h = conv(x, params["w1"], params["b1"])
    h = conv(h, params["w2"], params["b2"])
    h = conv(h, params["w3"], params["b3"])
    h = h.reshape(x.shape[0], -1)
    mu = h @ params["w_mu"].T + params["b_mu"]
    logvar = h @ params["w_lv"].T + params["b_lv"]
    return mu, logvar


if __name__ == "__main__":
    B, C, H, W = 2, 3, 16, 16          # small shapes; feat = 256 * 2 * 2
    latent_dim = 32

    key = jax.random.PRNGKey(0)
    k_x, k_p = jax.random.split(key)
    x = jax.random.normal(k_x, (B, C, H, W), dtype=jnp.float32)
    params = init_params(k_p, C, (H, W), latent_dim)
    prep = prepare_params(params, (H, W), latent_dim)       # one-time weight prep

    fwd = jax.jit(functools.partial(image_encoder_forward, latent_dim=latent_dim))
    mu, logvar = fwd(x, prep)
    jax.block_until_ready((mu, logvar))

    assert mu.shape == (B, latent_dim) and logvar.shape == (B, latent_dim)

    # Loose check against an f32 pure-JAX reference (kernel runs bf16 on the MXU).
    mu_ref, lv_ref = _reference_forward(x, params)
    err = max(float(jnp.max(jnp.abs(mu - mu_ref))),
              float(jnp.max(jnp.abs(logvar - lv_ref))))
    assert err < 0.1, f"numerical mismatch vs f32 reference: {err}"

    print("KERNEL_OK")
</pallas_src>

<mosaic_0001>
module attributes {stable_mosaic.version = 11 : i64} {
  func.func @_conv_relu_kernel(%arg0: i32, %arg1: memref<1x9x9x12xbf16, #tpu.memory_space<vmem>>, %arg2: memref<27x64xbf16, #tpu.memory_space<vmem>>, %arg3: memref<1x64xf32, #tpu.memory_space<vmem>>, %arg4: memref<1x64x64xbf16, #tpu.memory_space<vmem>>) attributes {dimension_semantics = [#tpu.dimension_semantics<parallel>], iteration_bounds = array<i64: 2>, scalar_prefetch = 0 : i64, scratch_operands = 0 : i64, tpu.core_type = #tpu.core_type<tc>, window_params = [{transform_indices = @transform_0, window_bounds = array<i64: 1, 9, 9, 12>}, {pipeline_mode = #tpu.pipeline_mode<synchronous>, transform_indices = @transform_1, window_bounds = array<i64: 27, 64>}, {pipeline_mode = #tpu.pipeline_mode<synchronous>, transform_indices = @transform_2, window_bounds = array<i64: 1, 64>}, {transform_indices = @transform_3, window_bounds = array<i64: 1, 64, 64>}]} {
    %c0 = arith.constant 0 : index
    %c0_0 = arith.constant 0 : index
    %c0_1 = arith.constant 0 : index
    %c0_2 = arith.constant 0 : index
    %0 = vector.load %arg1[%c0, %c0_0, %c0_1, %c0_2] : memref<1x9x9x12xbf16, #tpu.memory_space<vmem>>, vector<1x8x8x3xbf16>
    %1 = vector.shape_cast %0 : vector<1x8x8x3xbf16> to vector<8x8x3xbf16>
    %c0_3 = arith.constant 0 : index
    %c0_4 = arith.constant 0 : index
    %c0_5 = arith.constant 0 : index
    %c3 = arith.constant 3 : index
    %2 = vector.load %arg1[%c0_3, %c0_4, %c0_5, %c3] : memref<1x9x9x12xbf16, #tpu.memory_space<vmem>>, vector<1x8x8x3xbf16>
    %3 = vector.shape_cast %2 : vector<1x8x8x3xbf16> to vector<8x8x3xbf16>
    %c0_6 = arith.constant 0 : index
    %c0_7 = arith.constant 0 : index
    %c1 = arith.constant 1 : index
    %c0_8 = arith.constant 0 : index
    %4 = vector.load %arg1[%c0_6, %c0_7, %c1, %c0_8] : memref<1x9x9x12xbf16, #tpu.memory_space<vmem>>, vector<1x8x8x3xbf16>
    %5 = vector.shape_cast %4 : vector<1x8x8x3xbf16> to vector<8x8x3xbf16>
    %c0_9 = arith.constant 0 : index
    %c0_10 = arith.constant 0 : index
    %c0_11 = arith.constant 0 : index
    %c6 = arith.constant 6 : index
    %6 = vector.load %arg1[%c0_9, %c0_10, %c0_11, %c6] : memref<1x9x9x12xbf16, #tpu.memory_space<vmem>>, vector<1x8x8x3xbf16>
    %7 = vector.shape_cast %6 : vector<1x8x8x3xbf16> to vector<8x8x3xbf16>
    %c0_12 = arith.constant 0 : index
    %c0_13 = arith.constant 0 : index
    %c0_14 = arith.constant 0 : index
    %c9 = arith.constant 9 : index
    %8 = vector.load %arg1[%c0_12, %c0_13, %c0_14, %c9] : memref<1x9x9x12xbf16, #tpu.memory_space<vmem>>, vector<1x8x8x3xbf16>
    %9 = vector.shape_cast %8 : vector<1x8x8x3xbf16> to vector<8x8x3xbf16>
    %c0_15 = arith.constant 0 : index
    %c0_16 = arith.constant 0 : index
    %c1_17 = arith.constant 1 : index
    %c6_18 = arith.constant 6 : index
    %10 = vector.load %arg1[%c0_15, %c0_16, %c1_17, %c6_18] : memref<1x9x9x12xbf16, #tpu.memory_space<vmem>>, vector<1x8x8x3xbf16>
    %11 = vector.shape_cast %10 : vector<1x8x8x3xbf16> to vector<8x8x3xbf16>
    %c0_19 = arith.constant 0 : index
    %c1_20 = arith.constant 1 : index
    %c0_21 = arith.constant 0 : index
    %c0_22 = arith.constant 0 : index
    %12 = vector.load %arg1[%c0_19, %c1_20, %c0_21, %c0_22] : memref<1x9x9x12xbf16, #tpu.memory_space<vmem>>, vector<1x8x8x3xbf16>
    %13 = vector.shape_cast %12 : vector<1x8x8x3xbf16> to vector<8x8x3xbf16>
    %c0_23 = arith.constant 0 : index
    %c1_24 = arith.constant 1 : index
    %c0_25 = arith.constant 0 : index
    %c3_26 = arith.constant 3 : index
    %14 = vector.load %arg1[%c0_23, %c1_24, %c0_25, %c3_26] : memref<1x9x9x12xbf16, #tpu.memory_space<vmem>>, vector<1x8x8x3xbf16>
    %15 = vector.shape_cast %14 : vector<1x8x8x3xbf16> to vector<8x8x3xbf16>
    %c0_27 = arith.constant 0 : index
    %c1_28 = arith.constant 1 : index
    %c1_29 = arith.constant 1 : index
    %c0_30 = arith.constant 0 : index
    %16 = vector.load %arg1[%c0_27, %c1_28, %c1_29, %c0_30] : memref<1x9x9x12xbf16, #tpu.memory_space<vmem>>, vector<1x8x8x3xbf16>
    %17 = vector.shape_cast %16 : vector<1x8x8x3xbf16> to vector<8x8x3xbf16>
    %18 = tpu.concatenate %1, %3, %5, %7, %9, %11, %13, %15, %17 in 2 : vector<8x8x3xbf16>, vector<8x8x3xbf16>, vector<8x8x3xbf16>, vector<8x8x3xbf16>, vector<8x8x3xbf16>, vector<8x8x3xbf16>, vector<8x8x3xbf16>, vector<8x8x3xbf16>, vector<8x8x3xbf16> -> vector<8x8x27xbf16>
    %19 = vector.extract_strided_slice %18 {offsets = [0, 0, 0], sizes = [1, 8, 27], strides = [1, 1, 1]} : vector<8x8x27xbf16> to vector<1x8x27xbf16>
    %20 = vector.shape_cast %19 : vector<1x8x27xbf16> to vector<8x27xbf16>
    %c0_31 = arith.constant 0 : index
    %c0_32 = arith.constant 0 : index
    %21 = vector.load %arg2[%c0_31, %c0_32] : memref<27x64xbf16, #tpu.memory_space<vmem>>, vector<27x64xbf16>
    %cst = arith.constant dense<0.000000e+00> : vector<8x64xf32>
    %22 = tpu.matmul %20, %21, %cst {dimension_numbers = #tpu.dot_dimension_numbers<[1], [0], [0], [1], [0, 0, 1, 1], [], []>} : vector<8x27xbf16>, vector<27x64xbf16>, vector<8x64xf32> -> vector<8x64xf32>
    %c0_33 = arith.constant 0 : index
    %c0_34 = arith.constant 0 : index
    %23 = vector.load %arg3[%c0_33, %c0_34] : memref<1x64xf32, #tpu.memory_space<vmem>>, vector<1x64xf32>
    %24 = vector.broadcast %23 : vector<1x64xf32> to vector<8x64xf32>
    %25 = arith.addf %22, %24 : vector<8x64xf32>
    %cst_35 = arith.constant 0.000000e+00 : f32
    %26 = vector.broadcast %cst_35 : f32 to vector<8x64xf32>
    %27 = arith.maximumf %25, %26 : vector<8x64xf32>
    %28 = arith.truncf %27 : vector<8x64xf32> to vector<8x64xbf16>
    %c0_36 = arith.constant 0 : index
    %c0_37 = arith.constant 0 : index
    %c0_38 = arith.constant 0 : index
    %29 = vector.load %arg4[%c0_36, %c0_37, %c0_38] : memref<1x64x64xbf16, #tpu.memory_space<vmem>>, vector<1x8x64xbf16>
    %30 = vector.shape_cast %29 : vector<1x8x64xbf16> to vector<8x64xbf16>
    %31 = vector.shape_cast %28 : vector<8x64xbf16> to vector<1x8x64xbf16>
    tpu.vector_store %arg4[%c0_36, %c0_37, %c0_38], %31 {strides = array<i32>} : memref<1x64x64xbf16, #tpu.memory_space<vmem>>, vector<1x8x64xbf16>,
    %32 = vector.extract_strided_slice %18 {offsets = [1, 0, 0], sizes = [1, 8, 27], strides = [1, 1, 1]} : vector<8x8x27xbf16> to vector<1x8x27xbf16>
    %33 = vector.shape_cast %32 : vector<1x8x27xbf16> to vector<8x27xbf16>
    %c0_39 = arith.constant 0 : index
    %c0_40 = arith.constant 0 : index
    %34 = vector.load %arg2[%c0_39, %c0_40] : memref<27x64xbf16, #tpu.memory_space<vmem>>, vector<27x64xbf16>
    %cst_41 = arith.constant dense<0.000000e+00> : vector<8x64xf32>
    %35 = tpu.matmul %33, %34, %cst_41 {dimension_numbers = #tpu.dot_dimension_numbers<[1], [0], [0], [1], [0, 0, 1, 1], [], []>} : vector<8x27xbf16>, vector<27x64xbf16>, vector<8x64xf32> -> vector<8x64xf32>
    %c0_42 = arith.constant 0 : index
    %c0_43 = arith.constant 0 : index
    %36 = vector.load %arg3[%c0_42, %c0_43] : memref<1x64xf32, #tpu.memory_space<vmem>>, vector<1x64xf32>
    %37 = vector.broadcast %36 : vector<1x64xf32> to vector<8x64xf32>
    %38 = arith.addf %35, %37 : vector<8x64xf32>
    %cst_44 = arith.constant 0.000000e+00 : f32
    %39 = vector.broadcast %cst_44 : f32 to vector<8x64xf32>
    %40 = arith.maximumf %38, %39 : vector<8x64xf32>
    %41 = arith.truncf %40 : vector<8x64xf32> to vector<8x64xbf16>
    %c0_45 = arith.constant 0 : index
    %c8 = arith.constant 8 : index
    %c0_46 = arith.constant 0 : index
    %42 = vector.load %arg4[%c0_45, %c8, %c0_46] : memref<1x64x64xbf16, #tpu.memory_space<vmem>>, vector<1x8x64xbf16>
    %43 = vector.shape_cast %42 : vector<1x8x64xbf16> to vector<8x64xbf16>
    %44 = vector.shape_cast %41 : vector<8x64xbf16> to vector<1x8x64xbf16>
    tpu.vector_store %arg4[%c0_45, %c8, %c0_46], %44 {strides = array<i32>} : memref<1x64x64xbf16, #tpu.memory_space<vmem>>, vector<1x8x64xbf16>,
    %45 = vector.extract_strided_slice %18 {offsets = [2, 0, 0], sizes = [1, 8, 27], strides = [1, 1, 1]} : vector<8x8x27xbf16> to vector<1x8x27xbf16>
    %46 = vector.shape_cast %45 : vector<1x8x27xbf16> to vector<8x27xbf16>
    %c0_47 = arith.constant 0 : index
    %c0_48 = arith.constant 0 : index
    %47 = vector.load %arg2[%c0_47, %c0_48] : memref<27x64xbf16, #tpu.memory_space<vmem>>, vector<27x64xbf16>
    %cst_49 = arith.constant dense<0.000000e+00> : vector<8x64xf32>
    %48 = tpu.matmul %46, %47, %cst_49 {dimension_numbers = #tpu.dot_dimension_numbers<[1], [0], [0], [1], [0, 0, 1, 1], [], []>} : vector<8x27xbf16>, vector<27x64xbf16>, vector<8x64xf32> -> vector<8x64xf32>
    %c0_50 = arith.constant 0 : index
    %c0_51 = arith.constant 0 : index
    %49 = vector.load %arg3[%c0_50, %c0_51] : memref<1x64xf32, #tpu.memory_space<vmem>>, vector<1x64xf32>
    %50 = vector.broadcast %49 : vector<1x64xf32> to vector<8x64xf32>
    %51 = arith.addf %48, %50 : vector<8x64xf32>
    %cst_52 = arith.constant 0.000000e+00 : f32
    %52 = vector.broadcast %cst_52 : f32 to vector<8x64xf32>
    %53 = arith.maximumf %51, %52 : vector<8x64xf32>
    %54 = arith.truncf %53 : vector<8x64xf32> to vector<8x64xbf16>
    %c0_53 = arith.constant 0 : index
    %c16 = arith.constant 16 : index
    %c0_54 = arith.constant 0 : index
    %55 = vector.load %arg4[%c0_53, %c16, %c0_54] : memref<1x64x64xbf16, #tpu.memory_space<vmem>>, vector<1x8x64xbf16>
    %56 = vector.shape_cast %55 : vector<1x8x64xbf16> to vector<8x64xbf16>
    %57 = vector.shape_cast %54 : vector<8x64xbf16> to vector<1x8x64xbf16>
    tpu.vector_store %arg4[%c0_53, %c16, %c0_54], %57 {strides = array<i32>} : memref<1x64x64xbf16, #tpu.memory_space<vmem>>, vector<1x8x64xbf16>,
    %58 = vector.extract_strided_slice %18 {offsets = [3, 0, 0], sizes = [1, 8, 27], strides = [1, 1, 1]} : vector<8x8x27xbf16> to vector<1x8x27xbf16>
    %59 = vector.shape_cast %58 : vector<1x8x27xbf16> to vector<8x27xbf16>
    %c0_55 = arith.constant 0 : index
    %c0_56 = arith.constant 0 : index
    %60 = vector.load %arg2[%c0_55, %c0_56] : memref<27x64xbf16, #tpu.memory_space<vmem>>, vector<27x64xbf16>
    %cst_57 = arith.constant dense<0.000000e+00> : vector<8x64xf32>
    %61 = tpu.matmul %59, %60, %cst_57 {dimension_numbers = #tpu.dot_dimension_numbers<[1], [0], [0], [1], [0, 0, 1, 1], [], []>} : vector<8x27xbf16>, vector<27x64xbf16>, vector<8x64xf32> -> vector<8x64xf32>
    %c0_58 = arith.constant 0 : index
    %c0_59 = arith.constant 0 : index
    %62 = vector.load %arg3[%c0_58, %c0_59] : memref<1x64xf32, #tpu.memory_space<vmem>>, vector<1x64xf32>
    %63 = vector.broadcast %62 : vector<1x64xf32> to vector<8x64xf32>
    %64 = arith.addf %61, %63 : vector<8x64xf32>
    %cst_60 = arith.constant 0.000000e+00 : f32
    %65 = vector.broadcast %cst_60 : f32 to vector<8x64xf32>
    %66 = arith.maximumf %64, %65 : vector<8x64xf32>
    %67 = arith.truncf %66 : vector<8x64xf32> to vector<8x64xbf16>
    %c0_61 = arith.constant 0 : index
    %c24 = arith.constant 24 : index
    %c0_62 = arith.constant 0 : index
    %68 = vector.load %arg4[%c0_61, %c24, %c0_62] : memref<1x64x64xbf16, #tpu.memory_space<vmem>>, vector<1x8x64xbf16>
    %69 = vector.shape_cast %68 : vector<1x8x64xbf16> to vector<8x64xbf16>
    %70 = vector.shape_cast %67 : vector<8x64xbf16> to vector<1x8x64xbf16>
    tpu.vector_store %arg4[%c0_61, %c24, %c0_62], %70 {strides = array<i32>} : memref<1x64x64xbf16, #tpu.memory_space<vmem>>, vector<1x8x64xbf16>,
    %71 = vector.extract_strided_slice %18 {offsets = [4, 0, 0], sizes = [1, 8, 27], strides = [1, 1, 1]} : vector<8x8x27xbf16> to vector<1x8x27xbf16>
    %72 = vector.shape_cast %71 : vector<1x8x27xbf16> to vector<8x27xbf16>
    %c0_63 = arith.constant 0 : index
    %c0_64 = arith.constant 0 : index
    %73 = vector.load %arg2[%c0_63, %c0_64] : memref<27x64xbf16, #tpu.memory_space<vmem>>, vector<27x64xbf16>
    %cst_65 = arith.constant dense<0.000000e+00> : vector<8x64xf32>
    %74 = tpu.matmul %72, %73, %cst_65 {dimension_numbers = #tpu.dot_dimension_numbers<[1], [0], [0], [1], [0, 0, 1, 1], [], []>} : vector<8x27xbf16>, vector<27x64xbf16>, vector<8x64xf32> -> vector<8x64xf32>
    %c0_66 = arith.constant 0 : index
    %c0_67 = arith.constant 0 : index
    %75 = vector.load %arg3[%c0_66, %c0_67] : memref<1x64xf32, #tpu.memory_space<vmem>>, vector<1x64xf32>
    %76 = vector.broadcast %75 : vector<1x64xf32> to vector<8x64xf32>
    %77 = arith.addf %74, %76 : vector<8x64xf32>
    %cst_68 = arith.constant 0.000000e+00 : f32
    %78 = vector.broadcast %cst_68 : f32 to vector<8x64xf32>
    %79 = arith.maximumf %77, %78 : vector<8x64xf32>
    %80 = arith.truncf %79 : vector<8x64xf32> to vector<8x64xbf16>
    %c0_69 = arith.constant 0 : index
    %c32 = arith.constant 32 : index
    %c0_70 = arith.constant 0 : index
    %81 = vector.load %arg4[%c0_69, %c32, %c0_70] : memref<1x64x64xbf16, #tpu.memory_space<vmem>>, vector<1x8x64xbf16>
    %82 = vector.shape_cast %81 : vector<1x8x64xbf16> to vector<8x64xbf16>
    %83 = vector.shape_cast %80 : vector<8x64xbf16> to vector<1x8x64xbf16>
    tpu.vector_store %arg4[%c0_69, %c32, %c0_70], %83 {strides = array<i32>} : memref<1x64x64xbf16, #tpu.memory_space<vmem>>, vector<1x8x64xbf16>,
    %84 = vector.extract_strided_slice %18 {offsets = [5, 0, 0], sizes = [1, 8, 27], strides = [1, 1, 1]} : vector<8x8x27xbf16> to vector<1x8x27xbf16>
    %85 = vector.shape_cast %84 : vector<1x8x27xbf16> to vector<8x27xbf16>
    %c0_71 = arith.constant 0 : index
    %c0_72 = arith.constant 0 : index
    %86 = vector.load %arg2[%c0_71, %c0_72] : memref<27x64xbf16, #tpu.memory_space<vmem>>, vector<27x64xbf16>
    %cst_73 = arith.constant dense<0.000000e+00> : vector<8x64xf32>
    %87 = tpu.matmul %85, %86, %cst_73 {dimension_numbers = #tpu.dot_dimension_numbers<[1], [0], [0], [1], [0, 0, 1, 1], [], []>} : vector<8x27xbf16>, vector<27x64xbf16>, vector<8x64xf32> -> vector<8x64xf32>
    %c0_74 = arith.constant 0 : index
    %c0_75 = arith.constant 0 : index
    %88 = vector.load %arg3[%c0_74, %c0_75] : memref<1x64xf32, #tpu.memory_space<vmem>>, vector<1x64xf32>
    %89 = vector.broadcast %88 : vector<1x64xf32> to vector<8x64xf32>
    %90 = arith.addf %87, %89 : vector<8x64xf32>
    %cst_76 = arith.constant 0.000000e+00 : f32
    %91 = vector.broadcast %cst_76 : f32 to vector<8x64xf32>
    %92 = arith.maximumf %90, %91 : vector<8x64xf32>
    %93 = arith.truncf %92 : vector<8x64xf32> to vector<8x64xbf16>
    %c0_77 = arith.constant 0 : index
    %c40 = arith.constant 40 : index
    %c0_78 = arith.constant 0 : index
    %94 = vector.load %arg4[%c0_77, %c40, %c0_78] : memref<1x64x64xbf16, #tpu.memory_space<vmem>>, vector<1x8x64xbf16>
    %95 = vector.shape_cast %94 : vector<1x8x64xbf16> to vector<8x64xbf16>
    %96 = vector.shape_cast %93 : vector<8x64xbf16> to vector<1x8x64xbf16>
    tpu.vector_store %arg4[%c0_77, %c40, %c0_78], %96 {strides = array<i32>} : memref<1x64x64xbf16, #tpu.memory_space<vmem>>, vector<1x8x64xbf16>,
    %97 = vector.extract_strided_slice %18 {offsets = [6, 0, 0], sizes = [1, 8, 27], strides = [1, 1, 1]} : vector<8x8x27xbf16> to vector<1x8x27xbf16>
    %98 = vector.shape_cast %97 : vector<1x8x27xbf16> to vector<8x27xbf16>
    %c0_79 = arith.constant 0 : index
    %c0_80 = arith.constant 0 : index
    %99 = vector.load %arg2[%c0_79, %c0_80] : memref<27x64xbf16, #tpu.memory_space<vmem>>, vector<27x64xbf16>
    %cst_81 = arith.constant dense<0.000000e+00> : vector<8x64xf32>
    %100 = tpu.matmul %98, %99, %cst_81 {dimension_numbers = #tpu.dot_dimension_numbers<[1], [0], [0], [1], [0, 0, 1, 1], [], []>} : vector<8x27xbf16>, vector<27x64xbf16>, vector<8x64xf32> -> vector<8x64xf32>
    %c0_82 = arith.constant 0 : index
    %c0_83 = arith.constant 0 : index
    %101 = vector.load %arg3[%c0_82, %c0_83] : memref<1x64xf32, #tpu.memory_space<vmem>>, vector<1x64xf32>
    %102 = vector.broadcast %101 : vector<1x64xf32> to vector<8x64xf32>
    %103 = arith.addf %100, %102 : vector<8x64xf32>
    %cst_84 = arith.constant 0.000000e+00 : f32
    %104 = vector.broadcast %cst_84 : f32 to vector<8x64xf32>
    %105 = arith.maximumf %103, %104 : vector<8x64xf32>
    %106 = arith.truncf %105 : vector<8x64xf32> to vector<8x64xbf16>
    %c0_85 = arith.constant 0 : index
    %c48 = arith.constant 48 : index
    %c0_86 = arith.constant 0 : index
    %107 = vector.load %arg4[%c0_85, %c48, %c0_86] : memref<1x64x64xbf16, #tpu.memory_space<vmem>>, vector<1x8x64xbf16>
    %108 = vector.shape_cast %107 : vector<1x8x64xbf16> to vector<8x64xbf16>
    %109 = vector.shape_cast %106 : vector<8x64xbf16> to vector<1x8x64xbf16>
    tpu.vector_store %arg4[%c0_85, %c48, %c0_86], %109 {strides = array<i32>} : memref<1x64x64xbf16, #tpu.memory_space<vmem>>, vector<1x8x64xbf16>,
    %110 = vector.extract_strided_slice %18 {offsets = [7, 0, 0], sizes = [1, 8, 27], strides = [1, 1, 1]} : vector<8x8x27xbf16> to vector<1x8x27xbf16>
    %111 = vector.shape_cast %110 : vector<1x8x27xbf16> to vector<8x27xbf16>
    %c0_87 = arith.constant 0 : index
    %c0_88 = arith.constant 0 : index
    %112 = vector.load %arg2[%c0_87, %c0_88] : memref<27x64xbf16, #tpu.memory_space<vmem>>, vector<27x64xbf16>
    %cst_89 = arith.constant dense<0.000000e+00> : vector<8x64xf32>
    %113 = tpu.matmul %111, %112, %cst_89 {dimension_numbers = #tpu.dot_dimension_numbers<[1], [0], [0], [1], [0, 0, 1, 1], [], []>} : vector<8x27xbf16>, vector<27x64xbf16>, vector<8x64xf32> -> vector<8x64xf32>
    %c0_90 = arith.constant 0 : index
    %c0_91 = arith.constant 0 : index
    %114 = vector.load %arg3[%c0_90, %c0_91] : memref<1x64xf32, #tpu.memory_space<vmem>>, vector<1x64xf32>
    %115 = vector.broadcast %114 : vector<1x64xf32> to vector<8x64xf32>
    %116 = arith.addf %113, %115 : vector<8x64xf32>
    %cst_92 = arith.constant 0.000000e+00 : f32
    %117 = vector.broadcast %cst_92 : f32 to vector<8x64xf32>
    %118 = arith.maximumf %116, %117 : vector<8x64xf32>
    %119 = arith.truncf %118 : vector<8x64xf32> to vector<8x64xbf16>
    %c0_93 = arith.constant 0 : index
    %c56 = arith.constant 56 : index
    %c0_94 = arith.constant 0 : index
    %120 = vector.load %arg4[%c0_93, %c56, %c0_94] : memref<1x64x64xbf16, #tpu.memory_space<vmem>>, vector<1x8x64xbf16>
    %121 = vector.shape_cast %120 : vector<1x8x64xbf16> to vector<8x64xbf16>
    %122 = vector.shape_cast %119 : vector<8x64xbf16> to vector<1x8x64xbf16>
    tpu.vector_store %arg4[%c0_93, %c56, %c0_94], %122 {strides = array<i32>} : memref<1x64x64xbf16, #tpu.memory_space<vmem>>, vector<1x8x64xbf16>,
    return
  }
  func.func @transform_0(%arg0: i32) -> (i32, i32, i32, i32) {
    %c0_i32 = arith.constant 0 : i32
    %c0_i32_0 = arith.constant 0 : i32
    %c0_i32_1 = arith.constant 0 : i32
    %c0_i32_2 = arith.constant 0 : i32
    return %arg0, %c0_i32, %c0_i32_0, %c0_i32_1 : i32, i32, i32, i32
  }
  func.func @transform_1(%arg0: i32) -> (i32, i32) {
    %c0_i32 = arith.constant 0 : i32
    %c0_i32_0 = arith.constant 0 : i32
    %c0_i32_1 = arith.constant 0 : i32
    return %c0_i32, %c0_i32_0 : i32, i32
  }
  func.func @transform_2(%arg0: i32) -> (i32, i32) {
    %c0_i32 = arith.constant 0 : i32
    %c0_i32_0 = arith.constant 0 : i32
    %c0_i32_1 = arith.constant 0 : i32
    return %c0_i32, %c0_i32_0 : i32, i32
  }
  func.func @transform_3(%arg0: i32) -> (i32, i32, i32) {
    %c0_i32 = arith.constant 0 : i32
    %c0_i32_0 = arith.constant 0 : i32
    %c0_i32_1 = arith.constant 0 : i32
    return %arg0, %c0_i32, %c0_i32_0 : i32, i32, i32
  }
}

module attributes {stable_mosaic.version = 11 : i64} {
  func.func @_conv_relu_kernel(%arg0: i32, %arg1: memref<1x5x5x256xbf16, #tpu.memory_space<vmem>>, %arg2: memref<576x128xbf16, #tpu.memory_space<vmem>>, %arg3: memref<1x128xf32, #tpu.memory_space<vmem>>, %arg4: memref<1x16x128xbf16, #tpu.memory_space<vmem>>) attributes {dimension_semantics = [#tpu.dimension_semantics<parallel>], iteration_bounds = array<i64: 2>, scalar_prefetch = 0 : i64, scratch_operands = 0 : i64, tpu.core_type = #tpu.core_type<tc>, window_params = [{transform_indices = @transform_0, window_bounds = array<i64: 1, 5, 5, 256>}, {pipeline_mode = #tpu.pipeline_mode<synchronous>, transform_indices = @transform_1, window_bounds = array<i64: 576, 128>}, {pipeline_mode = #tpu.pipeline_mode<synchronous>, transform_indices = @transform_2, window_bounds = array<i64: 1, 128>}, {transform_indices = @transform_3, window_bounds = array<i64: 1, 16, 128>}]} {
    %c0 = arith.constant 0 : index
    %c0_0 = arith.constant 0 : index
    %c0_1 = arith.constant 0 : index
    %c0_2 = arith.constant 0 : index
    %0 = vector.load %arg1[%c0, %c0_0, %c0_1, %c0_2] : memref<1x5x5x256xbf16, #tpu.memory_space<vmem>>, vector<1x4x4x64xbf16>
    %1 = vector.shape_cast %0 : vector<1x4x4x64xbf16> to vector<4x4x64xbf16>
    %c0_3 = arith.constant 0 : index
    %c0_4 = arith.constant 0 : index
    %c0_5 = arith.constant 0 : index
    %c64 = arith.constant 64 : index
    %2 = vector.load %arg1[%c0_3, %c0_4, %c0_5, %c64] : memref<1x5x5x256xbf16, #tpu.memory_space<vmem>>, vector<1x4x4x64xbf16>
    %3 = vector.shape_cast %2 : vector<1x4x4x64xbf16> to vector<4x4x64xbf16>
    %c0_6 = arith.constant 0 : index
    %c0_7 = arith.constant 0 : index
    %c1 = arith.constant 1 : index
    %c0_8 = arith.constant 0 : index
    %4 = vector.load %arg1[%c0_6, %c0_7, %c1, %c0_8] : memref<1x5x5x256xbf16, #tpu.memory_space<vmem>>, vector<1x4x4x64xbf16>
    %5 = vector.shape_cast %4 : vector<1x4x4x64xbf16> to vector<4x4x64xbf16>
    %c0_9 = arith.constant 0 : index
    %c0_10 = arith.constant 0 : index
    %c0_11 = arith.constant 0 : index
    %c128 = arith.constant 128 : index
    %6 = vector.load %arg1[%c0_9, %c0_10, %c0_11, %c128] : memref<1x5x5x256xbf16, #tpu.memory_space<vmem>>, vector<1x4x4x64xbf16>
    %7 = vector.shape_cast %6 : vector<1x4x4x64xbf16> to vector<4x4x64xbf16>
    %c0_12 = arith.constant 0 : index
    %c0_13 = arith.constant 0 : index
    %c0_14 = arith.constant 0 : index
    %c192 = arith.constant 192 : index
    %8 = vector.load %arg1[%c0_12, %c0_13, %c0_14, %c192] : memref<1x5x5x256xbf16, #tpu.memory_space<vmem>>, vector<1x4x4x64xbf16>
    %9 = vector.shape_cast %8 : vector<1x4x4x64xbf16> to vector<4x4x64xbf16>
    %c0_15 = arith.constant 0 : index
    %c0_16 = arith.constant 0 : index
    %c1_17 = arith.constant 1 : index
    %c128_18 = arith.constant 128 : index
    %10 = vector.load %arg1[%c0_15, %c0_16, %c1_17, %c128_18] : memref<1x5x5x256xbf16, #tpu.memory_space<vmem>>, vector<1x4x4x64xbf16>
    %11 = vector.shape_cast %10 : vector<1x4x4x64xbf16> to vector<4x4x64xbf16>
    %c0_19 = arith.constant 0 : index
    %c1_20 = arith.constant 1 : index
    %c0_21 = arith.constant 0 : index
    %c0_22 = arith.constant 0 : index
    %12 = vector.load %arg1[%c0_19, %c1_20, %c0_21, %c0_22] : memref<1x5x5x256xbf16, #tpu.memory_space<vmem>>, vector<1x4x4x64xbf16>
    %13 = vector.shape_cast %12 : vector<1x4x4x64xbf16> to vector<4x4x64xbf16>
    %c0_23 = arith.constant 0 : index
    %c1_24 = arith.constant 1 : index
    %c0_25 = arith.constant 0 : index
    %c64_26 = arith.constant 64 : index
    %14 = vector.load %arg1[%c0_23, %c1_24, %c0_25, %c64_26] : memref<1x5x5x256xbf16, #tpu.memory_space<vmem>>, vector<1x4x4x64xbf16>
    %15 = vector.shape_cast %14 : vector<1x4x4x64xbf16> to vector<4x4x64xbf16>
    %c0_27 = arith.constant 0 : index
    %c1_28 = arith.constant 1 : index
    %c1_29 = arith.constant 1 : index
    %c0_30 = arith.constant 0 : index
    %16 = vector.load %arg1[%c0_27, %c1_28, %c1_29, %c0_30] : memref<1x5x5x256xbf16, #tpu.memory_space<vmem>>, vector<1x4x4x64xbf16>
    %17 = vector.shape_cast %16 : vector<1x4x4x64xbf16> to vector<4x4x64xbf16>
    %18 = tpu.concatenate %1, %3, %5, %7, %9, %11, %13, %15, %17 in 2 : vector<4x4x64xbf16>, vector<4x4x64xbf16>, vector<4x4x64xbf16>, vector<4x4x64xbf16>, vector<4x4x64xbf16>, vector<4x4x64xbf16>, vector<4x4x64xbf16>, vector<4x4x64xbf16>, vector<4x4x64xbf16> -> vector<4x4x576xbf16>
    %19 = vector.extract_strided_slice %18 {offsets = [0, 0, 0], sizes = [1, 4, 576], strides = [1, 1, 1]} : vector<4x4x576xbf16> to vector<1x4x576xbf16>
    %20 = vector.shape_cast %19 : vector<1x4x576xbf16> to vector<4x576xbf16>
    %c0_31 = arith.constant 0 : index
    %c0_32 = arith.constant 0 : index
    %21 = vector.load %arg2[%c0_31, %c0_32] : memref<576x128xbf16, #tpu.memory_space<vmem>>, vector<576x128xbf16>
    %cst = arith.constant dense<0.000000e+00> : vector<4x128xf32>
    %22 = tpu.matmul %20, %21, %cst {dimension_numbers = #tpu.dot_dimension_numbers<[1], [0], [0], [1], [0, 0, 1, 1], [], []>} : vector<4x576xbf16>, vector<576x128xbf16>, vector<4x128xf32> -> vector<4x128xf32>
    %c0_33 = arith.constant 0 : index
    %c0_34 = arith.constant 0 : index
    %23 = vector.load %arg3[%c0_33, %c0_34] : memref<1x128xf32, #tpu.memory_space<vmem>>, vector<1x128xf32>
    %24 = vector.broadcast %23 : vector<1x128xf32> to vector<4x128xf32>
    %25 = arith.addf %22, %24 : vector<4x128xf32>
    %cst_35 = arith.constant 0.000000e+00 : f32
    %26 = vector.broadcast %cst_35 : f32 to vector<4x128xf32>
    %27 = arith.maximumf %25, %26 : vector<4x128xf32>
    %28 = arith.truncf %27 : vector<4x128xf32> to vector<4x128xbf16>
    %c0_36 = arith.constant 0 : index
    %c0_37 = arith.constant 0 : index
    %c0_38 = arith.constant 0 : index
    %29 = vector.load %arg4[%c0_36, %c0_37, %c0_38] : memref<1x16x128xbf16, #tpu.memory_space<vmem>>, vector<1x4x128xbf16>
    %30 = vector.shape_cast %29 : vector<1x4x128xbf16> to vector<4x128xbf16>
    %31 = vector.shape_cast %28 : vector<4x128xbf16> to vector<1x4x128xbf16>
    tpu.vector_store %arg4[%c0_36, %c0_37, %c0_38], %31 {strides = array<i32>} : memref<1x16x128xbf16, #tpu.memory_space<vmem>>, vector<1x4x128xbf16>,
    %32 = vector.extract_strided_slice %18 {offsets = [1, 0, 0], sizes = [1, 4, 576], strides = [1, 1, 1]} : vector<4x4x576xbf16> to vector<1x4x576xbf16>
    %33 = vector.shape_cast %32 : vector<1x4x576xbf16> to vector<4x576xbf16>
    %c0_39 = arith.constant 0 : index
    %c0_40 = arith.constant 0 : index
    %34 = vector.load %arg2[%c0_39, %c0_40] : memref<576x128xbf16, #tpu.memory_space<vmem>>, vector<576x128xbf16>
    %cst_41 = arith.constant dense<0.000000e+00> : vector<4x128xf32>
    %35 = tpu.matmul %33, %34, %cst_41 {dimension_numbers = #tpu.dot_dimension_numbers<[1], [0], [0], [1], [0, 0, 1, 1], [], []>} : vector<4x576xbf16>, vector<576x128xbf16>, vector<4x128xf32> -> vector<4x128xf32>
    %c0_42 = arith.constant 0 : index
    %c0_43 = arith.constant 0 : index
    %36 = vector.load %arg3[%c0_42, %c0_43] : memref<1x128xf32, #tpu.memory_space<vmem>>, vector<1x128xf32>
    %37 = vector.broadcast %36 : vector<1x128xf32> to vector<4x128xf32>
    %38 = arith.addf %35, %37 : vector<4x128xf32>
    %cst_44 = arith.constant 0.000000e+00 : f32
    %39 = vector.broadcast %cst_44 : f32 to vector<4x128xf32>
    %40 = arith.maximumf %38, %39 : vector<4x128xf32>
    %41 = arith.truncf %40 : vector<4x128xf32> to vector<4x128xbf16>
    %c0_45 = arith.constant 0 : index
    %c4 = arith.constant 4 : index
    %c0_46 = arith.constant 0 : index
    %42 = vector.load %arg4[%c0_45, %c4, %c0_46] : memref<1x16x128xbf16, #tpu.memory_space<vmem>>, vector<1x4x128xbf16>
    %43 = vector.shape_cast %42 : vector<1x4x128xbf16> to vector<4x128xbf16>
    %44 = vector.shape_cast %41 : vector<4x128xbf16> to vector<1x4x128xbf16>
    tpu.vector_store %arg4[%c0_45, %c4, %c0_46], %44 {strides = array<i32>} : memref<1x16x128xbf16, #tpu.memory_space<vmem>>, vector<1x4x128xbf16>,
    %45 = vector.extract_strided_slice %18 {offsets = [2, 0, 0], sizes = [1, 4, 576], strides = [1, 1, 1]} : vector<4x4x576xbf16> to vector<1x4x576xbf16>
    %46 = vector.shape_cast %45 : vector<1x4x576xbf16> to vector<4x576xbf16>
    %c0_47 = arith.constant 0 : index
    %c0_48 = arith.constant 0 : index
    %47 = vector.load %arg2[%c0_47, %c0_48] : memref<576x128xbf16, #tpu.memory_space<vmem>>, vector<576x128xbf16>
    %cst_49 = arith.constant dense<0.000000e+00> : vector<4x128xf32>
    %48 = tpu.matmul %46, %47, %cst_49 {dimension_numbers = #tpu.dot_dimension_numbers<[1], [0], [0], [1], [0, 0, 1, 1], [], []>} : vector<4x576xbf16>, vector<576x128xbf16>, vector<4x128xf32> -> vector<4x128xf32>
    %c0_50 = arith.constant 0 : index
    %c0_51 = arith.constant 0 : index
    %49 = vector.load %arg3[%c0_50, %c0_51] : memref<1x128xf32, #tpu.memory_space<vmem>>, vector<1x128xf32>
    %50 = vector.broadcast %49 : vector<1x128xf32> to vector<4x128xf32>
    %51 = arith.addf %48, %50 : vector<4x128xf32>
    %cst_52 = arith.constant 0.000000e+00 : f32
    %52 = vector.broadcast %cst_52 : f32 to vector<4x128xf32>
    %53 = arith.maximumf %51, %52 : vector<4x128xf32>
    %54 = arith.truncf %53 : vector<4x128xf32> to vector<4x128xbf16>
    %c0_53 = arith.constant 0 : index
    %c8 = arith.constant 8 : index
    %c0_54 = arith.constant 0 : index
    %55 = vector.load %arg4[%c0_53, %c8, %c0_54] : memref<1x16x128xbf16, #tpu.memory_space<vmem>>, vector<1x4x128xbf16>
    %56 = vector.shape_cast %55 : vector<1x4x128xbf16> to vector<4x128xbf16>
    %57 = vector.shape_cast %54 : vector<4x128xbf16> to vector<1x4x128xbf16>
    tpu.vector_store %arg4[%c0_53, %c8, %c0_54], %57 {strides = array<i32>} : memref<1x16x128xbf16, #tpu.memory_space<vmem>>, vector<1x4x128xbf16>,
    %58 = vector.extract_strided_slice %18 {offsets = [3, 0, 0], sizes = [1, 4, 576], strides = [1, 1, 1]} : vector<4x4x576xbf16> to vector<1x4x576xbf16>
    %59 = vector.shape_cast %58 : vector<1x4x576xbf16> to vector<4x576xbf16>
    %c0_55 = arith.constant 0 : index
    %c0_56 = arith.constant 0 : index
    %60 = vector.load %arg2[%c0_55, %c0_56] : memref<576x128xbf16, #tpu.memory_space<vmem>>, vector<576x128xbf16>
    %cst_57 = arith.constant dense<0.000000e+00> : vector<4x128xf32>
    %61 = tpu.matmul %59, %60, %cst_57 {dimension_numbers = #tpu.dot_dimension_numbers<[1], [0], [0], [1], [0, 0, 1, 1], [], []>} : vector<4x576xbf16>, vector<576x128xbf16>, vector<4x128xf32> -> vector<4x128xf32>
    %c0_58 = arith.constant 0 : index
    %c0_59 = arith.constant 0 : index
    %62 = vector.load %arg3[%c0_58, %c0_59] : memref<1x128xf32, #tpu.memory_space<vmem>>, vector<1x128xf32>
    %63 = vector.broadcast %62 : vector<1x128xf32> to vector<4x128xf32>
    %64 = arith.addf %61, %63 : vector<4x128xf32>
    %cst_60 = arith.constant 0.000000e+00 : f32
    %65 = vector.broadcast %cst_60 : f32 to vector<4x128xf32>
    %66 = arith.maximumf %64, %65 : vector<4x128xf32>
    %67 = arith.truncf %66 : vector<4x128xf32> to vector<4x128xbf16>
    %c0_61 = arith.constant 0 : index
    %c12 = arith.constant 12 : index
    %c0_62 = arith.constant 0 : index
    %68 = vector.load %arg4[%c0_61, %c12, %c0_62] : memref<1x16x128xbf16, #tpu.memory_space<vmem>>, vector<1x4x128xbf16>
    %69 = vector.shape_cast %68 : vector<1x4x128xbf16> to vector<4x128xbf16>
    %70 = vector.shape_cast %67 : vector<4x128xbf16> to vector<1x4x128xbf16>
    tpu.vector_store %arg4[%c0_61, %c12, %c0_62], %70 {strides = array<i32>} : memref<1x16x128xbf16, #tpu.memory_space<vmem>>, vector<1x4x128xbf16>,
    return
  }
  func.func @transform_0(%arg0: i32) -> (i32, i32, i32, i32) {
    %c0_i32 = arith.constant 0 : i32
    %c0_i32_0 = arith.constant 0 : i32
    %c0_i32_1 = arith.constant 0 : i32
    %c0_i32_2 = arith.constant 0 : i32
    return %arg0, %c0_i32, %c0_i32_0, %c0_i32_1 : i32, i32, i32, i32
  }
  func.func @transform_1(%arg0: i32) -> (i32, i32) {
    %c0_i32 = arith.constant 0 : i32
    %c0_i32_0 = arith.constant 0 : i32
    %c0_i32_1 = arith.constant 0 : i32
    return %c0_i32, %c0_i32_0 : i32, i32
  }
  func.func @transform_2(%arg0: i32) -> (i32, i32) {
    %c0_i32 = arith.constant 0 : i32
    %c0_i32_0 = arith.constant 0 : i32
    %c0_i32_1 = arith.constant 0 : i32
    return %c0_i32, %c0_i32_0 : i32, i32
  }
  func.func @transform_3(%arg0: i32) -> (i32, i32, i32) {
    %c0_i32 = arith.constant 0 : i32
    %c0_i32_0 = arith.constant 0 : i32
    %c0_i32_1 = arith.constant 0 : i32
    return %arg0, %c0_i32, %c0_i32_0 : i32, i32, i32
  }
}

module attributes {stable_mosaic.version = 11 : i64} {
  func.func @_conv_relu_fc_kernel(%arg0: i32, %arg1: memref<1x3x3x512xbf16, #tpu.memory_space<vmem>>, %arg2: memref<1152x256xbf16, #tpu.memory_space<vmem>>, %arg3: memref<1x256xf32, #tpu.memory_space<vmem>>, %arg4: memref<1024x128xbf16, #tpu.memory_space<vmem>>, %arg5: memref<1x128xf32, #tpu.memory_space<vmem>>, %arg6: memref<1x1x128xf32, #tpu.memory_space<vmem>>) attributes {dimension_semantics = [#tpu.dimension_semantics<parallel>], iteration_bounds = array<i64: 2>, scalar_prefetch = 0 : i64, scratch_operands = 0 : i64, tpu.core_type = #tpu.core_type<tc>, window_params = [{transform_indices = @transform_0, window_bounds = array<i64: 1, 3, 3, 512>}, {pipeline_mode = #tpu.pipeline_mode<synchronous>, transform_indices = @transform_1, window_bounds = array<i64: 1152, 256>}, {pipeline_mode = #tpu.pipeline_mode<synchronous>, transform_indices = @transform_2, window_bounds = array<i64: 1, 256>}, {pipeline_mode = #tpu.pipeline_mode<synchronous>, transform_indices = @transform_3, window_bounds = array<i64: 1024, 128>}, {pipeline_mode = #tpu.pipeline_mode<synchronous>, transform_indices = @transform_4, window_bounds = array<i64: 1, 128>}, {transform_indices = @transform_5, window_bounds = array<i64: 1, 1, 128>}]} {
    %c0 = arith.constant 0 : index
    %c0_0 = arith.constant 0 : index
    %c0_1 = arith.constant 0 : index
    %c0_2 = arith.constant 0 : index
    %0 = vector.load %arg1[%c0, %c0_0, %c0_1, %c0_2] : memref<1x3x3x512xbf16, #tpu.memory_space<vmem>>, vector<1x2x2x128xbf16>
    %1 = vector.shape_cast %0 : vector<1x2x2x128xbf16> to vector<2x2x128xbf16>
    %c0_3 = arith.constant 0 : index
    %c0_4 = arith.constant 0 : index
    %c0_5 = arith.constant 0 : index
    %c128 = arith.constant 128 : index
    %2 = vector.load %arg1[%c0_3, %c0_4, %c0_5, %c128] : memref<1x3x3x512xbf16, #tpu.memory_space<vmem>>, vector<1x2x2x128xbf16>
    %3 = vector.shape_cast %2 : vector<1x2x2x128xbf16> to vector<2x2x128xbf16>
    %c0_6 = arith.constant 0 : index
    %c0_7 = arith.constant 0 : index
    %c1 = arith.constant 1 : index
    %c0_8 = arith.constant 0 : index
    %4 = vector.load %arg1[%c0_6, %c0_7, %c1, %c0_8] : memref<1x3x3x512xbf16, #tpu.memory_space<vmem>>, vector<1x2x2x128xbf16>
    %5 = vector.shape_cast %4 : vector<1x2x2x128xbf16> to vector<2x2x128xbf16>
    %c0_9 = arith.constant 0 : index
    %c0_10 = arith.constant 0 : index
    %c0_11 = arith.constant 0 : index
    %c256 = arith.constant 256 : index
    %6 = vector.load %arg1[%c0_9, %c0_10, %c0_11, %c256] : memref<1x3x3x512xbf16, #tpu.memory_space<vmem>>, vector<1x2x2x128xbf16>
    %7 = vector.shape_cast %6 : vector<1x2x2x128xbf16> to vector<2x2x128xbf16>
    %c0_12 = arith.constant 0 : index
    %c0_13 = arith.constant 0 : index
    %c0_14 = arith.constant 0 : index
    %c384 = arith.constant 384 : index
    %8 = vector.load %arg1[%c0_12, %c0_13, %c0_14, %c384] : memref<1x3x3x512xbf16, #tpu.memory_space<vmem>>, vector<1x2x2x128xbf16>
    %9 = vector.shape_cast %8 : vector<1x2x2x128xbf16> to vector<2x2x128xbf16>
    %c0_15 = arith.constant 0 : index
    %c0_16 = arith.constant 0 : index
    %c1_17 = arith.constant 1 : index
    %c256_18 = arith.constant 256 : index
    %10 = vector.load %arg1[%c0_15, %c0_16, %c1_17, %c256_18] : memref<1x3x3x512xbf16, #tpu.memory_space<vmem>>, vector<1x2x2x128xbf16>
    %11 = vector.shape_cast %10 : vector<1x2x2x128xbf16> to vector<2x2x128xbf16>
    %c0_19 = arith.constant 0 : index
    %c1_20 = arith.constant 1 : index
    %c0_21 = arith.constant 0 : index
    %c0_22 = arith.constant 0 : index
    %12 = vector.load %arg1[%c0_19, %c1_20, %c0_21, %c0_22] : memref<1x3x3x512xbf16, #tpu.memory_space<vmem>>, vector<1x2x2x128xbf16>
    %13 = vector.shape_cast %12 : vector<1x2x2x128xbf16> to vector<2x2x128xbf16>
    %c0_23 = arith.constant 0 : index
    %c1_24 = arith.constant 1 : index
    %c0_25 = arith.constant 0 : index
    %c128_26 = arith.constant 128 : index
    %14 = vector.load %arg1[%c0_23, %c1_24, %c0_25, %c128_26] : memref<1x3x3x512xbf16, #tpu.memory_space<vmem>>, vector<1x2x2x128xbf16>
    %15 = vector.shape_cast %14 : vector<1x2x2x128xbf16> to vector<2x2x128xbf16>
    %c0_27 = arith.constant 0 : index
    %c1_28 = arith.constant 1 : index
    %c1_29 = arith.constant 1 : index
    %c0_30 = arith.constant 0 : index
    %16 = vector.load %arg1[%c0_27, %c1_28, %c1_29, %c0_30] : memref<1x3x3x512xbf16, #tpu.memory_space<vmem>>, vector<1x2x2x128xbf16>
    %17 = vector.shape_cast %16 : vector<1x2x2x128xbf16> to vector<2x2x128xbf16>
    %18 = tpu.concatenate %1, %3, %5, %7, %9, %11, %13, %15, %17 in 2 : vector<2x2x128xbf16>, vector<2x2x128xbf16>, vector<2x2x128xbf16>, vector<2x2x128xbf16>, vector<2x2x128xbf16>, vector<2x2x128xbf16>, vector<2x2x128xbf16>, vector<2x2x128xbf16>, vector<2x2x128xbf16> -> vector<2x2x1152xbf16>
    %c0_31 = arith.constant 0 : index
    %c0_32 = arith.constant 0 : index
    %19 = vector.load %arg5[%c0_31, %c0_32] : memref<1x128xf32, #tpu.memory_space<vmem>>, vector<1x128xf32>
    %20 = vector.extract_strided_slice %18 {offsets = [0, 0, 0], sizes = [1, 2, 1152], strides = [1, 1, 1]} : vector<2x2x1152xbf16> to vector<1x2x1152xbf16>
    %21 = vector.shape_cast %20 : vector<1x2x1152xbf16> to vector<2x1152xbf16>
    %c0_33 = arith.constant 0 : index
    %c0_34 = arith.constant 0 : index
    %22 = vector.load %arg2[%c0_33, %c0_34] : memref<1152x256xbf16, #tpu.memory_space<vmem>>, vector<1152x256xbf16>
    %cst = arith.constant dense<0.000000e+00> : vector<2x256xf32>
    %23 = tpu.matmul %21, %22, %cst {dimension_numbers = #tpu.dot_dimension_numbers<[1], [0], [0], [1], [0, 0, 1, 1], [], []>} : vector<2x1152xbf16>, vector<1152x256xbf16>, vector<2x256xf32> -> vector<2x256xf32>
    %c0_35 = arith.constant 0 : index
    %c0_36 = arith.constant 0 : index
    %24 = vector.load %arg3[%c0_35, %c0_36] : memref<1x256xf32, #tpu.memory_space<vmem>>, vector<1x256xf32>
    %25 = vector.broadcast %24 : vector<1x256xf32> to vector<2x256xf32>
    %26 = arith.addf %23, %25 : vector<2x256xf32>
    %cst_37 = arith.constant 0.000000e+00 : f32
    %27 = vector.broadcast %cst_37 : f32 to vector<2x256xf32>
    %28 = arith.maximumf %26, %27 : vector<2x256xf32>
    %29 = arith.truncf %28 : vector<2x256xf32> to vector<2x256xbf16>
    %30 = vector.extract_strided_slice %29 {offsets = [0, 0], sizes = [1, 256], strides = [1, 1]} : vector<2x256xbf16> to vector<1x256xbf16>
    %c0_38 = arith.constant 0 : index
    %c0_39 = arith.constant 0 : index
    %31 = vector.load %arg4[%c0_38, %c0_39] : memref<1024x128xbf16, #tpu.memory_space<vmem>>, vector<256x128xbf16>
    %cst_40 = arith.constant dense<0.000000e+00> : vector<1x128xf32>
    %32 = tpu.matmul %30, %31, %cst_40 {dimension_numbers = #tpu.dot_dimension_numbers<[1], [0], [0], [1], [0, 0, 1, 1], [], []>} : vector<1x256xbf16>, vector<256x128xbf16>, vector<1x128xf32> -> vector<1x128xf32>
    %33 = arith.addf %19, %32 : vector<1x128xf32>
    %34 = vector.extract_strided_slice %29 {offsets = [1, 0], sizes = [1, 256], strides = [1, 1]} : vector<2x256xbf16> to vector<1x256xbf16>
    %c256_41 = arith.constant 256 : index
    %c0_42 = arith.constant 0 : index
    %35 = vector.load %arg4[%c256_41, %c0_42] : memref<1024x128xbf16, #tpu.memory_space<vmem>>, vector<256x128xbf16>
    %cst_43 = arith.constant dense<0.000000e+00> : vector<1x128xf32>
    %36 = tpu.matmul %34, %35, %cst_43 {dimension_numbers = #tpu.dot_dimension_numbers<[1], [0], [0], [1], [0, 0, 1, 1], [], []>} : vector<1x256xbf16>, vector<256x128xbf16>, vector<1x128xf32> -> vector<1x128xf32>
    %37 = arith.addf %33, %36 : vector<1x128xf32>
    %38 = vector.extract_strided_slice %18 {offsets = [1, 0, 0], sizes = [1, 2, 1152], strides = [1, 1, 1]} : vector<2x2x1152xbf16> to vector<1x2x1152xbf16>
    %39 = vector.shape_cast %38 : vector<1x2x1152xbf16> to vector<2x1152xbf16>
    %c0_44 = arith.constant 0 : index
    %c0_45 = arith.constant 0 : index
    %40 = vector.load %arg2[%c0_44, %c0_45] : memref<1152x256xbf16, #tpu.memory_space<vmem>>, vector<1152x256xbf16>
    %cst_46 = arith.constant dense<0.000000e+00> : vector<2x256xf32>
    %41 = tpu.matmul %39, %40, %cst_46 {dimension_numbers = #tpu.dot_dimension_numbers<[1], [0], [0], [1], [0, 0, 1, 1], [], []>} : vector<2x1152xbf16>, vector<1152x256xbf16>, vector<2x256xf32> -> vector<2x256xf32>
    %c0_47 = arith.constant 0 : index
    %c0_48 = arith.constant 0 : index
    %42 = vector.load %arg3[%c0_47, %c0_48] : memref<1x256xf32, #tpu.memory_space<vmem>>, vector<1x256xf32>
    %43 = vector.broadcast %42 : vector<1x256xf32> to vector<2x256xf32>
    %44 = arith.addf %41, %43 : vector<2x256xf32>
    %cst_49 = arith.constant 0.000000e+00 : f32
    %45 = vector.broadcast %cst_49 : f32 to vector<2x256xf32>
    %46 = arith.maximumf %44, %45 : vector<2x256xf32>
    %47 = arith.truncf %46 : vector<2x256xf32> to vector<2x256xbf16>
    %48 = vector.extract_strided_slice %47 {offsets = [0, 0], sizes = [1, 256], strides = [1, 1]} : vector<2x256xbf16> to vector<1x256xbf16>
    %c512 = arith.constant 512 : index
    %c0_50 = arith.constant 0 : index
    %49 = vector.load %arg4[%c512, %c0_50] : memref<1024x128xbf16, #tpu.memory_space<vmem>>, vector<256x128xbf16>
    %cst_51 = arith.constant dense<0.000000e+00> : vector<1x128xf32>
    %50 = tpu.matmul %48, %49, %cst_51 {dimension_numbers = #tpu.dot_dimension_numbers<[1], [0], [0], [1], [0, 0, 1, 1], [], []>} : vector<1x256xbf16>, vector<256x128xbf16>, vector<1x128xf32> -> vector<1x128xf32>
    %51 = arith.addf %37, %50 : vector<1x128xf32>
    %52 = vector.extract_strided_slice %47 {offsets = [1, 0], sizes = [1, 256], strides = [1, 1]} : vector<2x256xbf16> to vector<1x256xbf16>
    %c768 = arith.constant 768 : index
    %c0_52 = arith.constant 0 : index
    %53 = vector.load %arg4[%c768, %c0_52] : memref<1024x128xbf16, #tpu.memory_space<vmem>>, vector<256x128xbf16>
    %cst_53 = arith.constant dense<0.000000e+00> : vector<1x128xf32>
    %54 = tpu.matmul %52, %53, %cst_53 {dimension_numbers = #tpu.dot_dimension_numbers<[1], [0], [0], [1], [0, 0, 1, 1], [], []>} : vector<1x256xbf16>, vector<256x128xbf16>, vector<1x128xf32> -> vector<1x128xf32>
    %55 = arith.addf %51, %54 : vector<1x128xf32>
    %c0_54 = arith.constant 0 : index
    %c0_55 = arith.constant 0 : index
    %c0_56 = arith.constant 0 : index
    %56 = vector.load %arg6[%c0_54, %c0_55, %c0_56] : memref<1x1x128xf32, #tpu.memory_space<vmem>>, vector<1x1x128xf32>
    %57 = vector.shape_cast %56 : vector<1x1x128xf32> to vector<1x128xf32>
    %58 = vector.shape_cast %55 : vector<1x128xf32> to vector<1x1x128xf32>
    tpu.vector_store %arg6[%c0_54, %c0_55, %c0_56], %58 {strides = array<i32>} : memref<1x1x128xf32, #tpu.memory_space<vmem>>, vector<1x1x128xf32>,
    return
  }
  func.func @transform_0(%arg0: i32) -> (i32, i32, i32, i32) {
    %c0_i32 = arith.constant 0 : i32
    %c0_i32_0 = arith.constant 0 : i32
    %c0_i32_1 = arith.constant 0 : i32
    %c0_i32_2 = arith.constant 0 : i32
    return %arg0, %c0_i32, %c0_i32_0, %c0_i32_1 : i32, i32, i32, i32
  }
  func.func @transform_1(%arg0: i32) -> (i32, i32) {
    %c0_i32 = arith.constant 0 : i32
    %c0_i32_0 = arith.constant 0 : i32
    %c0_i32_1 = arith.constant 0 : i32
    return %c0_i32, %c0_i32_0 : i32, i32
  }
  func.func @transform_2(%arg0: i32) -> (i32, i32) {
    %c0_i32 = arith.constant 0 : i32
    %c0_i32_0 = arith.constant 0 : i32
    %c0_i32_1 = arith.constant 0 : i32
    return %c0_i32, %c0_i32_0 : i32, i32
  }
  func.func @transform_3(%arg0: i32) -> (i32, i32) {
    %c0_i32 = arith.constant 0 : i32
    %c0_i32_0 = arith.constant 0 : i32
    %c0_i32_1 = arith.constant 0 : i32
    return %c0_i32, %c0_i32_0 : i32, i32
  }
  func.func @transform_4(%arg0: i32) -> (i32, i32) {
    %c0_i32 = arith.constant 0 : i32
    %c0_i32_0 = arith.constant 0 : i32
    %c0_i32_1 = arith.constant 0 : i32
    return %c0_i32, %c0_i32_0 : i32, i32
  }
  func.func @transform_5(%arg0: i32) -> (i32, i32, i32) {
    %c0_i32 = arith.constant 0 : i32
    %c0_i32_0 = arith.constant 0 : i32
    %c0_i32_1 = arith.constant 0 : i32
    return %arg0, %c0_i32, %c0_i32_0 : i32, i32, i32
  }
}

</mosaic_0001>

<llo_original>
// kernel: image_encoder_forward.3
$region0: #{image_encoder_forward.3}
  #allocation0 [shape = 'u32[]', space=smem, size = 0x4, offset = 0x4, fixed_abs, tag = 'smem constant byte address 0x4 - core index']
  #allocation1 [shape = 'u32[144,128]{1,0:T(1,128)}', space=vmem, size = 0x12000, scoped, tag = 'internal scratch']
  %s0 = inlined_call_operand.vmem [shape: bf16[2,9,9,12], index: 0, kind: input, shape index: {}]
  %s1 = inlined_call_operand.vmem [shape: bf16[27,64], index: 1, kind: input, shape index: {}]
  %s2 = inlined_call_operand.vmem [shape: f32[1,64], index: 2, kind: input, shape index: {}]
  %s3 = inlined_call_operand.vmem [shape: bf16[2,64,64], index: 3, kind: output, shape index: {}]
  %s4 = sld [smem:[#allocation0]]
  $region45: #{image_encoder_forward.3} parent=0
    _
  %s6 = ssub.s32 1, %s4
  %s7 = scalar_select 0, %s6, %s4
  loop: start=0, step=1, limit=4
  $region2: #{image_encoder_forward.3} parent=0 // loop_pre_header
    _
  $region3: #{image_encoder_forward.3} parent=0 // loop_header
    %s9 = sphi 0, %s13
    %p10 = scmp.ge.s32.totalorder %s9, 4
    %s19 = sphi 0, %s21
    %s22 = sphi 0, %s19
    %s23 = sphi 0, %s22
    %s39 = sphi 0, %s23
    %s43 = sphi 0, %s43
    %s45 = sphi 0, %s43
    %s46 = sphi 0, %s45
    %s60 = sphi 0, %s46
    %s64 = sphi 0, %s64
    %s66 = sphi 0, %s64
    %s67 = sphi 0, %s66
    %s81 = sphi 0, %s67
    %s87 = sphi 0, %s89
    %s90 = sphi 0, %s87
    %s91 = sphi 0, %s90
    %s107 = sphi 0, %s91
  $region4: #{image_encoder_forward.3} parent=0 // loop_header_branch
    %12 = sbr.rel (%p10) target = $region8
  $region5: #{image_encoder_forward.3} parent=0 // loop_body
    %s14 = ssub.s32 %s9, 1
    %s15 = ssub.s32 %s9, 2
    %s16 = sadd.s32 %s9, 1
    %s17 = ssub.s32 %s9, %s16
    %p18 = scmp.eq.s32.totalorder %s17, 0
    %s20 = sadd.s32 %s19, 1
    %s21 = scalar_select %p18, %s19, %s20
    %p24 = pneg %p18
    %p25 = scmp.eq.s32.totalorder %s9, 1
    %p26 = por %p24, %p25
    %p27 = scmp.ne.s32.totalorder %s19, %s22
    %p28 = scmp.eq.s32.totalorder %s9, 0
    %p29 = por %p27, %p28
    %p30 = scmp.ne.s32.totalorder %s19, %s22
    %p31 = scmp.eq.s32.totalorder %s14, 1
    %p32 = por %p30, %p31
    %p33 = scmp.ne.s32.totalorder %s22, %s23
    %p34 = scmp.eq.s32.totalorder %s14, 0
    %p35 = por %p33, %p34
    %p36 = scmp.ne.s32.totalorder %s22, %s23
    %p37 = scmp.eq.s32.totalorder %s15, 1
    %p38 = por %p36, %p37
    %p40 = scmp.ne.s32.totalorder %s23, %s39
    %p41 = scmp.eq.s32.totalorder %s15, 0
    %p42 = por %p40, %p41
    %s44 = sadd.s32 %s43, 1
    %p47 = scmp.eq.s32.totalorder %s9, 1
    %p48 = scmp.ne.s32.totalorder %s43, %s45
    %p49 = scmp.eq.s32.totalorder %s9, 0
    %p50 = por %p48, %p49
    %p51 = scmp.ne.s32.totalorder %s43, %s45
    %p52 = scmp.eq.s32.totalorder %s14, 1
    %p53 = por %p51, %p52
    %p54 = scmp.ne.s32.totalorder %s45, %s46
    %p55 = scmp.eq.s32.totalorder %s14, 0
    %p56 = por %p54, %p55
    %p57 = scmp.ne.s32.totalorder %s45, %s46
    %p58 = scmp.eq.s32.totalorder %s15, 1
    %p59 = por %p57, %p58
    %p61 = scmp.ne.s32.totalorder %s46, %s60
    %p62 = scmp.eq.s32.totalorder %s15, 0
    %p63 = por %p61, %p62
    %s65 = sadd.s32 %s64, 1
    %p68 = scmp.eq.s32.totalorder %s9, 1
    %p69 = scmp.ne.s32.totalorder %s64, %s66
    %p70 = scmp.eq.s32.totalorder %s9, 0
    %p71 = por %p69, %p70
    %p72 = scmp.ne.s32.totalorder %s64, %s66
    %p73 = scmp.eq.s32.totalorder %s14, 1
    %p74 = por %p72, %p73
    %p75 = scmp.ne.s32.totalorder %s66, %s67
    %p76 = scmp.eq.s32.totalorder %s14, 0
    %p77 = por %p75, %p76
    %p78 = scmp.ne.s32.totalorder %s66, %s67
    %p79 = scmp.eq.s32.totalorder %s15, 1
    %p80 = por %p78, %p79
    %p82 = scmp.ne.s32.totalorder %s67, %s81
    %p83 = scmp.eq.s32.totalorder %s15, 0
    %p84 = por %p82, %p83
    %s85 = ssub.s32 %s9, %s16
    %p86 = scmp.eq.s32.totalorder %s85, 0
    %s88 = sadd.s32 %s87, 1
    %s89 = scalar_select %p86, %s87, %s88
    %p92 = pneg %p86
    %p93 = scmp.eq.s32.totalorder %s9, 1
    %p94 = por %p92, %p93
    %p95 = scmp.ne.s32.totalorder %s87, %s90
    %p96 = scmp.eq.s32.totalorder %s9, 0
    %p97 = por %p95, %p96
    %p98 = scmp.ne.s32.totalorder %s87, %s90
    %p99 = scmp.eq.s32.totalorder %s14, 1
    %p100 = por %p98, %p99
    %p101 = scmp.ne.s32.totalorder %s90, %s91
    %p102 = scmp.eq.s32.totalorder %s14, 0
    %p103 = por %p101, %p102
    %p104 = scmp.ne.s32.totalorder %s90, %s91
    %p105 = scmp.eq.s32.totalorder %s15, 1
    %p106 = por %p104, %p105
    %p108 = scmp.ne.s32.totalorder %s91, %s107
    %p109 = scmp.eq.s32.totalorder %s15, 0
    %p110 = por %p108, %p109
    %p111 = scmp.le.s32.totalorder 1, %s9
    %p112 = scmp.lt.s32.totalorder %s9, 3
    %p113 = pnand %p111, %p112
    %p114 = pneg %p113
    // Predicated region
    $region9: #{image_encoder_forward.3} parent=5 // pred_check
      _
    $region10: #{image_encoder_forward.3} parent=5 // pred_check_branch
      %116 = sbr.rel (%p113) target = $region12
    $region11: #{image_encoder_forward.3} parent=5 // pred_region
      %s117 = ssub.s32 %s9, 1
      // Predicated region
      $region13: #{image_encoder_forward.3} parent=11 // pred_check
        %p118 = pneg %p56
      $region14: #{image_encoder_forward.3} parent=11 // pred_check_branch
        %120 = sbr.rel (%p118) target = $region16
      $region15: #{image_encoder_forward.3} parent=11 // pred_region
        _
      $region16: #{image_encoder_forward.3} parent=11 // pred_fallthru
        _
      // Predicated region
      $region17: #{image_encoder_forward.3} parent=11 // pred_check
        %p121 = pneg %p77
      $region18: #{image_encoder_forward.3} parent=11 // pred_check_branch
        %123 = sbr.rel (%p121) target = $region20
      $region19: #{image_encoder_forward.3} parent=11 // pred_region
        _
      $region20: #{image_encoder_forward.3} parent=11 // pred_fallthru
        _
    $region12: #{image_encoder_forward.3} parent=5 // pred_fallthru
      _
    %p124 = scmp.lt.s32.totalorder %s9, 2
    // Predicated region
    $region21: #{image_encoder_forward.3} parent=5 // pred_check
      %p125 = pneg %p124
    $region22: #{image_encoder_forward.3} parent=5 // pred_check_branch
      %127 = sbr.rel (%p125) target = $region24
    $region23: #{image_encoder_forward.3} parent=5 // pred_region
      // Predicated region
      $region25: #{image_encoder_forward.3} parent=23 // pred_check
        %p128 = pneg %p29
      $region26: #{image_encoder_forward.3} parent=23 // pred_check_branch
        %130 = sbr.rel (%p128) target = $region28
      $region27: #{image_encoder_forward.3} parent=23 // pred_region
        %p131 = scmp.lt.s32.totalorder %s9, 1
        %s132 = scalar_select %p131, %s9, 1
        %s133 = smul.addr %s132, 18
        %s134 = smul.addr %s133, 4
        %s135 = scalar_lea.vmem %s0, %s134
      $region28: #{image_encoder_forward.3} parent=23 // pred_fallthru
        _
    $region24: #{image_encoder_forward.3} parent=5 // pred_fallthru
      _
    %p136 = scmp.le.s32.totalorder 1, %s9
    %p137 = scmp.lt.s32.totalorder %s9, 3
    %p138 = pnand %p136, %p137
    %p139 = pneg %p138
    // Predicated region
    $region29: #{image_encoder_forward.3} parent=5 // pred_check
      _
    $region30: #{image_encoder_forward.3} parent=5 // pred_check_branch
      %141 = sbr.rel (%p138) target = $region32
    $region31: #{image_encoder_forward.3} parent=5 // pred_region
      %s142 = ssub.s32 %s9, 1
      %p143 = scmp.lt.s32.totalorder %s14, 1
      %s144 = scalar_select %p143, %s14, 1
      %s145 = smul.addr %s144, 18
      %s146 = smul.addr %s145, 4
      %s147 = scalar_lea.vmem %s0, %s146
      %p148 = pneg %p35
      %p149 = pneg %p32
      %p150 = pneg %p56
      %p151 = pneg %p53
      %p152 = pneg %p77
      %p153 = pneg %p74
      %p154 = pneg %p103
      %p155 = pneg %p100
      %p156 = scmp.lt.s32.totalorder %s14, 1
      %s157 = scalar_select %p156, %s14, 1
      %s158 = smul.addr %s157, 8
      %s159 = smul.addr %s158, 4
      %s160 = scalar_lea.vmem %s3, %s159
      %p161 = scmp.lt.s32.totalorder %s14, 1
      %s162 = scalar_select %p161, %s14, 1
      %s163 = smul.addr %s162, 18
      %s164 = smul.addr %s163, 4
      %s165 = scalar_lea.vmem %s0, %s164
      %p166 = scmp.lt.s32.totalorder %s14, 1
      %s167 = scalar_select %p166, %s14, 1
      %s168 = smul.addr %s167, 8
      %s169 = smul.addr %s168, 4
      %s170 = scalar_lea.vmem %s3, %s169
      %v172 = vld [vmem:[%s165] sm:$0xf]
      %v173 = vld [vmem:[%s165 + $0x8] sm:$0xf]
      %v174 = vld [vmem:[%s165 + $0x10] sm:$0xf]
      %v175 = vld [vmem:[%s165 + $0x18] sm:$0xf]
      %v176 = vld [vmem:[%s165 + $0x20] sm:$0xf]
      %v177 = vld [vmem:[%s165 + $0x28] sm:$0xf]
      %v178 = vld [vmem:[%s165 + $0x30] sm:$0xf]
      %v179 = vld [vmem:[%s165 + $0x38] sm:$0xf]
      %v180 = vld [vmem:[%s165 + $0x4] sm:$0x1]
      %v181 = vld [vmem:[%s165 + $0xc] sm:$0x1]
      %v182 = vld [vmem:[%s165 + $0x14] sm:$0x1]
      %v183 = vld [vmem:[%s165 + $0x1c] sm:$0x1]
      %v184 = vld [vmem:[%s165 + $0x24] sm:$0x1]
      %v185 = vld [vmem:[%s165 + $0x2c] sm:$0x1]
      %v186 = vld [vmem:[%s165 + $0x34] sm:$0x1]
      %v187 = vld [vmem:[%s165 + $0x3c] sm:$0x1]
      %s188 = scalar_lea.vmem %s165, 8
      %v189 = vld [vmem:[%s188] sm:$0xf]
      %v190 = vld [vmem:[%s188 + $0x8] sm:$0xf]
      %v191 = vld [vmem:[%s188 + $0x10] sm:$0xf]
      %v192 = vld [vmem:[%s188 + $0x18] sm:$0xf]
      %v193 = vld [vmem:[%s188 + $0x20] sm:$0xf]
      %v194 = vld [vmem:[%s188 + $0x28] sm:$0xf]
      %v195 = vld [vmem:[%s188 + $0x30] sm:$0xf]
      %v196 = vld [vmem:[%s188 + $0x38] sm:$0xf]
      %v197 = vld [vmem:[%s188 + $0x4] sm:$0x1]
      %v198 = vld [vmem:[%s188 + $0xc] sm:$0x1]
      %v199 = vld [vmem:[%s188 + $0x14] sm:$0x1]
      %v200 = vld [vmem:[%s188 + $0x1c] sm:$0x1]
      %v201 = vld [vmem:[%s188 + $0x24] sm:$0x1]
      %v202 = vld [vmem:[%s188 + $0x2c] sm:$0x1]
      %v203 = vld [vmem:[%s188 + $0x34] sm:$0x1]
      %v204 = vld [vmem:[%s188 + $0x3c] sm:$0x1]
      %v221 = vunpack.c.l.b16 %v172
      %v222 = vunpack.c.l.b16 %v180
      %v223 = vunpack.c.l.b16 %v173
      %v224 = vunpack.c.l.b16 %v181
      %v225 = vunpack.c.l.b16 %v174
      %v226 = vunpack.c.l.b16 %v182
      %v227 = vunpack.c.l.b16 %v175
      %v228 = vunpack.c.l.b16 %v183
      %v229 = vunpack.c.l.b16 %v176
      %v230 = vunpack.c.l.b16 %v184
      %v231 = vunpack.c.l.b16 %v177
      %v232 = vunpack.c.l.b16 %v185
      %v233 = vunpack.c.l.b16 %v178
      %v234 = vunpack.c.l.b16 %v186
      %v235 = vunpack.c.l.b16 %v179
      %v236 = vunpack.c.l.b16 %v187
      %v237 = vpack.c.b16 %v222, %v221
      %v238 = vpack.c.b16 %v224, %v223
      %v239 = vpack.c.b16 %v226, %v225
      %v240 = vpack.c.b16 %v228, %v227
      %v241 = vpack.c.b16 %v230, %v229
      %v242 = vpack.c.b16 %v232, %v231
      %v243 = vpack.c.b16 %v234, %v233
      %v244 = vpack.c.b16 %v236, %v235
      %v246 = vshrl.u32 %v237, 16
      %v248 = vshll.u32 %v237, 16
      %v250 = vrot.slane %v248, 1
      %v251 = vor.u32 %v246, %v250
      %v253 = vshrl.u32 %v238, 16
      %v255 = vshll.u32 %v238, 16
      %v257 = vrot.slane %v255, 1
      %v258 = vor.u32 %v253, %v257
      %v260 = vshrl.u32 %v239, 16
      %v262 = vshll.u32 %v239, 16
      %v264 = vrot.slane %v262, 1
      %v265 = vor.u32 %v260, %v264
      %v267 = vshrl.u32 %v240, 16
      %v269 = vshll.u32 %v240, 16
      %v271 = vrot.slane %v269, 1
      %v272 = vor.u32 %v267, %v271
      %v274 = vshrl.u32 %v241, 16
      %v276 = vshll.u32 %v241, 16
      %v278 = vrot.slane %v276, 1
      %v279 = vor.u32 %v274, %v278
      %v281 = vshrl.u32 %v242, 16
      %v283 = vshll.u32 %v242, 16
      %v285 = vrot.slane %v283, 1
      %v286 = vor.u32 %v281, %v285
      %v288 = vshrl.u32 %v243, 16
      %v290 = vshll.u32 %v243, 16
      %v292 = vrot.slane %v290, 1
      %v293 = vor.u32 %v288, %v292
      %v295 = vshrl.u32 %v244, 16
      %v297 = vshll.u32 %v244, 16
      %v299 = vrot.slane %v297, 1
      %v300 = vor.u32 %v295, %v299
      %301 = vrot.lane.b32.xlu0 %v251, 6
      %v302 = vpop.permute.xlu0 %301
      %303 = vrot.lane.b32.xlu0 %v258, 6
      %v304 = vpop.permute.xlu0 %303
      %305 = vrot.lane.b32.xlu0 %v265, 6
      %v306 = vpop.permute.xlu0 %305
      %307 = vrot.lane.b32.xlu0 %v272, 6
      %v308 = vpop.permute.xlu0 %307
      %309 = vrot.lane.b32.xlu0 %v279, 6
      %v310 = vpop.permute.xlu0 %309
      %311 = vrot.lane.b32.xlu0 %v286, 6
      %v312 = vpop.permute.xlu0 %311
      %313 = vrot.lane.b32.xlu0 %v293, 6
      %v314 = vpop.permute.xlu0 %313
      %315 = vrot.lane.b32.xlu0 %v300, 6
      %v316 = vpop.permute.xlu0 %315
      %v317 = vpack.c.b16 %v221, %v221
      %v318 = vpack.c.b16 %v223, %v223
      %v319 = vpack.c.b16 %v225, %v225
      %v320 = vpack.c.b16 %v227, %v227
      %v321 = vpack.c.b16 %v229, %v229
      %v322 = vpack.c.b16 %v231, %v231
      %v323 = vpack.c.b16 %v233, %v233
      %v324 = vpack.c.b16 %v235, %v235
      %325 = vrot.lane.b32.xlu0 %v317, 3
      %v326 = vpop.permute.xlu0 %325
      %327 = vrot.lane.b32.xlu0 %v318, 3
      %v328 = vpop.permute.xlu0 %327
      %329 = vrot.lane.b32.xlu0 %v319, 3
      %v330 = vpop.permute.xlu0 %329
      %331 = vrot.lane.b32.xlu0 %v320, 3
      %v332 = vpop.permute.xlu0 %331
      %333 = vrot.lane.b32.xlu0 %v321, 3
      %v334 = vpop.permute.xlu0 %333
      %335 = vrot.lane.b32.xlu0 %v322, 3
      %v336 = vpop.permute.xlu0 %335
      %337 = vrot.lane.b32.xlu0 %v323, 3
      %v338 = vpop.permute.xlu0 %337
      %339 = vrot.lane.b32.xlu0 %v324, 3
      %v340 = vpop.permute.xlu0 %339
      %341 = vrot.lane.b32.xlu0 %v251, 9
      %v342 = vpop.permute.xlu0 %341
      %343 = vrot.lane.b32.xlu0 %v258, 9
      %v344 = vpop.permute.xlu0 %343
      %345 = vrot.lane.b32.xlu0 %v265, 9
      %v346 = vpop.permute.xlu0 %345
      %347 = vrot.lane.b32.xlu0 %v272, 9
      %v348 = vpop.permute.xlu0 %347
      %349 = vrot.lane.b32.xlu0 %v279, 9
      %v350 = vpop.permute.xlu0 %349
      %351 = vrot.lane.b32.xlu0 %v286, 9
      %v352 = vpop.permute.xlu0 %351
      %353 = vrot.lane.b32.xlu0 %v293, 9
      %v354 = vpop.permute.xlu0 %353
      %355 = vrot.lane.b32.xlu0 %v300, 9
      %v356 = vpop.permute.xlu0 %355
      %v365 = vunpack.c.l.b16 %v189
      %v366 = vunpack.c.l.b16 %v190
      %v367 = vunpack.c.l.b16 %v191
      %v368 = vunpack.c.l.b16 %v192
      %v369 = vunpack.c.l.b16 %v193
      %v370 = vunpack.c.l.b16 %v194
      %v371 = vunpack.c.l.b16 %v195
      %v372 = vunpack.c.l.b16 %v196
      %v373 = vpack.c.b16 %v365, %v365
      %v374 = vpack.c.b16 %v366, %v366
      %v375 = vpack.c.b16 %v367, %v367
      %v376 = vpack.c.b16 %v368, %v368
      %v377 = vpack.c.b16 %v369, %v369
      %v378 = vpack.c.b16 %v370, %v370
      %v379 = vpack.c.b16 %v371, %v371
      %v380 = vpack.c.b16 %v372, %v372
      %381 = vrot.lane.b32.xlu0 %v373, 18
      %v382 = vpop.permute.xlu0 %381
      %383 = vrot.lane.b32.xlu0 %v374, 18
      %v384 = vpop.permute.xlu0 %383
      %385 = vrot.lane.b32.xlu0 %v375, 18
      %v386 = vpop.permute.xlu0 %385
      %387 = vrot.lane.b32.xlu0 %v376, 18
      %v388 = vpop.permute.xlu0 %387
      %389 = vrot.lane.b32.xlu0 %v377, 18
      %v390 = vpop.permute.xlu0 %389
      %391 = vrot.lane.b32.xlu0 %v378, 18
      %v392 = vpop.permute.xlu0 %391
      %393 = vrot.lane.b32.xlu0 %v379, 18
      %v394 = vpop.permute.xlu0 %393
      %395 = vrot.lane.b32.xlu0 %v380, 18
      %v396 = vpop.permute.xlu0 %395
      %v405 = vunpack.c.l.b16 %v197
      %v406 = vunpack.c.l.b16 %v198
      %v407 = vunpack.c.l.b16 %v199
      %v408 = vunpack.c.l.b16 %v200
      %v409 = vunpack.c.l.b16 %v201
      %v410 = vunpack.c.l.b16 %v202
      %v411 = vunpack.c.l.b16 %v203
      %v412 = vunpack.c.l.b16 %v204
      %v413 = vpack.c.b16 %v405, %v365
      %v414 = vpack.c.b16 %v406, %v366
      %v415 = vpack.c.b16 %v407, %v367
      %v416 = vpack.c.b16 %v408, %v368
      %v417 = vpack.c.b16 %v409, %v369
      %v418 = vpack.c.b16 %v410, %v370
      %v419 = vpack.c.b16 %v411, %v371
      %v420 = vpack.c.b16 %v412, %v372
      %v422 = vshrl.u32 %v413, 16
      %v424 = vshll.u32 %v413, 16
      %v426 = vrot.slane %v424, 1
      %v427 = vor.u32 %v422, %v426
      %v429 = vshrl.u32 %v414, 16
      %v431 = vshll.u32 %v414, 16
      %v433 = vrot.slane %v431, 1
      %v434 = vor.u32 %v429, %v433
      %v436 = vshrl.u32 %v415, 16
      %v438 = vshll.u32 %v415, 16
      %v440 = vrot.slane %v438, 1
      %v441 = vor.u32 %v436, %v440
      %v443 = vshrl.u32 %v416, 16
      %v445 = vshll.u32 %v416, 16
      %v447 = vrot.slane %v445, 1
      %v448 = vor.u32 %v443, %v447
      %v450 = vshrl.u32 %v417, 16
      %v452 = vshll.u32 %v417, 16
      %v454 = vrot.slane %v452, 1
      %v455 = vor.u32 %v450, %v454
      %v457 = vshrl.u32 %v418, 16
      %v459 = vshll.u32 %v418, 16
      %v461 = vrot.slane %v459, 1
      %v462 = vor.u32 %v457, %v461
      %v464 = vshrl.u32 %v419, 16
      %v466 = vshll.u32 %v419, 16
      %v468 = vrot.slane %v466, 1
      %v469 = vor.u32 %v464, %v468
      %v471 = vshrl.u32 %v420, 16
      %v473 = vshll.u32 %v420, 16
      %v475 = vrot.slane %v473, 1
      %v476 = vor.u32 %v471, %v475
      %477 = vrot.lane.b32.xlu0 %v427, 24
      %v478 = vpop.permute.xlu0 %477
      %479 = vrot.lane.b32.xlu0 %v434, 24
      %v480 = vpop.permute.xlu0 %479
      %481 = vrot.lane.b32.xlu0 %v441, 24
      %v482 = vpop.permute.xlu0 %481
      %483 = vrot.lane.b32.xlu0 %v448, 24
      %v484 = vpop.permute.xlu0 %483
      %485 = vrot.lane.b32.xlu0 %v455, 24
      %v486 = vpop.permute.xlu0 %485
      %487 = vrot.lane.b32.xlu0 %v462, 24
      %v488 = vpop.permute.xlu0 %487
      %489 = vrot.lane.b32.xlu0 %v469, 24
      %v490 = vpop.permute.xlu0 %489
      %491 = vrot.lane.b32.xlu0 %v476, 24
      %v492 = vpop.permute.xlu0 %491
      %vm501 = vcmask 48128
      %v503 = vsel %vm501, %v172, %v302
      %v505 = vsel %vm501, %v173, %v304
      %v507 = vsel %vm501, %v174, %v306
      %v509 = vsel %vm501, %v175, %v308
      %v511 = vsel %vm501, %v176, %v310
      %v513 = vsel %vm501, %v177, %v312
      %v515 = vsel %vm501, %v178, %v314
      %v517 = vsel %vm501, %v179, %v316
      %vm518 = vcmask 72704
      %v520 = vsel %vm518, %v503, %v326
      %v522 = vsel %vm518, %v505, %v328
      %v524 = vsel %vm518, %v507, %v330
      %v526 = vsel %vm518, %v509, %v332
      %v528 = vsel %vm518, %v511, %v334
      %v530 = vsel %vm518, %v513, %v336
      %v532 = vsel %vm518, %v515, %v338
      %v534 = vsel %vm518, %v517, %v340
      %vm535 = vcmask 97280
      %v536 = vsel %vm535, %v520, %v326
      %v537 = vsel %vm535, %v522, %v328
      %v538 = vsel %vm535, %v524, %v330
      %v539 = vsel %vm535, %v526, %v332
      %v540 = vsel %vm535, %v528, %v334
      %v541 = vsel %vm535, %v530, %v336
      %v542 = vsel %vm535, %v532, %v338
      %v543 = vsel %vm535, %v534, %v340
      %vm544 = vcmask 121856
      %v546 = vsel %vm544, %v536, %v342
      %v548 = vsel %vm544, %v537, %v344
      %v550 = vsel %vm544, %v538, %v346
      %v552 = vsel %vm544, %v539, %v348
      %v554 = vsel %vm544, %v540, %v350
      %v556 = vsel %vm544, %v541, %v352
      %v558 = vsel %vm544, %v542, %v354
      %v560 = vsel %vm544, %v543, %v356
      %vm561 = vcmask 146432
      %v563 = vsel %vm561, %v546, %v382
      %v565 = vsel %vm561, %v548, %v384
      %v567 = vsel %vm561, %v550, %v386
      %v569 = vsel %vm561, %v552, %v388
      %v571 = vsel %vm561, %v554, %v390
      %v573 = vsel %vm561, %v556, %v392
      %v575 = vsel %vm561, %v558, %v394
      %v577 = vsel %vm561, %v560, %v396
      %vm578 = vcmask 171008
      %v579 = vsel %vm578, %v563, %v382
      %v580 = vsel %vm578, %v565, %v384
      %v581 = vsel %vm578, %v567, %v386
      %v582 = vsel %vm578, %v569, %v388
      %v583 = vsel %vm578, %v571, %v390
      %v584 = vsel %vm578, %v573, %v392
      %v585 = vsel %vm578, %v575, %v394
      %v586 = vsel %vm578, %v577, %v396
      %vm587 = vcmask 195584
      %v589 = vsel %vm587, %v579, %v478
      %v591 = vsel %vm587, %v580, %v480
      %v593 = vsel %vm587, %v581, %v482
      %v595 = vsel %vm587, %v582, %v484
      %v597 = vsel %vm587, %v583, %v486
      %v599 = vsel %vm587, %v584, %v488
      %v601 = vsel %vm587, %v585, %v490
      %v603 = vsel %vm587, %v586, %v492
      %v604 = vld [vmem:[%s1] sm:$0xf]
      %v605 = vld [vmem:[%s1 + $0x4] sm:$0xf]
      %v606 = vld [vmem:[%s1 + $0x8] sm:$0xf]
      %v607 = vld [vmem:[%s1 + $0xc] sm:$0x3]
      %v608 = vld [vmem:[%s2] sm:$0x1]
      %v610 = vlaneseq
      %v611 = vshrl.u32 %v610, 7
      %v612 = vsub.s32 0, %v611
      %v613 = vrot.slane %v608, %v612
      %v619 = vunpack.c.l.b16 %v604
      %v620 = vunpack.c.l.b16 %v605
      %v621 = vunpack.c.l.b16 %v606
      %v622 = vunpack.c.l.b16 %v607
      %v623 = vpack.c.b16 %v620, %v619
      %v624 = vpack.c.b16 %v622, %v621
      %vm626 = vcmask 220160
      %v627 = vsel %vm626, %v589, 0
      %vm629 = vcmask 1044480
      %vm630 = vcmask 1045504
      %v631 = vsel %vm629, 4294967295, 65535
      %v632 = vsel %vm630, %v631, 0
      %v634 = vand.u32 %v624, %v632
      %636 = vmatprep.subr.bf16.mxu0 0
      %637 = vmatpush1.bf16.msra.mxu0 %v623
      %638 = vmatprep.subr.bf16.mxu0 0
      %639 = vmatpush1.bf16.msra.mxu0 %v634
      %640 = vmatprep.subr.bf16.mxu0 0
      %641 = vmatpush1.bf16.msra.mxu0 0
      %642 = vmatprep.subr.bf16.mxu0 0
      %643 = vmatpush1.bf16.msra.mxu0 0
      %644 = vmatprep.subr.bf16.mxu0 0
      %645 = vmatpush1.bf16.msra.mxu0 0
      %646 = vmatprep.subr.bf16.mxu0 0
      %647 = vmatpush1.bf16.msra.mxu0 0
      %648 = vmatprep.subr.bf16.mxu0 0
      %649 = vmatpush1.bf16.msra.mxu0 0
      %650 = vmatprep.subr.bf16.mxu0 0
      %651 = vmatpush1.bf16.msra.mxu0 0
      %652 = vmatprep.subr.bf16.mxu0 0
      %653 = vmatpush1.bf16.msra.mxu0 0
      %654 = vmatprep.subr.bf16.mxu0 0
      %655 = vmatpush1.bf16.msra.mxu0 0
      %656 = vmatprep.subr.bf16.mxu0 0
      %657 = vmatpush1.bf16.msra.mxu0 0
      %658 = vmatprep.subr.bf16.mxu0 0
      %659 = vmatpush1.bf16.msra.mxu0 0
      %660 = vmatprep.subr.bf16.mxu0 0
      %661 = vmatpush1.bf16.msra.mxu0 0
      %662 = vmatprep.subr.bf16.mxu0 0
      %663 = vmatpush1.bf16.msra.mxu0 0
      %664 = vmatprep.subr.bf16.mxu0 0
      %665 = vmatpush1.bf16.msra.mxu0 0
      %666 = vmatprep.subr.bf16.mxu0 0
      %667 = vmatpush1.bf16.msra.mxu0 0
      %668 = vmatprep.mubr.bf16.mxu0 0
      %669 = vmatmul.mubr.bf16.gmra.mrb[0].mxu0 %v627
      %v670 = vpop.f32.mrb[0].mxu0
      %v671 = vadd.f32 %v613, %v670
      %v672 = vpop.f32.mrb[0].mxu0
      %v673 = vpop.f32.mrb[0].mxu0
      %v674 = vpop.f32.mrb[0].mxu0
      %675 = vdwg.mxu0
      %v676 = vmax.f32 %v671, 0.0
      %v677 = vpack.c.bf16 %v676, %v676
      %vm678 = vcmask 519168
      %679 = vst.msk [vmem:[%s170] sm:$0xf] %vm678, %v677
      %v680 = vld [vmem:[%s1] sm:$0xf]
      %v681 = vld [vmem:[%s1 + $0x4] sm:$0xf]
      %v682 = vld [vmem:[%s1 + $0x8] sm:$0xf]
      %v683 = vld [vmem:[%s1 + $0xc] sm:$0x3]
      %v684 = vld [vmem:[%s2] sm:$0x1]
      %v686 = vlaneseq
      %v687 = vshrl.u32 %v686, 7
      %v688 = vsub.s32 0, %v687
      %v689 = vrot.slane %v684, %v688
      %v695 = vunpack.c.l.b16 %v680
      %v696 = vunpack.c.l.b16 %v681
      %v697 = vunpack.c.l.b16 %v682
      %v698 = vunpack.c.l.b16 %v683
      %v699 = vpack.c.b16 %v696, %v695
      %v700 = vpack.c.b16 %v698, %v697
      %v702 = vsel %vm626, %v591, 0
      %v705 = vand.u32 %v700, %v632
      %707 = vmatprep.subr.bf16.mxu0 0
      %708 = vmatpush1.bf16.msra.mxu0 %v699
      %709 = vmatprep.subr.bf16.mxu0 0
      %710 = vmatpush1.bf16.msra.mxu0 %v705
      %711 = vmatprep.subr.bf16.mxu0 0
      %712 = vmatpush1.bf16.msra.mxu0 0
      %713 = vmatprep.subr.bf16.mxu0 0
      %714 = vmatpush1.bf16.msra.mxu0 0
      %715 = vmatprep.subr.bf16.mxu0 0
      %716 = vmatpush1.bf16.msra.mxu0 0
      %717 = vmatprep.subr.bf16.mxu0 0
      %718 = vmatpush1.bf16.msra.mxu0 0
      %719 = vmatprep.subr.bf16.mxu0 0
      %720 = vmatpush1.bf16.msra.mxu0 0
      %721 = vmatprep.subr.bf16.mxu0 0
      %722 = vmatpush1.bf16.msra.mxu0 0
      %723 = vmatprep.subr.bf16.mxu0 0
      %724 = vmatpush1.bf16.msra.mxu0 0
      %725 = vmatprep.subr.bf16.mxu0 0
      %726 = vmatpush1.bf16.msra.mxu0 0
      %727 = vmatprep.subr.bf16.mxu0 0
      %728 = vmatpush1.bf16.msra.mxu0 0
      %729 = vmatprep.subr.bf16.mxu0 0
      %730 = vmatpush1.bf16.msra.mxu0 0
      %731 = vmatprep.subr.bf16.mxu0 0
      %732 = vmatpush1.bf16.msra.mxu0 0
      %733 = vmatprep.subr.bf16.mxu0 0
      %734 = vmatpush1.bf16.msra.mxu0 0
      %735 = vmatprep.subr.bf16.mxu0 0
      %736 = vmatpush1.bf16.msra.mxu0 0
      %737 = vmatprep.subr.bf16.mxu0 0
      %738 = vmatpush1.bf16.msra.mxu0 0
      %739 = vmatprep.mubr.bf16.mxu0 0
      %740 = vmatmul.mubr.bf16.gmra.mrb[0].mxu0 %v702
      %v741 = vpop.f32.mrb[0].mxu0
      %v742 = vadd.f32 %v689, %v741
      %v743 = vpop.f32.mrb[0].mxu0
      %v744 = vpop.f32.mrb[0].mxu0
      %v745 = vpop.f32.mrb[0].mxu0
      %746 = vdwg.mxu0
      %v747 = vmax.f32 %v742, 0.0
      %v748 = vpack.c.bf16 %v747, %v747
      %749 = vst.msk [vmem:[%s170 + $0x4] sm:$0xf] %vm678, %v748
      %v750 = vld [vmem:[%s1] sm:$0xf]
      %v751 = vld [vmem:[%s1 + $0x4] sm:$0xf]
      %v752 = vld [vmem:[%s1 + $0x8] sm:$0xf]
      %v753 = vld [vmem:[%s1 + $0xc] sm:$0x3]
      %v754 = vld [vmem:[%s2] sm:$0x1]
      %v756 = vlaneseq
      %v757 = vshrl.u32 %v756, 7
      %v758 = vsub.s32 0, %v757
      %v759 = vrot.slane %v754, %v758
      %v765 = vunpack.c.l.b16 %v750
      %v766 = vunpack.c.l.b16 %v751
      %v767 = vunpack.c.l.b16 %v752
      %v768 = vunpack.c.l.b16 %v753
      %v769 = vpack.c.b16 %v766, %v765
      %v770 = vpack.c.b16 %v768, %v767
      %v772 = vsel %vm626, %v593, 0
      %v775 = vand.u32 %v770, %v632
      %777 = vmatprep.subr.bf16.mxu0 0
      %778 = vmatpush1.bf16.msra.mxu0 %v769
      %779 = vmatprep.subr.bf16.mxu0 0
      %780 = vmatpush1.bf16.msra.mxu0 %v775
      %781 = vmatprep.subr.bf16.mxu0 0
      %782 = vmatpush1.bf16.msra.mxu0 0
      %783 = vmatprep.subr.bf16.mxu0 0
      %784 = vmatpush1.bf16.msra.mxu0 0
      %785 = vmatprep.subr.bf16.mxu0 0
      %786 = vmatpush1.bf16.msra.mxu0 0
      %787 = vmatprep.subr.bf16.mxu0 0
      %788 = vmatpush1.bf16.msra.mxu0 0
      %789 = vmatprep.subr.bf16.mxu0 0
      %790 = vmatpush1.bf16.msra.mxu0 0
      %791 = vmatprep.subr.bf16.mxu0 0
      %792 = vmatpush1.bf16.msra.mxu0 0
      %793 = vmatprep.subr.bf16.mxu0 0
      %794 = vmatpush1.bf16.msra.mxu0 0
      %795 = vmatprep.subr.bf16.mxu0 0
      %796 = vmatpush1.bf16.msra.mxu0 0
      %797 = vmatprep.subr.bf16.mxu0 0
      %798 = vmatpush1.bf16.msra.mxu0 0
      %799 = vmatprep.subr.bf16.mxu0 0
      %800 = vmatpush1.bf16.msra.mxu0 0
      %801 = vmatprep.subr.bf16.mxu0 0
      %802 = vmatpush1.bf16.msra.mxu0 0
      %803 = vmatprep.subr.bf16.mxu0 0
      %804 = vmatpush1.bf16.msra.mxu0 0
      %805 = vmatprep.subr.bf16.mxu0 0
      %806 = vmatpush1.bf16.msra.mxu0 0
      %807 = vmatprep.subr.bf16.mxu0 0
      %808 = vmatpush1.bf16.msra.mxu0 0
      %809 = vmatprep.mubr.bf16.mxu0 0
      %810 = vmatmul.mubr.bf16.gmra.mrb[0].mxu0 %v772
      %v811 = vpop.f32.mrb[0].mxu0
      %v812 = vadd.f32 %v759, %v811
      %v813 = vpop.f32.mrb[0].mxu0
      %v814 = vpop.f32.mrb[0].mxu0
      %v815 = vpop.f32.mrb[0].mxu0
      %816 = vdwg.mxu0
      %v817 = vmax.f32 %v812, 0.0
      %v818 = vpack.c.bf16 %v817, %v817
      %819 = vst.msk [vmem:[%s170 + $0x8] sm:$0xf] %vm678, %v818
      %v820 = vld [vmem:[%s1] sm:$0xf]
      %v821 = vld [vmem:[%s1 + $0x4] sm:$0xf]
      %v822 = vld [vmem:[%s1 + $0x8] sm:$0xf]
      %v823 = vld [vmem:[%s1 + $0xc] sm:$0x3]
      %v824 = vld [vmem:[%s2] sm:$0x1]
      %v826 = vlaneseq
      %v827 = vshrl.u32 %v826, 7
      %v828 = vsub.s32 0, %v827
      %v829 = vrot.slane %v824, %v828
      %v835 = vunpack.c.l.b16 %v820
      %v836 = vunpack.c.l.b16 %v821
      %v837 = vunpack.c.l.b16 %v822
      %v838 = vunpack.c.l.b16 %v823
      %v839 = vpack.c.b16 %v836, %v835
      %v840 = vpack.c.b16 %v838, %v837
      %v842 = vsel %vm626, %v595, 0
      %v845 = vand.u32 %v840, %v632
      %847 = vmatprep.subr.bf16.mxu0 0
      %848 = vmatpush1.bf16.msra.mxu0 %v839
      %849 = vmatprep.subr.bf16.mxu0 0
      %850 = vmatpush1.bf16.msra.mxu0 %v845
      %851 = vmatprep.subr.bf16.mxu0 0
      %852 = vmatpush1.bf16.msra.mxu0 0
      %853 = vmatprep.subr.bf16.mxu0 0
      %854 = vmatpush1.bf16.msra.mxu0 0
      %855 = vmatprep.subr.bf16.mxu0 0
      %856 = vmatpush1.bf16.msra.mxu0 0
      %857 = vmatprep.subr.bf16.mxu0 0
      %858 = vmatpush1.bf16.msra.mxu0 0
      %859 = vmatprep.subr.bf16.mxu0 0
      %860 = vmatpush1.bf16.msra.mxu0 0
      %861 = vmatprep.subr.bf16.mxu0 0
      %862 = vmatpush1.bf16.msra.mxu0 0
      %863 = vmatprep.subr.bf16.mxu0 0
      %864 = vmatpush1.bf16.msra.mxu0 0
      %865 = vmatprep.subr.bf16.mxu0 0
      %866 = vmatpush1.bf16.msra.mxu0 0
      %867 = vmatprep.subr.bf16.mxu0 0
      %868 = vmatpush1.bf16.msra.mxu0 0
      %869 = vmatprep.subr.bf16.mxu0 0
      %870 = vmatpush1.bf16.msra.mxu0 0
      %871 = vmatprep.subr.bf16.mxu0 0
      %872 = vmatpush1.bf16.msra.mxu0 0
      %873 = vmatprep.subr.bf16.mxu0 0
      %874 = vmatpush1.bf16.msra.mxu0 0
      %875 = vmatprep.subr.bf16.mxu0 0
      %876 = vmatpush1.bf16.msra.mxu0 0
      %877 = vmatprep.subr.bf16.mxu0 0
      %878 = vmatpush1.bf16.msra.mxu0 0
      %879 = vmatprep.mubr.bf16.mxu0 0
      %880 = vmatmul.mubr.bf16.gmra.mrb[0].mxu0 %v842
      %v881 = vpop.f32.mrb[0].mxu0
      %v882 = vadd.f32 %v829, %v881
      %v883 = vpop.f32.mrb[0].mxu0
      %v884 = vpop.f32.mrb[0].mxu0
      %v885 = vpop.f32.mrb[0].mxu0
      %886 = vdwg.mxu0
      %v887 = vmax.f32 %v882, 0.0
      %v888 = vpack.c.bf16 %v887, %v887
      %889 = vst.msk [vmem:[%s170 + $0xc] sm:$0xf] %vm678, %v888
      %v890 = vld [vmem:[%s1] sm:$0xf]
      %v891 = vld [vmem:[%s1 + $0x4] sm:$0xf]
      %v892 = vld [vmem:[%s1 + $0x8] sm:$0xf]
      %v893 = vld [vmem:[%s1 + $0xc] sm:$0x3]
      %v894 = vld [vmem:[%s2] sm:$0x1]
      %v896 = vlaneseq
      %v897 = vshrl.u32 %v896, 7
      %v898 = vsub.s32 0, %v897
      %v899 = vrot.slane %v894, %v898
      %v905 = vunpack.c.l.b16 %v890
      %v906 = vunpack.c.l.b16 %v891
      %v907 = vunpack.c.l.b16 %v892
      %v908 = vunpack.c.l.b16 %v893
      %v909 = vpack.c.b16 %v906, %v905
      %v910 = vpack.c.b16 %v908, %v907
      %v912 = vsel %vm626, %v597, 0
      %v915 = vand.u32 %v910, %v632
      %917 = vmatprep.subr.bf16.mxu0 0
      %918 = vmatpush1.bf16.msra.mxu0 %v909
      %919 = vmatprep.subr.bf16.mxu0 0
      %920 = vmatpush1.bf16.msra.mxu0 %v915
      %921 = vmatprep.subr.bf16.mxu0 0
      %922 = vmatpush1.bf16.msra.mxu0 0
      %923 = vmatprep.subr.bf16.mxu0 0
      %924 = vmatpush1.bf16.msra.mxu0 0
      %925 = vmatprep.subr.bf16.mxu0 0
      %926 = vmatpush1.bf16.msra.mxu0 0
      %927 = vmatprep.subr.bf16.mxu0 0
      %928 = vmatpush1.bf16.msra.mxu0 0
      %929 = vmatprep.subr.bf16.mxu0 0
      %930 = vmatpush1.bf16.msra.mxu0 0
      %931 = vmatprep.subr.bf16.mxu0 0
      %932 = vmatpush1.bf16.msra.mxu0 0
      %933 = vmatprep.subr.bf16.mxu0 0
      %934 = vmatpush1.bf16.msra.mxu0 0
      %935 = vmatprep.subr.bf16.mxu0 0
      %936 = vmatpush1.bf16.msra.mxu0 0
      %937 = vmatprep.subr.bf16.mxu0 0
      %938 = vmatpush1.bf16.msra.mxu0 0
      %939 = vmatprep.subr.bf16.mxu0 0
      %940 = vmatpush1.bf16.msra.mxu0 0
      %941 = vmatprep.subr.bf16.mxu0 0
      %942 = vmatpush1.bf16.msra.mxu0 0
      %943 = vmatprep.subr.bf16.mxu0 0
      %944 = vmatpush1.bf16.msra.mxu0 0
      %945 = vmatprep.subr.bf16.mxu0 0
      %946 = vmatpush1.bf16.msra.mxu0 0
      %947 = vmatprep.subr.bf16.mxu0 0
      %948 = vmatpush1.bf16.msra.mxu0 0
      %949 = vmatprep.mubr.bf16.mxu0 0
      %950 = vmatmul.mubr.bf16.gmra.mrb[0].mxu0 %v912
      %v951 = vpop.f32.mrb[0].mxu0
      %v952 = vadd.f32 %v899, %v951
      %v953 = vpop.f32.mrb[0].mxu0
      %v954 = vpop.f32.mrb[0].mxu0
      %v955 = vpop.f32.mrb[0].mxu0
      %956 = vdwg.mxu0
      %v957 = vmax.f32 %v952, 0.0
      %v958 = vpack.c.bf16 %v957, %v957
      %959 = vst.msk [vmem:[%s170 + $0x10] sm:$0xf] %vm678, %v958
      %v960 = vld [vmem:[%s1] sm:$0xf]
      %v961 = vld [vmem:[%s1 + $0x4] sm:$0xf]
      %v962 = vld [vmem:[%s1 + $0x8] sm:$0xf]
      %v963 = vld [vmem:[%s1 + $0xc] sm:$0x3]
      %v964 = vld [vmem:[%s2] sm:$0x1]
      %v966 = vlaneseq
      %v967 = vshrl.u32 %v966, 7
      %v968 = vsub.s32 0, %v967
      %v969 = vrot.slane %v964, %v968
      %v975 = vunpack.c.l.b16 %v960
      %v976 = vunpack.c.l.b16 %v961
      %v977 = vunpack.c.l.b16 %v962
      %v978 = vunpack.c.l.b16 %v963
      %v979 = vpack.c.b16 %v976, %v975
      %v980 = vpack.c.b16 %v978, %v977
      %v982 = vsel %vm626, %v599, 0
      %v985 = vand.u32 %v980, %v632
      %987 = vmatprep.subr.bf16.mxu0 0
      %988 = vmatpush1.bf16.msra.mxu0 %v979
      %989 = vmatprep.subr.bf16.mxu0 0
      %990 = vmatpush1.bf16.msra.mxu0 %v985
      %991 = vmatprep.subr.bf16.mxu0 0
      %992 = vmatpush1.bf16.msra.mxu0 0
      %993 = vmatprep.subr.bf16.mxu0 0
      %994 = vmatpush1.bf16.msra.mxu0 0
      %995 = vmatprep.subr.bf16.mxu0 0
      %996 = vmatpush1.bf16.msra.mxu0 0
      %997 = vmatprep.subr.bf16.mxu0 0
      %998 = vmatpush1.bf16.msra.mxu0 0
      %999 = vmatprep.subr.bf16.mxu0 0
      %1000 = vmatpush1.bf16.msra.mxu0 0
      %1001 = vmatprep.subr.bf16.mxu0 0
      %1002 = vmatpush1.bf16.msra.mxu0 0
      %1003 = vmatprep.subr.bf16.mxu0 0
      %1004 = vmatpush1.bf16.msra.mxu0 0
      %1005 = vmatprep.subr.bf16.mxu0 0
      %1006 = vmatpush1.bf16.msra.mxu0 0
      %1007 = vmatprep.subr.bf16.mxu0 0
      %1008 = vmatpush1.bf16.msra.mxu0 0
      %1009 = vmatprep.subr.bf16.mxu0 0
      %1010 = vmatpush1.bf16.msra.mxu0 0
      %1011 = vmatprep.subr.bf16.mxu0 0
      %1012 = vmatpush1.bf16.msra.mxu0 0
      %1013 = vmatprep.subr.bf16.mxu0 0
      %1014 = vmatpush1.bf16.msra.mxu0 0
      %1015 = vmatprep.subr.bf16.mxu0 0
      %1016 = vmatpush1.bf16.msra.mxu0 0
      %1017 = vmatprep.subr.bf16.mxu0 0
      %1018 = vmatpush1.bf16.msra.mxu0 0
      %1019 = vmatprep.mubr.bf16.mxu0 0
      %1020 = vmatmul.mubr.bf16.gmra.mrb[0].mxu0 %v982
      %v1021 = vpop.f32.mrb[0].mxu0
      %v1022 = vadd.f32 %v969, %v1021
      %v1023 = vpop.f32.mrb[0].mxu0
      %v1024 = vpop.f32.mrb[0].mxu0
      %v1025 = vpop.f32.mrb[0].mxu0
      %1026 = vdwg.mxu0
      %v1027 = vmax.f32 %v1022, 0.0
      %v1028 = vpack.c.bf16 %v1027, %v1027
      %1029 = vst.msk [vmem:[%s170 + $0x14] sm:$0xf] %vm678, %v1028
      %v1030 = vld [vmem:[%s1] sm:$0xf]
      %v1031 = vld [vmem:[%s1 + $0x4] sm:$0xf]
      %v1032 = vld [vmem:[%s1 + $0x8] sm:$0xf]
      %v1033 = vld [vmem:[%s1 + $0xc] sm:$0x3]
      %v1034 = vld [vmem:[%s2] sm:$0x1]
      %v1036 = vlaneseq
      %v1037 = vshrl.u32 %v1036, 7
      %v1038 = vsub.s32 0, %v1037
      %v1039 = vrot.slane %v1034, %v1038
      %v1045 = vunpack.c.l.b16 %v1030
      %v1046 = vunpack.c.l.b16 %v1031
      %v1047 = vunpack.c.l.b16 %v1032
      %v1048 = vunpack.c.l.b16 %v1033
      %v1049 = vpack.c.b16 %v1046, %v1045
      %v1050 = vpack.c.b16 %v1048, %v1047
      %v1052 = vsel %vm626, %v601, 0
      %v1055 = vand.u32 %v1050, %v632
      %1057 = vmatprep.subr.bf16.mxu0 0
      %1058 = vmatpush1.bf16.msra.mxu0 %v1049
      %1059 = vmatprep.subr.bf16.mxu0 0
      %1060 = vmatpush1.bf16.msra.mxu0 %v1055
      %1061 = vmatprep.subr.bf16.mxu0 0
      %1062 = vmatpush1.bf16.msra.mxu0 0
      %1063 = vmatprep.subr.bf16.mxu0 0
      %1064 = vmatpush1.bf16.msra.mxu0 0
      %1065 = vmatprep.subr.bf16.mxu0 0
      %1066 = vmatpush1.bf16.msra.mxu0 0
      %1067 = vmatprep.subr.bf16.mxu0 0
      %1068 = vmatpush1.bf16.msra.mxu0 0
      %1069 = vmatprep.subr.bf16.mxu0 0
      %1070 = vmatpush1.bf16.msra.mxu0 0
      %1071 = vmatprep.subr.bf16.mxu0 0
      %1072 = vmatpush1.bf16.msra.mxu0 0
      %1073 = vmatprep.subr.bf16.mxu0 0
      %1074 = vmatpush1.bf16.msra.mxu0 0
      %1075 = vmatprep.subr.bf16.mxu0 0
      %1076 = vmatpush1.bf16.msra.mxu0 0
      %1077 = vmatprep.subr.bf16.mxu0 0
      %1078 = vmatpush1.bf16.msra.mxu0 0
      %1079 = vmatprep.subr.bf16.mxu0 0
      %1080 = vmatpush1.bf16.msra.mxu0 0
      %1081 = vmatprep.subr.bf16.mxu0 0
      %1082 = vmatpush1.bf16.msra.mxu0 0
      %1083 = vmatprep.subr.bf16.mxu0 0
      %1084 = vmatpush1.bf16.msra.mxu0 0
      %1085 = vmatprep.subr.bf16.mxu0 0
      %1086 = vmatpush1.bf16.msra.mxu0 0
      %1087 = vmatprep.subr.bf16.mxu0 0
      %1088 = vmatpush1.bf16.msra.mxu0 0
      %1089 = vmatprep.mubr.bf16.mxu0 0
      %1090 = vmatmul.mubr.bf16.gmra.mrb[0].mxu0 %v1052
      %v1091 = vpop.f32.mrb[0].mxu0
      %v1092 = vadd.f32 %v1039, %v1091
      %v1093 = vpop.f32.mrb[0].mxu0
      %v1094 = vpop.f32.mrb[0].mxu0
      %v1095 = vpop.f32.mrb[0].mxu0
      %1096 = vdwg.mxu0
      %v1097 = vmax.f32 %v1092, 0.0
      %v1098 = vpack.c.bf16 %v1097, %v1097
      %1099 = vst.msk [vmem:[%s170 + $0x18] sm:$0xf] %vm678, %v1098
      %v1100 = vld [vmem:[%s1] sm:$0xf]
      %v1101 = vld [vmem:[%s1 + $0x4] sm:$0xf]
      %v1102 = vld [vmem:[%s1 + $0x8] sm:$0xf]
      %v1103 = vld [vmem:[%s1 + $0xc] sm:$0x3]
      %v1104 = vld [vmem:[%s2] sm:$0x1]
      %v1106 = vlaneseq
      %v1107 = vshrl.u32 %v1106, 7
      %v1108 = vsub.s32 0, %v1107
      %v1109 = vrot.slane %v1104, %v1108
      %v1115 = vunpack.c.l.b16 %v1100
      %v1116 = vunpack.c.l.b16 %v1101
      %v1117 = vunpack.c.l.b16 %v1102
      %v1118 = vunpack.c.l.b16 %v1103
      %v1119 = vpack.c.b16 %v1116, %v1115
      %v1120 = vpack.c.b16 %v1118, %v1117
      %v1122 = vsel %vm626, %v603, 0
      %v1125 = vand.u32 %v1120, %v632
      %1127 = vmatprep.subr.bf16.mxu0 0
      %1128 = vmatpush1.bf16.msra.mxu0 %v1119
      %1129 = vmatprep.subr.bf16.mxu0 0
      %1130 = vmatpush1.bf16.msra.mxu0 %v1125
      %1131 = vmatprep.subr.bf16.mxu0 0
      %1132 = vmatpush1.bf16.msra.mxu0 0
      %1133 = vmatprep.subr.bf16.mxu0 0
      %1134 = vmatpush1.bf16.msra.mxu0 0
      %1135 = vmatprep.subr.bf16.mxu0 0
      %1136 = vmatpush1.bf16.msra.mxu0 0
      %1137 = vmatprep.subr.bf16.mxu0 0
      %1138 = vmatpush1.bf16.msra.mxu0 0
      %1139 = vmatprep.subr.bf16.mxu0 0
      %1140 = vmatpush1.bf16.msra.mxu0 0
      %1141 = vmatprep.subr.bf16.mxu0 0
      %1142 = vmatpush1.bf16.msra.mxu0 0
      %1143 = vmatprep.subr.bf16.mxu0 0
      %1144 = vmatpush1.bf16.msra.mxu0 0
      %1145 = vmatprep.subr.bf16.mxu0 0
      %1146 = vmatpush1.bf16.msra.mxu0 0
      %1147 = vmatprep.subr.bf16.mxu0 0
      %1148 = vmatpush1.bf16.msra.mxu0 0
      %1149 = vmatprep.subr.bf16.mxu0 0
      %1150 = vmatpush1.bf16.msra.mxu0 0
      %1151 = vmatprep.subr.bf16.mxu0 0
      %1152 = vmatpush1.bf16.msra.mxu0 0
      %1153 = vmatprep.subr.bf16.mxu0 0
      %1154 = vmatpush1.bf16.msra.mxu0 0
      %1155 = vmatprep.subr.bf16.mxu0 0
      %1156 = vmatpush1.bf16.msra.mxu0 0
      %1157 = vmatprep.subr.bf16.mxu0 0
      %1158 = vmatpush1.bf16.msra.mxu0 0
      %1159 = vmatprep.mubr.bf16.mxu0 0
      %1160 = vmatmul.mubr.bf16.gmra.mrb[0].mxu0 %v1122
      %v1161 = vpop.f32.mrb[0].mxu0
      %v1162 = vadd.f32 %v1109, %v1161
      %v1163 = vpop.f32.mrb[0].mxu0
      %v1164 = vpop.f32.mrb[0].mxu0
      %v1165 = vpop.f32.mrb[0].mxu0
      %1166 = vdwg.mxu0
      %v1167 = vmax.f32 %v1162, 0.0
      %v1168 = vpack.c.bf16 %v1167, %v1167
      %1169 = vst.msk [vmem:[%s170 + $0x1c] sm:$0xf] %vm678, %v1168
      %p1170 = scmp.lt.s32.totalorder %s14, 1
      %s1171 = scalar_select %p1170, %s14, 1
      %s1172 = smul.addr %s1171, 8
      %s1173 = smul.addr %s1172, 4
      %s1174 = scalar_lea.vmem %s3, %s1173
      // Predicated region
      $region33: #{image_encoder_forward.3} parent=31 // pred_check
        %p1175 = pneg %p100
      $region34: #{image_encoder_forward.3} parent=31 // pred_check_branch
        %1177 = sbr.rel (%p1175) target = $region36
      $region35: #{image_encoder_forward.3} parent=31 // pred_region
        _
      $region36: #{image_encoder_forward.3} parent=31 // pred_fallthru
        _
    $region32: #{image_encoder_forward.3} parent=5 // pred_fallthru
      _
    %p1178 = scmp.le.s32.totalorder 2, %s9
    // Predicated region
    $region37: #{image_encoder_forward.3} parent=5 // pred_check
      %p1179 = pneg %p1178
    $region38: #{image_encoder_forward.3} parent=5 // pred_check_branch
      %1181 = sbr.rel (%p1179) target = $region40
    $region39: #{image_encoder_forward.3} parent=5 // pred_region
      %s1182 = ssub.s32 %s9, 2
      // Predicated region
      $region41: #{image_encoder_forward.3} parent=39 // pred_check
        %p1183 = pneg %p106
      $region42: #{image_encoder_forward.3} parent=39 // pred_check_branch
        %1185 = sbr.rel (%p1183) target = $region44
      $region43: #{image_encoder_forward.3} parent=39 // pred_region
        %p1186 = scmp.lt.s32.totalorder %s15, 1
        %s1187 = scalar_select %p1186, %s15, 1
        %s1188 = smul.addr %s1187, 8
        %s1189 = smul.addr %s1188, 4
        %s1190 = scalar_lea.vmem %s3, %s1189
      $region44: #{image_encoder_forward.3} parent=39 // pred_fallthru
        _
    $region40: #{image_encoder_forward.3} parent=5 // pred_fallthru
      _
  $region6: #{image_encoder_forward.3} parent=0 // loop_footer
    %s13 = sadd.s32 1, %s9
  $region7: #{image_encoder_forward.3} parent=0 // loop_footer_branch
    %8 = sbr.rel target = $region3
  $region8: #{image_encoder_forward.3} parent=0 // loop_exit
    _

// kernel: image_encoder_forward.4
$region0: #{image_encoder_forward.4}
  #allocation0 [shape = 'u32[]', space=smem, size = 0x4, offset = 0x4, fixed_abs, tag = 'smem constant byte address 0x4 - core index']
  #allocation1 [shape = 'u32[144,128]{1,0:T(1,128)}', space=vmem, size = 0x12000, scoped, tag = 'internal scratch']
  %s0 = inlined_call_operand.vmem [shape: bf16[2,5,5,256], index: 0, kind: input, shape index: {}]
  %s1 = inlined_call_operand.vmem [shape: bf16[576,128], index: 1, kind: input, shape index: {}]
  %s2 = inlined_call_operand.vmem [shape: f32[1,128], index: 2, kind: input, shape index: {}]
  %s3 = inlined_call_operand.vmem [shape: bf16[2,16,128], index: 3, kind: output, shape index: {}]
  %s4 = sld [smem:[#allocation0]]
  $region45: #{image_encoder_forward.4} parent=0
    _
  %s6 = ssub.s32 1, %s4
  %s7 = scalar_select 0, %s6, %s4
  loop: start=0, step=1, limit=4
  $region2: #{image_encoder_forward.4} parent=0 // loop_pre_header
    _
  $region3: #{image_encoder_forward.4} parent=0 // loop_header
    %s9 = sphi 0, %s13
    %p10 = scmp.ge.s32.totalorder %s9, 4
    %s19 = sphi 0, %s21
    %s22 = sphi 0, %s19
    %s23 = sphi 0, %s22
    %s39 = sphi 0, %s23
    %s43 = sphi 0, %s43
    %s45 = sphi 0, %s43
    %s46 = sphi 0, %s45
    %s60 = sphi 0, %s46
    %s64 = sphi 0, %s64
    %s66 = sphi 0, %s64
    %s67 = sphi 0, %s66
    %s81 = sphi 0, %s67
    %s87 = sphi 0, %s89
    %s90 = sphi 0, %s87
    %s91 = sphi 0, %s90
    %s107 = sphi 0, %s91
  $region4: #{image_encoder_forward.4} parent=0 // loop_header_branch
    %12 = sbr.rel (%p10) target = $region8
  $region5: #{image_encoder_forward.4} parent=0 // loop_body
    %s14 = ssub.s32 %s9, 1
    %s15 = ssub.s32 %s9, 2
    %s16 = sadd.s32 %s9, 1
    %s17 = ssub.s32 %s9, %s16
    %p18 = scmp.eq.s32.totalorder %s17, 0
    %s20 = sadd.s32 %s19, 1
    %s21 = scalar_select %p18, %s19, %s20
    %p24 = pneg %p18
    %p25 = scmp.eq.s32.totalorder %s9, 1
    %p26 = por %p24, %p25
    %p27 = scmp.ne.s32.totalorder %s19, %s22
    %p28 = scmp.eq.s32.totalorder %s9, 0
    %p29 = por %p27, %p28
    %p30 = scmp.ne.s32.totalorder %s19, %s22
    %p31 = scmp.eq.s32.totalorder %s14, 1
    %p32 = por %p30, %p31
    %p33 = scmp.ne.s32.totalorder %s22, %s23
    %p34 = scmp.eq.s32.totalorder %s14, 0
    %p35 = por %p33, %p34
    %p36 = scmp.ne.s32.totalorder %s22, %s23
    %p37 = scmp.eq.s32.totalorder %s15, 1
    %p38 = por %p36, %p37
    %p40 = scmp.ne.s32.totalorder %s23, %s39
    %p41 = scmp.eq.s32.totalorder %s15, 0
    %p42 = por %p40, %p41
    %s44 = sadd.s32 %s43, 1
    %p47 = scmp.eq.s32.totalorder %s9, 1
    %p48 = scmp.ne.s32.totalorder %s43, %s45
    %p49 = scmp.eq.s32.totalorder %s9, 0
    %p50 = por %p48, %p49
    %p51 = scmp.ne.s32.totalorder %s43, %s45
    %p52 = scmp.eq.s32.totalorder %s14, 1
    %p53 = por %p51, %p52
    %p54 = scmp.ne.s32.totalorder %s45, %s46
    %p55 = scmp.eq.s32.totalorder %s14, 0
    %p56 = por %p54, %p55
    %p57 = scmp.ne.s32.totalorder %s45, %s46
    %p58 = scmp.eq.s32.totalorder %s15, 1
    %p59 = por %p57, %p58
    %p61 = scmp.ne.s32.totalorder %s46, %s60
    %p62 = scmp.eq.s32.totalorder %s15, 0
    %p63 = por %p61, %p62
    %s65 = sadd.s32 %s64, 1
    %p68 = scmp.eq.s32.totalorder %s9, 1
    %p69 = scmp.ne.s32.totalorder %s64, %s66
    %p70 = scmp.eq.s32.totalorder %s9, 0
    %p71 = por %p69, %p70
    %p72 = scmp.ne.s32.totalorder %s64, %s66
    %p73 = scmp.eq.s32.totalorder %s14, 1
    %p74 = por %p72, %p73
    %p75 = scmp.ne.s32.totalorder %s66, %s67
    %p76 = scmp.eq.s32.totalorder %s14, 0
    %p77 = por %p75, %p76
    %p78 = scmp.ne.s32.totalorder %s66, %s67
    %p79 = scmp.eq.s32.totalorder %s15, 1
    %p80 = por %p78, %p79
    %p82 = scmp.ne.s32.totalorder %s67, %s81
    %p83 = scmp.eq.s32.totalorder %s15, 0
    %p84 = por %p82, %p83
    %s85 = ssub.s32 %s9, %s16
    %p86 = scmp.eq.s32.totalorder %s85, 0
    %s88 = sadd.s32 %s87, 1
    %s89 = scalar_select %p86, %s87, %s88
    %p92 = pneg %p86
    %p93 = scmp.eq.s32.totalorder %s9, 1
    %p94 = por %p92, %p93
    %p95 = scmp.ne.s32.totalorder %s87, %s90
    %p96 = scmp.eq.s32.totalorder %s9, 0
    %p97 = por %p95, %p96
    %p98 = scmp.ne.s32.totalorder %s87, %s90
    %p99 = scmp.eq.s32.totalorder %s14, 1
    %p100 = por %p98, %p99
    %p101 = scmp.ne.s32.totalorder %s90, %s91
    %p102 = scmp.eq.s32.totalorder %s14, 0
    %p103 = por %p101, %p102
    %p104 = scmp.ne.s32.totalorder %s90, %s91
    %p105 = scmp.eq.s32.totalorder %s15, 1
    %p106 = por %p104, %p105
    %p108 = scmp.ne.s32.totalorder %s91, %s107
    %p109 = scmp.eq.s32.totalorder %s15, 0
    %p110 = por %p108, %p109
    %p111 = scmp.le.s32.totalorder 1, %s9
    %p112 = scmp.lt.s32.totalorder %s9, 3
    %p113 = pnand %p111, %p112
    %p114 = pneg %p113
    // Predicated region
    $region9: #{image_encoder_forward.4} parent=5 // pred_check
      _
    $region10: #{image_encoder_forward.4} parent=5 // pred_check_branch
      %116 = sbr.rel (%p113) target = $region12
    $region11: #{image_encoder_forward.4} parent=5 // pred_region
      %s117 = ssub.s32 %s9, 1
      // Predicated region
      $region13: #{image_encoder_forward.4} parent=11 // pred_check
        %p118 = pneg %p56
      $region14: #{image_encoder_forward.4} parent=11 // pred_check_branch
        %120 = sbr.rel (%p118) target = $region16
      $region15: #{image_encoder_forward.4} parent=11 // pred_region
        _
      $region16: #{image_encoder_forward.4} parent=11 // pred_fallthru
        _
      // Predicated region
      $region17: #{image_encoder_forward.4} parent=11 // pred_check
        %p121 = pneg %p77
      $region18: #{image_encoder_forward.4} parent=11 // pred_check_branch
        %123 = sbr.rel (%p121) target = $region20
      $region19: #{image_encoder_forward.4} parent=11 // pred_region
        _
      $region20: #{image_encoder_forward.4} parent=11 // pred_fallthru
        _
    $region12: #{image_encoder_forward.4} parent=5 // pred_fallthru
      _
    %p124 = scmp.lt.s32.totalorder %s9, 2
    // Predicated region
    $region21: #{image_encoder_forward.4} parent=5 // pred_check
      %p125 = pneg %p124
    $region22: #{image_encoder_forward.4} parent=5 // pred_check_branch
      %127 = sbr.rel (%p125) target = $region24
    $region23: #{image_encoder_forward.4} parent=5 // pred_region
      // Predicated region
      $region25: #{image_encoder_forward.4} parent=23 // pred_check
        %p128 = pneg %p29
      $region26: #{image_encoder_forward.4} parent=23 // pred_check_branch
        %130 = sbr.rel (%p128) target = $region28
      $region27: #{image_encoder_forward.4} parent=23 // pred_region
        %p131 = scmp.lt.s32.totalorder %s9, 1
        %s132 = scalar_select %p131, %s9, 1
        %s133 = smul.addr %s132, 10
        %s134 = smul.addr %s133, 4
        %s135 = scalar_lea.vmem %s0, %s134
      $region28: #{image_encoder_forward.4} parent=23 // pred_fallthru
        _
    $region24: #{image_encoder_forward.4} parent=5 // pred_fallthru
      _
    %p136 = scmp.le.s32.totalorder 1, %s9
    %p137 = scmp.lt.s32.totalorder %s9, 3
    %p138 = pnand %p136, %p137
    %p139 = pneg %p138
    // Predicated region
    $region29: #{image_encoder_forward.4} parent=5 // pred_check
      _
    $region30: #{image_encoder_forward.4} parent=5 // pred_check_branch
      %141 = sbr.rel (%p138) target = $region32
    $region31: #{image_encoder_forward.4} parent=5 // pred_region
      %s142 = ssub.s32 %s9, 1
      %p143 = scmp.lt.s32.totalorder %s14, 1
      %s144 = scalar_select %p143, %s14, 1
      %s145 = smul.addr %s144, 10
      %s146 = smul.addr %s145, 4
      %s147 = scalar_lea.vmem %s0, %s146
      %p148 = pneg %p35
      %p149 = pneg %p32
      %p150 = pneg %p56
      %p151 = pneg %p53
      %p152 = pneg %p77
      %p153 = pneg %p74
      %p154 = pneg %p103
      %p155 = pneg %p100
      %p156 = scmp.lt.s32.totalorder %s14, 1
      %s157 = scalar_select %p156, %s14, 1
      %s158 = smul.addr %s157, 2
      %s159 = smul.addr %s158, 4
      %s160 = scalar_lea.vmem %s3, %s159
      %p161 = scmp.lt.s32.totalorder %s14, 1
      %s162 = scalar_select %p161, %s14, 1
      %s163 = smul.addr %s162, 10
      %s164 = smul.addr %s163, 4
      %s165 = scalar_lea.vmem %s0, %s164
      %p166 = scmp.lt.s32.totalorder %s14, 1
      %s167 = scalar_select %p166, %s14, 1
      %s168 = smul.addr %s167, 2
      %s169 = smul.addr %s168, 4
      %s170 = scalar_lea.vmem %s3, %s169
      %v172 = vld [vmem:[%s165] sm:$0x3]
      %v173 = vld [vmem:[%s165 + $0x8] sm:$0x3]
      %v174 = vld [vmem:[%s165 + $0x10] sm:$0x3]
      %v175 = vld [vmem:[%s165 + $0x18] sm:$0x3]
      %v176 = vld [vmem:[%s165] sm:$0x7]
      %v177 = vld [vmem:[%s165 + $0x8] sm:$0x7]
      %v178 = vld [vmem:[%s165 + $0x10] sm:$0x7]
      %v179 = vld [vmem:[%s165 + $0x18] sm:$0x7]
      %v180 = vld [vmem:[%s165 + $0x4] sm:$0x3]
      %v181 = vld [vmem:[%s165 + $0xc] sm:$0x3]
      %v182 = vld [vmem:[%s165 + $0x14] sm:$0x3]
      %v183 = vld [vmem:[%s165 + $0x1c] sm:$0x3]
      %v184 = vld [vmem:[%s165 + $0x4] sm:$0x7]
      %v185 = vld [vmem:[%s165 + $0xc] sm:$0x7]
      %v186 = vld [vmem:[%s165 + $0x14] sm:$0x7]
      %v187 = vld [vmem:[%s165 + $0x1c] sm:$0x7]
      %s188 = scalar_lea.vmem %s165, 8
      %v189 = vld [vmem:[%s188] sm:$0x3]
      %v190 = vld [vmem:[%s188 + $0x8] sm:$0x3]
      %v191 = vld [vmem:[%s188 + $0x10] sm:$0x3]
      %v192 = vld [vmem:[%s188 + $0x18] sm:$0x3]
      %v193 = vld [vmem:[%s188] sm:$0x7]
      %v194 = vld [vmem:[%s188 + $0x8] sm:$0x7]
      %v195 = vld [vmem:[%s188 + $0x10] sm:$0x7]
      %v196 = vld [vmem:[%s188 + $0x18] sm:$0x7]
      %v201 = vunpack.c.l.b16 %v176
      %v202 = vunpack.c.l.b16 %v177
      %v203 = vunpack.c.l.b16 %v178
      %v204 = vunpack.c.l.b16 %v179
      %v205 = vpack.c.b16 %v201, %v201
      %v206 = vpack.c.b16 %v202, %v202
      %v207 = vpack.c.b16 %v203, %v203
      %v208 = vpack.c.b16 %v204, %v204
      %v210 = vshrl.u32 %v205, 16
      %v212 = vshll.u32 %v205, 16
      %v214 = vrot.slane %v212, 1
      %v215 = vor.u32 %v210, %v214
      %v217 = vshrl.u32 %v206, 16
      %v219 = vshll.u32 %v206, 16
      %v221 = vrot.slane %v219, 1
      %v222 = vor.u32 %v217, %v221
      %v224 = vshrl.u32 %v207, 16
      %v226 = vshll.u32 %v207, 16
      %v228 = vrot.slane %v226, 1
      %v229 = vor.u32 %v224, %v228
      %v231 = vshrl.u32 %v208, 16
      %v233 = vshll.u32 %v208, 16
      %v235 = vrot.slane %v233, 1
      %v236 = vor.u32 %v231, %v235
      %v241 = vunpack.c.l.b16 %v180
      %v242 = vunpack.c.l.b16 %v181
      %v243 = vunpack.c.l.b16 %v182
      %v244 = vunpack.c.l.b16 %v183
      %v245 = vpack.c.b16 %v241, %v241
      %v246 = vpack.c.b16 %v242, %v242
      %v247 = vpack.c.b16 %v243, %v243
      %v248 = vpack.c.b16 %v244, %v244
      %249 = vrot.lane.b32.xlu0 %v245, 64
      %v250 = vpop.permute.xlu0 %249
      %251 = vrot.lane.b32.xlu0 %v246, 64
      %v252 = vpop.permute.xlu0 %251
      %253 = vrot.lane.b32.xlu0 %v247, 64
      %v254 = vpop.permute.xlu0 %253
      %255 = vrot.lane.b32.xlu0 %v248, 64
      %v256 = vpop.permute.xlu0 %255
      %v261 = vunpack.c.l.b16 %v184
      %v262 = vunpack.c.l.b16 %v185
      %v263 = vunpack.c.l.b16 %v186
      %v264 = vunpack.c.l.b16 %v187
      %v265 = vpack.c.b16 %v261, %v261
      %v266 = vpack.c.b16 %v262, %v262
      %v267 = vpack.c.b16 %v263, %v263
      %v268 = vpack.c.b16 %v264, %v264
      %v270 = vshrl.u32 %v265, 16
      %v272 = vshll.u32 %v265, 16
      %v274 = vrot.slane %v272, 1
      %v275 = vor.u32 %v270, %v274
      %v277 = vshrl.u32 %v266, 16
      %v279 = vshll.u32 %v266, 16
      %v281 = vrot.slane %v279, 1
      %v282 = vor.u32 %v277, %v281
      %v284 = vshrl.u32 %v267, 16
      %v286 = vshll.u32 %v267, 16
      %v288 = vrot.slane %v286, 1
      %v289 = vor.u32 %v284, %v288
      %v291 = vshrl.u32 %v268, 16
      %v293 = vshll.u32 %v268, 16
      %v295 = vrot.slane %v293, 1
      %v296 = vor.u32 %v291, %v295
      %297 = vrot.lane.b32.xlu0 %v275, 64
      %v298 = vpop.permute.xlu0 %297
      %299 = vrot.lane.b32.xlu0 %v282, 64
      %v300 = vpop.permute.xlu0 %299
      %301 = vrot.lane.b32.xlu0 %v289, 64
      %v302 = vpop.permute.xlu0 %301
      %303 = vrot.lane.b32.xlu0 %v296, 64
      %v304 = vpop.permute.xlu0 %303
      %v309 = vunpack.c.l.b16 %v193
      %v310 = vunpack.c.l.b16 %v194
      %v311 = vunpack.c.l.b16 %v195
      %v312 = vunpack.c.l.b16 %v196
      %v313 = vpack.c.b16 %v309, %v309
      %v314 = vpack.c.b16 %v310, %v310
      %v315 = vpack.c.b16 %v311, %v311
      %v316 = vpack.c.b16 %v312, %v312
      %v318 = vshrl.u32 %v313, 16
      %v320 = vshll.u32 %v313, 16
      %v322 = vrot.slane %v320, 1
      %v323 = vor.u32 %v318, %v322
      %v325 = vshrl.u32 %v314, 16
      %v327 = vshll.u32 %v314, 16
      %v329 = vrot.slane %v327, 1
      %v330 = vor.u32 %v325, %v329
      %v332 = vshrl.u32 %v315, 16
      %v334 = vshll.u32 %v315, 16
      %v336 = vrot.slane %v334, 1
      %v337 = vor.u32 %v332, %v336
      %v339 = vshrl.u32 %v316, 16
      %v341 = vshll.u32 %v316, 16
      %v343 = vrot.slane %v341, 1
      %v344 = vor.u32 %v339, %v343
      %vm345 = vcmask 523264
      %v356 = vsel %vm345, %v215, %v250
      %v360 = vsel %vm345, %v222, %v252
      %v364 = vsel %vm345, %v229, %v254
      %v368 = vsel %vm345, %v236, %v256
      %v371 = vsel %vm345, %v250, %v298
      %v374 = vsel %vm345, %v252, %v300
      %v377 = vsel %vm345, %v254, %v302
      %v380 = vsel %vm345, %v256, %v304
      %v390 = vld [vmem:[%s1] sm:$0xf]
      %v391 = vld [vmem:[%s1 + $0x4] sm:$0xf]
      %v392 = vld [vmem:[%s1 + $0x8] sm:$0xf]
      %v393 = vld [vmem:[%s1 + $0xc] sm:$0xf]
      %v394 = vld [vmem:[%s1 + $0x10] sm:$0xf]
      %v395 = vld [vmem:[%s1 + $0x14] sm:$0xf]
      %v396 = vld [vmem:[%s1 + $0x18] sm:$0xf]
      %v397 = vld [vmem:[%s1 + $0x1c] sm:$0xf]
      %v398 = vld [vmem:[%s1 + $0x20] sm:$0xf]
      %v399 = vld [vmem:[%s1 + $0x24] sm:$0xf]
      %v400 = vld [vmem:[%s1 + $0x28] sm:$0xf]
      %v401 = vld [vmem:[%s1 + $0x2c] sm:$0xf]
      %v402 = vld [vmem:[%s1 + $0x30] sm:$0xf]
      %v403 = vld [vmem:[%s1 + $0x34] sm:$0xf]
      %v404 = vld [vmem:[%s1 + $0x38] sm:$0xf]
      %v405 = vld [vmem:[%s1 + $0x3c] sm:$0xf]
      %v406 = vld [vmem:[%s1 + $0x40] sm:$0xf]
      %v407 = vld [vmem:[%s1 + $0x44] sm:$0xf]
      %v408 = vld [vmem:[%s1 + $0x48] sm:$0xf]
      %v409 = vld [vmem:[%s1 + $0x4c] sm:$0xf]
      %v410 = vld [vmem:[%s1 + $0x50] sm:$0xf]
      %v411 = vld [vmem:[%s1 + $0x54] sm:$0xf]
      %v412 = vld [vmem:[%s1 + $0x58] sm:$0xf]
      %v413 = vld [vmem:[%s1 + $0x5c] sm:$0xf]
      %v414 = vld [vmem:[%s1 + $0x60] sm:$0xf]
      %v415 = vld [vmem:[%s1 + $0x64] sm:$0xf]
      %v416 = vld [vmem:[%s1 + $0x68] sm:$0xf]
      %v417 = vld [vmem:[%s1 + $0x6c] sm:$0xf]
      %v418 = vld [vmem:[%s1 + $0x70] sm:$0xf]
      %v419 = vld [vmem:[%s1 + $0x74] sm:$0xf]
      %v420 = vld [vmem:[%s1 + $0x78] sm:$0xf]
      %v421 = vld [vmem:[%s1 + $0x7c] sm:$0xf]
      %v422 = vld [vmem:[%s1 + $0x80] sm:$0xf]
      %v423 = vld [vmem:[%s1 + $0x84] sm:$0xf]
      %v424 = vld [vmem:[%s1 + $0x88] sm:$0xf]
      %v425 = vld [vmem:[%s1 + $0x8c] sm:$0xf]
      %v426 = vld [vmem:[%s1 + $0x90] sm:$0xf]
      %v427 = vld [vmem:[%s1 + $0x94] sm:$0xf]
      %v428 = vld [vmem:[%s1 + $0x98] sm:$0xf]
      %v429 = vld [vmem:[%s1 + $0x9c] sm:$0xf]
      %v430 = vld [vmem:[%s1 + $0xa0] sm:$0xf]
      %v431 = vld [vmem:[%s1 + $0xa4] sm:$0xf]
      %v432 = vld [vmem:[%s1 + $0xa8] sm:$0xf]
      %v433 = vld [vmem:[%s1 + $0xac] sm:$0xf]
      %v434 = vld [vmem:[%s1 + $0xb0] sm:$0xf]
      %v435 = vld [vmem:[%s1 + $0xb4] sm:$0xf]
      %v436 = vld [vmem:[%s1 + $0xb8] sm:$0xf]
      %v437 = vld [vmem:[%s1 + $0xbc] sm:$0xf]
      %v438 = vld [vmem:[%s1 + $0xc0] sm:$0xf]
      %v439 = vld [vmem:[%s1 + $0xc4] sm:$0xf]
      %v440 = vld [vmem:[%s1 + $0xc8] sm:$0xf]
      %v441 = vld [vmem:[%s1 + $0xcc] sm:$0xf]
      %v442 = vld [vmem:[%s1 + $0xd0] sm:$0xf]
      %v443 = vld [vmem:[%s1 + $0xd4] sm:$0xf]
      %v444 = vld [vmem:[%s1 + $0xd8] sm:$0xf]
      %v445 = vld [vmem:[%s1 + $0xdc] sm:$0xf]
      %v446 = vld [vmem:[%s1 + $0xe0] sm:$0xf]
      %v447 = vld [vmem:[%s1 + $0xe4] sm:$0xf]
      %v448 = vld [vmem:[%s1 + $0xe8] sm:$0xf]
      %v449 = vld [vmem:[%s1 + $0xec] sm:$0xf]
      %v450 = vld [vmem:[%s1 + $0xf0] sm:$0xf]
      %v451 = vld [vmem:[%s1 + $0xf4] sm:$0xf]
      %v452 = vld [vmem:[%s1 + $0xf8] sm:$0xf]
      %v453 = vld [vmem:[%s1 + $0xfc] sm:$0xf]
      %v454 = vld [vmem:[%s1 + $0x100] sm:$0xf]
      %v455 = vld [vmem:[%s1 + $0x104] sm:$0xf]
      %v456 = vld [vmem:[%s1 + $0x108] sm:$0xf]
      %v457 = vld [vmem:[%s1 + $0x10c] sm:$0xf]
      %v458 = vld [vmem:[%s1 + $0x110] sm:$0xf]
      %v459 = vld [vmem:[%s1 + $0x114] sm:$0xf]
      %v460 = vld [vmem:[%s1 + $0x118] sm:$0xf]
      %v461 = vld [vmem:[%s1 + $0x11c] sm:$0xf]
      %v462 = vld [vmem:[%s2] sm:$0x1]
      %v464 = vlaneseq
      %v465 = vshrl.u32 %v464, 7
      %v466 = vsub.s32 0, %v465
      %v467 = vrot.slane %v462, %v466
      %v541 = vunpack.c.l.b16 %v390
      %v542 = vunpack.c.l.b16 %v391
      %v543 = vunpack.c.l.b16 %v392
      %v544 = vunpack.c.l.b16 %v393
      %v545 = vunpack.c.l.b16 %v394
      %v546 = vunpack.c.l.b16 %v395
      %v547 = vunpack.c.l.b16 %v396
      %v548 = vunpack.c.l.b16 %v397
      %v549 = vunpack.c.l.b16 %v398
      %v550 = vunpack.c.l.b16 %v399
      %v551 = vunpack.c.l.b16 %v400
      %v552 = vunpack.c.l.b16 %v401
      %v553 = vunpack.c.l.b16 %v402
      %v554 = vunpack.c.l.b16 %v403
      %v555 = vunpack.c.l.b16 %v404
      %v556 = vunpack.c.l.b16 %v405
      %v557 = vunpack.c.l.b16 %v406
      %v558 = vunpack.c.l.b16 %v407
      %v559 = vunpack.c.l.b16 %v408
      %v560 = vunpack.c.l.b16 %v409
      %v561 = vunpack.c.l.b16 %v410
      %v562 = vunpack.c.l.b16 %v411
      %v563 = vunpack.c.l.b16 %v412
      %v564 = vunpack.c.l.b16 %v413
      %v565 = vunpack.c.l.b16 %v414
      %v566 = vunpack.c.l.b16 %v415
      %v567 = vunpack.c.l.b16 %v416
      %v568 = vunpack.c.l.b16 %v417
      %v569 = vunpack.c.l.b16 %v418
      %v570 = vunpack.c.l.b16 %v419
      %v571 = vunpack.c.l.b16 %v420
      %v572 = vunpack.c.l.b16 %v421
      %v573 = vunpack.c.l.b16 %v422
      %v574 = vunpack.c.l.b16 %v423
      %v575 = vunpack.c.l.b16 %v424
      %v576 = vunpack.c.l.b16 %v425
      %v577 = vunpack.c.l.b16 %v426
      %v578 = vunpack.c.l.b16 %v427
      %v579 = vunpack.c.l.b16 %v428
      %v580 = vunpack.c.l.b16 %v429
      %v581 = vunpack.c.l.b16 %v430
      %v582 = vunpack.c.l.b16 %v431
      %v583 = vunpack.c.l.b16 %v432
      %v584 = vunpack.c.l.b16 %v433
      %v585 = vunpack.c.l.b16 %v434
      %v586 = vunpack.c.l.b16 %v435
      %v587 = vunpack.c.l.b16 %v436
      %v588 = vunpack.c.l.b16 %v437
      %v589 = vunpack.c.l.b16 %v438
      %v590 = vunpack.c.l.b16 %v439
      %v591 = vunpack.c.l.b16 %v440
      %v592 = vunpack.c.l.b16 %v441
      %v593 = vunpack.c.l.b16 %v442
      %v594 = vunpack.c.l.b16 %v443
      %v595 = vunpack.c.l.b16 %v444
      %v596 = vunpack.c.l.b16 %v445
      %v597 = vunpack.c.l.b16 %v446
      %v598 = vunpack.c.l.b16 %v447
      %v599 = vunpack.c.l.b16 %v448
      %v600 = vunpack.c.l.b16 %v449
      %v601 = vunpack.c.l.b16 %v450
      %v602 = vunpack.c.l.b16 %v451
      %v603 = vunpack.c.l.b16 %v452
      %v604 = vunpack.c.l.b16 %v453
      %v605 = vunpack.c.l.b16 %v454
      %v606 = vunpack.c.l.b16 %v455
      %v607 = vunpack.c.l.b16 %v456
      %v608 = vunpack.c.l.b16 %v457
      %v609 = vunpack.c.l.b16 %v458
      %v610 = vunpack.c.l.b16 %v459
      %v611 = vunpack.c.l.b16 %v460
      %v612 = vunpack.c.l.b16 %v461
      %v613 = vpack.c.b16 %v542, %v541
      %v614 = vpack.c.b16 %v544, %v543
      %v615 = vpack.c.b16 %v546, %v545
      %v616 = vpack.c.b16 %v548, %v547
      %v617 = vpack.c.b16 %v550, %v549
      %v618 = vpack.c.b16 %v552, %v551
      %v619 = vpack.c.b16 %v554, %v553
      %v620 = vpack.c.b16 %v556, %v555
      %v621 = vpack.c.b16 %v558, %v557
      %v622 = vpack.c.b16 %v560, %v559
      %v623 = vpack.c.b16 %v562, %v561
      %v624 = vpack.c.b16 %v564, %v563
      %v625 = vpack.c.b16 %v566, %v565
      %v626 = vpack.c.b16 %v568, %v567
      %v627 = vpack.c.b16 %v570, %v569
      %v628 = vpack.c.b16 %v572, %v571
      %v629 = vpack.c.b16 %v574, %v573
      %v630 = vpack.c.b16 %v576, %v575
      %v631 = vpack.c.b16 %v578, %v577
      %v632 = vpack.c.b16 %v580, %v579
      %v633 = vpack.c.b16 %v582, %v581
      %v634 = vpack.c.b16 %v584, %v583
      %v635 = vpack.c.b16 %v586, %v585
      %v636 = vpack.c.b16 %v588, %v587
      %v637 = vpack.c.b16 %v590, %v589
      %v638 = vpack.c.b16 %v592, %v591
      %v639 = vpack.c.b16 %v594, %v593
      %v640 = vpack.c.b16 %v596, %v595
      %v641 = vpack.c.b16 %v598, %v597
      %v642 = vpack.c.b16 %v600, %v599
      %v643 = vpack.c.b16 %v602, %v601
      %v644 = vpack.c.b16 %v604, %v603
      %v645 = vpack.c.b16 %v606, %v605
      %v646 = vpack.c.b16 %v608, %v607
      %v647 = vpack.c.b16 %v610, %v609
      %v648 = vpack.c.b16 %v612, %v611
      %v686 = vsel %vm345, %v323, 0
      %688 = vmatprep.subr.bf16.mxu0 0
      %689 = vmatpush1.bf16.msra.mxu0 %v613
      %690 = vmatprep.subr.bf16.mxu0 0
      %691 = vmatpush1.bf16.msra.mxu0 %v614
      %692 = vmatprep.subr.bf16.mxu0 0
      %693 = vmatpush1.bf16.msra.mxu0 %v615
      %694 = vmatprep.subr.bf16.mxu0 0
      %695 = vmatpush1.bf16.msra.mxu0 %v616
      %696 = vmatprep.subr.bf16.mxu0 0
      %697 = vmatpush1.bf16.msra.mxu0 %v617
      %698 = vmatprep.subr.bf16.mxu0 0
      %699 = vmatpush1.bf16.msra.mxu0 %v618
      %700 = vmatprep.subr.bf16.mxu0 0
      %701 = vmatpush1.bf16.msra.mxu0 %v619
      %702 = vmatprep.subr.bf16.mxu0 0
      %703 = vmatpush1.bf16.msra.mxu0 %v620
      %704 = vmatprep.subr.bf16.mxu0 0
      %705 = vmatpush1.bf16.msra.mxu0 %v621
      %706 = vmatprep.subr.bf16.mxu0 0
      %707 = vmatpush1.bf16.msra.mxu0 %v622
      %708 = vmatprep.subr.bf16.mxu0 0
      %709 = vmatpush1.bf16.msra.mxu0 %v623
      %710 = vmatprep.subr.bf16.mxu0 0
      %711 = vmatpush1.bf16.msra.mxu0 %v624
      %712 = vmatprep.subr.bf16.mxu0 0
      %713 = vmatpush1.bf16.msra.mxu0 %v625
      %714 = vmatprep.subr.bf16.mxu0 0
      %715 = vmatpush1.bf16.msra.mxu0 %v626
      %716 = vmatprep.subr.bf16.mxu0 0
      %717 = vmatpush1.bf16.msra.mxu0 %v627
      %718 = vmatprep.subr.bf16.mxu0 0
      %719 = vmatpush1.bf16.msra.mxu0 %v628
      %720 = vmatprep.mubr.bf16.mxu0 %v356
      %721 = vmatmul.mubr.bf16.gmra.mrb[0].mxu0 %v172
      %v722 = vpop.f32.mrb[0].mxu0
      %v723 = vadd.f32 %v467, %v722
      %v724 = vpop.f32.mrb[0].mxu0
      %v725 = vpop.f32.mrb[0].mxu0
      %v726 = vpop.f32.mrb[0].mxu0
      %727 = vdwg.mxu0
      %728 = vmatprep.subr.bf16.mxu0 0
      %729 = vmatpush1.bf16.msra.mxu0 %v629
      %730 = vmatprep.subr.bf16.mxu0 0
      %731 = vmatpush1.bf16.msra.mxu0 %v630
      %732 = vmatprep.subr.bf16.mxu0 0
      %733 = vmatpush1.bf16.msra.mxu0 %v631
      %734 = vmatprep.subr.bf16.mxu0 0
      %735 = vmatpush1.bf16.msra.mxu0 %v632
      %736 = vmatprep.subr.bf16.mxu0 0
      %737 = vmatpush1.bf16.msra.mxu0 %v633
      %738 = vmatprep.subr.bf16.mxu0 0
      %739 = vmatpush1.bf16.msra.mxu0 %v634
      %740 = vmatprep.subr.bf16.mxu0 0
      %741 = vmatpush1.bf16.msra.mxu0 %v635
      %742 = vmatprep.subr.bf16.mxu0 0
      %743 = vmatpush1.bf16.msra.mxu0 %v636
      %744 = vmatprep.subr.bf16.mxu0 0
      %745 = vmatpush1.bf16.msra.mxu0 %v637
      %746 = vmatprep.subr.bf16.mxu0 0
      %747 = vmatpush1.bf16.msra.mxu0 %v638
      %748 = vmatprep.subr.bf16.mxu0 0
      %749 = vmatpush1.bf16.msra.mxu0 %v639
      %750 = vmatprep.subr.bf16.mxu0 0
      %751 = vmatpush1.bf16.msra.mxu0 %v640
      %752 = vmatprep.subr.bf16.mxu0 0
      %753 = vmatpush1.bf16.msra.mxu0 %v641
      %754 = vmatprep.subr.bf16.mxu0 0
      %755 = vmatpush1.bf16.msra.mxu0 %v642
      %756 = vmatprep.subr.bf16.mxu0 0
      %757 = vmatpush1.bf16.msra.mxu0 %v643
      %758 = vmatprep.subr.bf16.mxu0 0
      %759 = vmatpush1.bf16.msra.mxu0 %v644
      %760 = vmatprep.mubr.bf16.mxu0 %v189
      %761 = vmatmul.mubr.bf16.gmra.mrb[0].mxu0 %v371
      %v762 = vpop.f32.mrb[0].mxu0
      %v763 = vadd.f32 %v723, %v762
      %v764 = vpop.f32.mrb[0].mxu0
      %v765 = vpop.f32.mrb[0].mxu0
      %v766 = vpop.f32.mrb[0].mxu0
      %767 = vdwg.mxu0
      %768 = vmatprep.subr.bf16.mxu0 0
      %769 = vmatpush1.bf16.msra.mxu0 %v645
      %770 = vmatprep.subr.bf16.mxu0 0
      %771 = vmatpush1.bf16.msra.mxu0 %v646
      %772 = vmatprep.subr.bf16.mxu0 0
      %773 = vmatpush1.bf16.msra.mxu0 %v647
      %774 = vmatprep.subr.bf16.mxu0 0
      %775 = vmatpush1.bf16.msra.mxu0 %v648
      %776 = vmatprep.subr.bf16.mxu0 0
      %777 = vmatpush1.bf16.msra.mxu0 0
      %778 = vmatprep.subr.bf16.mxu0 0
      %779 = vmatpush1.bf16.msra.mxu0 0
      %780 = vmatprep.subr.bf16.mxu0 0
      %781 = vmatpush1.bf16.msra.mxu0 0
      %782 = vmatprep.subr.bf16.mxu0 0
      %783 = vmatpush1.bf16.msra.mxu0 0
      %784 = vmatprep.subr.bf16.mxu0 0
      %785 = vmatpush1.bf16.msra.mxu0 0
      %786 = vmatprep.subr.bf16.mxu0 0
      %787 = vmatpush1.bf16.msra.mxu0 0
      %788 = vmatprep.subr.bf16.mxu0 0
      %789 = vmatpush1.bf16.msra.mxu0 0
      %790 = vmatprep.subr.bf16.mxu0 0
      %791 = vmatpush1.bf16.msra.mxu0 0
      %792 = vmatprep.subr.bf16.mxu0 0
      %793 = vmatpush1.bf16.msra.mxu0 0
      %794 = vmatprep.subr.bf16.mxu0 0
      %795 = vmatpush1.bf16.msra.mxu0 0
      %796 = vmatprep.subr.bf16.mxu0 0
      %797 = vmatpush1.bf16.msra.mxu0 0
      %798 = vmatprep.subr.bf16.mxu0 0
      %799 = vmatpush1.bf16.msra.mxu0 0
      %800 = vmatprep.mubr.bf16.mxu0 0
      %801 = vmatmul.mubr.bf16.gmra.mrb[0].mxu0 %v686
      %v802 = vpop.f32.mrb[0].mxu0
      %v803 = vadd.f32 %v763, %v802
      %v804 = vpop.f32.mrb[0].mxu0
      %v805 = vpop.f32.mrb[0].mxu0
      %v806 = vpop.f32.mrb[0].mxu0
      %807 = vdwg.mxu0
      %v808 = vmax.f32 %v803, 0.0
      %v809 = vpack.c.bf16 %v808, %v808
      %810 = vst [vmem:[%s170] sm:$0x3] %v809
      %v811 = vld [vmem:[%s1] sm:$0xf]
      %v812 = vld [vmem:[%s1 + $0x4] sm:$0xf]
      %v813 = vld [vmem:[%s1 + $0x8] sm:$0xf]
      %v814 = vld [vmem:[%s1 + $0xc] sm:$0xf]
      %v815 = vld [vmem:[%s1 + $0x10] sm:$0xf]
      %v816 = vld [vmem:[%s1 + $0x14] sm:$0xf]
      %v817 = vld [vmem:[%s1 + $0x18] sm:$0xf]
      %v818 = vld [vmem:[%s1 + $0x1c] sm:$0xf]
      %v819 = vld [vmem:[%s1 + $0x20] sm:$0xf]
      %v820 = vld [vmem:[%s1 + $0x24] sm:$0xf]
      %v821 = vld [vmem:[%s1 + $0x28] sm:$0xf]
      %v822 = vld [vmem:[%s1 + $0x2c] sm:$0xf]
      %v823 = vld [vmem:[%s1 + $0x30] sm:$0xf]
      %v824 = vld [vmem:[%s1 + $0x34] sm:$0xf]
      %v825 = vld [vmem:[%s1 + $0x38] sm:$0xf]
      %v826 = vld [vmem:[%s1 + $0x3c] sm:$0xf]
      %v827 = vld [vmem:[%s1 + $0x40] sm:$0xf]
      %v828 = vld [vmem:[%s1 + $0x44] sm:$0xf]
      %v829 = vld [vmem:[%s1 + $0x48] sm:$0xf]
      %v830 = vld [vmem:[%s1 + $0x4c] sm:$0xf]
      %v831 = vld [vmem:[%s1 + $0x50] sm:$0xf]
      %v832 = vld [vmem:[%s1 + $0x54] sm:$0xf]
      %v833 = vld [vmem:[%s1 + $0x58] sm:$0xf]
      %v834 = vld [vmem:[%s1 + $0x5c] sm:$0xf]
      %v835 = vld [vmem:[%s1 + $0x60] sm:$0xf]
      %v836 = vld [vmem:[%s1 + $0x64] sm:$0xf]
      %v837 = vld [vmem:[%s1 + $0x68] sm:$0xf]
      %v838 = vld [vmem:[%s1 + $0x6c] sm:$0xf]
      %v839 = vld [vmem:[%s1 + $0x70] sm:$0xf]
      %v840 = vld [vmem:[%s1 + $0x74] sm:$0xf]
      %v841 = vld [vmem:[%s1 + $0x78] sm:$0xf]
      %v842 = vld [vmem:[%s1 + $0x7c] sm:$0xf]
      %v843 = vld [vmem:[%s1 + $0x80] sm:$0xf]
      %v844 = vld [vmem:[%s1 + $0x84] sm:$0xf]
      %v845 = vld [vmem:[%s1 + $0x88] sm:$0xf]
      %v846 = vld [vmem:[%s1 + $0x8c] sm:$0xf]
      %v847 = vld [vmem:[%s1 + $0x90] sm:$0xf]
      %v848 = vld [vmem:[%s1 + $0x94] sm:$0xf]
      %v849 = vld [vmem:[%s1 + $0x98] sm:$0xf]
      %v850 = vld [vmem:[%s1 + $0x9c] sm:$0xf]
      %v851 = vld [vmem:[%s1 + $0xa0] sm:$0xf]
      %v852 = vld [vmem:[%s1 + $0xa4] sm:$0xf]
      %v853 = vld [vmem:[%s1 + $0xa8] sm:$0xf]
      %v854 = vld [vmem:[%s1 + $0xac] sm:$0xf]
      %v855 = vld [vmem:[%s1 + $0xb0] sm:$0xf]
      %v856 = vld [vmem:[%s1 + $0xb4] sm:$0xf]
      %v857 = vld [vmem:[%s1 + $0xb8] sm:$0xf]
      %v858 = vld [vmem:[%s1 + $0xbc] sm:$0xf]
      %v859 = vld [vmem:[%s1 + $0xc0] sm:$0xf]
      %v860 = vld [vmem:[%s1 + $0xc4] sm:$0xf]
      %v861 = vld [vmem:[%s1 + $0xc8] sm:$0xf]
      %v862 = vld [vmem:[%s1 + $0xcc] sm:$0xf]
      %v863 = vld [vmem:[%s1 + $0xd0] sm:$0xf]
      %v864 = vld [vmem:[%s1 + $0xd4] sm:$0xf]
      %v865 = vld [vmem:[%s1 + $0xd8] sm:$0xf]
      %v866 = vld [vmem:[%s1 + $0xdc] sm:$0xf]
      %v867 = vld [vmem:[%s1 + $0xe0] sm:$0xf]
      %v868 = vld [vmem:[%s1 + $0xe4] sm:$0xf]
      %v869 = vld [vmem:[%s1 + $0xe8] sm:$0xf]
      %v870 = vld [vmem:[%s1 + $0xec] sm:$0xf]
      %v871 = vld [vmem:[%s1 + $0xf0] sm:$0xf]
      %v872 = vld [vmem:[%s1 + $0xf4] sm:$0xf]
      %v873 = vld [vmem:[%s1 + $0xf8] sm:$0xf]
      %v874 = vld [vmem:[%s1 + $0xfc] sm:$0xf]
      %v875 = vld [vmem:[%s1 + $0x100] sm:$0xf]
      %v876 = vld [vmem:[%s1 + $0x104] sm:$0xf]
      %v877 = vld [vmem:[%s1 + $0x108] sm:$0xf]
      %v878 = vld [vmem:[%s1 + $0x10c] sm:$0xf]
      %v879 = vld [vmem:[%s1 + $0x110] sm:$0xf]
      %v880 = vld [vmem:[%s1 + $0x114] sm:$0xf]
      %v881 = vld [vmem:[%s1 + $0x118] sm:$0xf]
      %v882 = vld [vmem:[%s1 + $0x11c] sm:$0xf]
      %v883 = vld [vmem:[%s2] sm:$0x1]
      %v885 = vlaneseq
      %v886 = vshrl.u32 %v885, 7
      %v887 = vsub.s32 0, %v886
      %v888 = vrot.slane %v883, %v887
      %v962 = vunpack.c.l.b16 %v811
      %v963 = vunpack.c.l.b16 %v812
      %v964 = vunpack.c.l.b16 %v813
      %v965 = vunpack.c.l.b16 %v814
      %v966 = vunpack.c.l.b16 %v815
      %v967 = vunpack.c.l.b16 %v816
      %v968 = vunpack.c.l.b16 %v817
      %v969 = vunpack.c.l.b16 %v818
      %v970 = vunpack.c.l.b16 %v819
      %v971 = vunpack.c.l.b16 %v820
      %v972 = vunpack.c.l.b16 %v821
      %v973 = vunpack.c.l.b16 %v822
      %v974 = vunpack.c.l.b16 %v823
      %v975 = vunpack.c.l.b16 %v824
      %v976 = vunpack.c.l.b16 %v825
      %v977 = vunpack.c.l.b16 %v826
      %v978 = vunpack.c.l.b16 %v827
      %v979 = vunpack.c.l.b16 %v828
      %v980 = vunpack.c.l.b16 %v829
      %v981 = vunpack.c.l.b16 %v830
      %v982 = vunpack.c.l.b16 %v831
      %v983 = vunpack.c.l.b16 %v832
      %v984 = vunpack.c.l.b16 %v833
      %v985 = vunpack.c.l.b16 %v834
      %v986 = vunpack.c.l.b16 %v835
      %v987 = vunpack.c.l.b16 %v836
      %v988 = vunpack.c.l.b16 %v837
      %v989 = vunpack.c.l.b16 %v838
      %v990 = vunpack.c.l.b16 %v839
      %v991 = vunpack.c.l.b16 %v840
      %v992 = vunpack.c.l.b16 %v841
      %v993 = vunpack.c.l.b16 %v842
      %v994 = vunpack.c.l.b16 %v843
      %v995 = vunpack.c.l.b16 %v844
      %v996 = vunpack.c.l.b16 %v845
      %v997 = vunpack.c.l.b16 %v846
      %v998 = vunpack.c.l.b16 %v847
      %v999 = vunpack.c.l.b16 %v848
      %v1000 = vunpack.c.l.b16 %v849
      %v1001 = vunpack.c.l.b16 %v850
      %v1002 = vunpack.c.l.b16 %v851
      %v1003 = vunpack.c.l.b16 %v852
      %v1004 = vunpack.c.l.b16 %v853
      %v1005 = vunpack.c.l.b16 %v854
      %v1006 = vunpack.c.l.b16 %v855
      %v1007 = vunpack.c.l.b16 %v856
      %v1008 = vunpack.c.l.b16 %v857
      %v1009 = vunpack.c.l.b16 %v858
      %v1010 = vunpack.c.l.b16 %v859
      %v1011 = vunpack.c.l.b16 %v860
      %v1012 = vunpack.c.l.b16 %v861
      %v1013 = vunpack.c.l.b16 %v862
      %v1014 = vunpack.c.l.b16 %v863
      %v1015 = vunpack.c.l.b16 %v864
      %v1016 = vunpack.c.l.b16 %v865
      %v1017 = vunpack.c.l.b16 %v866
      %v1018 = vunpack.c.l.b16 %v867
      %v1019 = vunpack.c.l.b16 %v868
      %v1020 = vunpack.c.l.b16 %v869
      %v1021 = vunpack.c.l.b16 %v870
      %v1022 = vunpack.c.l.b16 %v871
      %v1023 = vunpack.c.l.b16 %v872
      %v1024 = vunpack.c.l.b16 %v873
      %v1025 = vunpack.c.l.b16 %v874
      %v1026 = vunpack.c.l.b16 %v875
      %v1027 = vunpack.c.l.b16 %v876
      %v1028 = vunpack.c.l.b16 %v877
      %v1029 = vunpack.c.l.b16 %v878
      %v1030 = vunpack.c.l.b16 %v879
      %v1031 = vunpack.c.l.b16 %v880
      %v1032 = vunpack.c.l.b16 %v881
      %v1033 = vunpack.c.l.b16 %v882
      %v1034 = vpack.c.b16 %v963, %v962
      %v1035 = vpack.c.b16 %v965, %v964
      %v1036 = vpack.c.b16 %v967, %v966
      %v1037 = vpack.c.b16 %v969, %v968
      %v1038 = vpack.c.b16 %v971, %v970
      %v1039 = vpack.c.b16 %v973, %v972
      %v1040 = vpack.c.b16 %v975, %v974
      %v1041 = vpack.c.b16 %v977, %v976
      %v1042 = vpack.c.b16 %v979, %v978
      %v1043 = vpack.c.b16 %v981, %v980
      %v1044 = vpack.c.b16 %v983, %v982
      %v1045 = vpack.c.b16 %v985, %v984
      %v1046 = vpack.c.b16 %v987, %v986
      %v1047 = vpack.c.b16 %v989, %v988
      %v1048 = vpack.c.b16 %v991, %v990
      %v1049 = vpack.c.b16 %v993, %v992
      %v1050 = vpack.c.b16 %v995, %v994
      %v1051 = vpack.c.b16 %v997, %v996
      %v1052 = vpack.c.b16 %v999, %v998
      %v1053 = vpack.c.b16 %v1001, %v1000
      %v1054 = vpack.c.b16 %v1003, %v1002
      %v1055 = vpack.c.b16 %v1005, %v1004
      %v1056 = vpack.c.b16 %v1007, %v1006
      %v1057 = vpack.c.b16 %v1009, %v1008
      %v1058 = vpack.c.b16 %v1011, %v1010
      %v1059 = vpack.c.b16 %v1013, %v1012
      %v1060 = vpack.c.b16 %v1015, %v1014
      %v1061 = vpack.c.b16 %v1017, %v1016
      %v1062 = vpack.c.b16 %v1019, %v1018
      %v1063 = vpack.c.b16 %v1021, %v1020
      %v1064 = vpack.c.b16 %v1023, %v1022
      %v1065 = vpack.c.b16 %v1025, %v1024
      %v1066 = vpack.c.b16 %v1027, %v1026
      %v1067 = vpack.c.b16 %v1029, %v1028
      %v1068 = vpack.c.b16 %v1031, %v1030
      %v1069 = vpack.c.b16 %v1033, %v1032
      %v1107 = vsel %vm345, %v330, 0
      %1109 = vmatprep.subr.bf16.mxu0 0
      %1110 = vmatpush1.bf16.msra.mxu0 %v1034
      %1111 = vmatprep.subr.bf16.mxu0 0
      %1112 = vmatpush1.bf16.msra.mxu0 %v1035
      %1113 = vmatprep.subr.bf16.mxu0 0
      %1114 = vmatpush1.bf16.msra.mxu0 %v1036
      %1115 = vmatprep.subr.bf16.mxu0 0
      %1116 = vmatpush1.bf16.msra.mxu0 %v1037
      %1117 = vmatprep.subr.bf16.mxu0 0
      %1118 = vmatpush1.bf16.msra.mxu0 %v1038
      %1119 = vmatprep.subr.bf16.mxu0 0
      %1120 = vmatpush1.bf16.msra.mxu0 %v1039
      %1121 = vmatprep.subr.bf16.mxu0 0
      %1122 = vmatpush1.bf16.msra.mxu0 %v1040
      %1123 = vmatprep.subr.bf16.mxu0 0
      %1124 = vmatpush1.bf16.msra.mxu0 %v1041
      %1125 = vmatprep.subr.bf16.mxu0 0
      %1126 = vmatpush1.bf16.msra.mxu0 %v1042
      %1127 = vmatprep.subr.bf16.mxu0 0
      %1128 = vmatpush1.bf16.msra.mxu0 %v1043
      %1129 = vmatprep.subr.bf16.mxu0 0
      %1130 = vmatpush1.bf16.msra.mxu0 %v1044
      %1131 = vmatprep.subr.bf16.mxu0 0
      %1132 = vmatpush1.bf16.msra.mxu0 %v1045
      %1133 = vmatprep.subr.bf16.mxu0 0
      %1134 = vmatpush1.bf16.msra.mxu0 %v1046
      %1135 = vmatprep.subr.bf16.mxu0 0
      %1136 = vmatpush1.bf16.msra.mxu0 %v1047
      %1137 = vmatprep.subr.bf16.mxu0 0
      %1138 = vmatpush1.bf16.msra.mxu0 %v1048
      %1139 = vmatprep.subr.bf16.mxu0 0
      %1140 = vmatpush1.bf16.msra.mxu0 %v1049
      %1141 = vmatprep.mubr.bf16.mxu0 %v360
      %1142 = vmatmul.mubr.bf16.gmra.mrb[0].mxu0 %v173
      %v1143 = vpop.f32.mrb[0].mxu0
      %v1144 = vadd.f32 %v888, %v1143
      %v1145 = vpop.f32.mrb[0].mxu0
      %v1146 = vpop.f32.mrb[0].mxu0
      %v1147 = vpop.f32.mrb[0].mxu0
      %1148 = vdwg.mxu0
      %1149 = vmatprep.subr.bf16.mxu0 0
      %1150 = vmatpush1.bf16.msra.mxu0 %v1050
      %1151 = vmatprep.subr.bf16.mxu0 0
      %1152 = vmatpush1.bf16.msra.mxu0 %v1051
      %1153 = vmatprep.subr.bf16.mxu0 0
      %1154 = vmatpush1.bf16.msra.mxu0 %v1052
      %1155 = vmatprep.subr.bf16.mxu0 0
      %1156 = vmatpush1.bf16.msra.mxu0 %v1053
      %1157 = vmatprep.subr.bf16.mxu0 0
      %1158 = vmatpush1.bf16.msra.mxu0 %v1054
      %1159 = vmatprep.subr.bf16.mxu0 0
      %1160 = vmatpush1.bf16.msra.mxu0 %v1055
      %1161 = vmatprep.subr.bf16.mxu0 0
      %1162 = vmatpush1.bf16.msra.mxu0 %v1056
      %1163 = vmatprep.subr.bf16.mxu0 0
      %1164 = vmatpush1.bf16.msra.mxu0 %v1057
      %1165 = vmatprep.subr.bf16.mxu0 0
      %1166 = vmatpush1.bf16.msra.mxu0 %v1058
      %1167 = vmatprep.subr.bf16.mxu0 0
      %1168 = vmatpush1.bf16.msra.mxu0 %v1059
      %1169 = vmatprep.subr.bf16.mxu0 0
      %1170 = vmatpush1.bf16.msra.mxu0 %v1060
      %1171 = vmatprep.subr.bf16.mxu0 0
      %1172 = vmatpush1.bf16.msra.mxu0 %v1061
      %1173 = vmatprep.subr.bf16.mxu0 0
      %1174 = vmatpush1.bf16.msra.mxu0 %v1062
      %1175 = vmatprep.subr.bf16.mxu0 0
      %1176 = vmatpush1.bf16.msra.mxu0 %v1063
      %1177 = vmatprep.subr.bf16.mxu0 0
      %1178 = vmatpush1.bf16.msra.mxu0 %v1064
      %1179 = vmatprep.subr.bf16.mxu0 0
      %1180 = vmatpush1.bf16.msra.mxu0 %v1065
      %1181 = vmatprep.mubr.bf16.mxu0 %v190
      %1182 = vmatmul.mubr.bf16.gmra.mrb[0].mxu0 %v374
      %v1183 = vpop.f32.mrb[0].mxu0
      %v1184 = vadd.f32 %v1144, %v1183
      %v1185 = vpop.f32.mrb[0].mxu0
      %v1186 = vpop.f32.mrb[0].mxu0
      %v1187 = vpop.f32.mrb[0].mxu0
      %1188 = vdwg.mxu0
      %1189 = vmatprep.subr.bf16.mxu0 0
      %1190 = vmatpush1.bf16.msra.mxu0 %v1066
      %1191 = vmatprep.subr.bf16.mxu0 0
      %1192 = vmatpush1.bf16.msra.mxu0 %v1067
      %1193 = vmatprep.subr.bf16.mxu0 0
      %1194 = vmatpush1.bf16.msra.mxu0 %v1068
      %1195 = vmatprep.subr.bf16.mxu0 0
      %1196 = vmatpush1.bf16.msra.mxu0 %v1069
      %1197 = vmatprep.subr.bf16.mxu0 0
      %1198 = vmatpush1.bf16.msra.mxu0 0
      %1199 = vmatprep.subr.bf16.mxu0 0
      %1200 = vmatpush1.bf16.msra.mxu0 0
      %1201 = vmatprep.subr.bf16.mxu0 0
      %1202 = vmatpush1.bf16.msra.mxu0 0
      %1203 = vmatprep.subr.bf16.mxu0 0
      %1204 = vmatpush1.bf16.msra.mxu0 0
      %1205 = vmatprep.subr.bf16.mxu0 0
      %1206 = vmatpush1.bf16.msra.mxu0 0
      %1207 = vmatprep.subr.bf16.mxu0 0
      %1208 = vmatpush1.bf16.msra.mxu0 0
      %1209 = vmatprep.subr.bf16.mxu0 0
      %1210 = vmatpush1.bf16.msra.mxu0 0
      %1211 = vmatprep.subr.bf16.mxu0 0
      %1212 = vmatpush1.bf16.msra.mxu0 0
      %1213 = vmatprep.subr.bf16.mxu0 0
      %1214 = vmatpush1.bf16.msra.mxu0 0
      %1215 = vmatprep.subr.bf16.mxu0 0
      %1216 = vmatpush1.bf16.msra.mxu0 0
      %1217 = vmatprep.subr.bf16.mxu0 0
      %1218 = vmatpush1.bf16.msra.mxu0 0
      %1219 = vmatprep.subr.bf16.mxu0 0
      %1220 = vmatpush1.bf16.msra.mxu0 0
      %1221 = vmatprep.mubr.bf16.mxu0 0
      %1222 = vmatmul.mubr.bf16.gmra.mrb[0].mxu0 %v1107
      %v1223 = vpop.f32.mrb[0].mxu0
      %v1224 = vadd.f32 %v1184, %v1223
      %v1225 = vpop.f32.mrb[0].mxu0
      %v1226 = vpop.f32.mrb[0].mxu0
      %v1227 = vpop.f32.mrb[0].mxu0
      %1228 = vdwg.mxu0
      %v1229 = vmax.f32 %v1224, 0.0
      %v1230 = vpack.c.bf16 %v1229, %v1229
      %v1232 = vunpack.c.l.b16 %v1230
      %v1233 = vpack.c.b16 %v1232, %v1232
      %v1234 = vrot.slane %v1233, 6
      %1236 = vst [vmem:[%s170] sm:$0xc] %v1234
      %v1237 = vld [vmem:[%s1] sm:$0xf]
      %v1238 = vld [vmem:[%s1 + $0x4] sm:$0xf]
      %v1239 = vld [vmem:[%s1 + $0x8] sm:$0xf]
      %v1240 = vld [vmem:[%s1 + $0xc] sm:$0xf]
      %v1241 = vld [vmem:[%s1 + $0x10] sm:$0xf]
      %v1242 = vld [vmem:[%s1 + $0x14] sm:$0xf]
      %v1243 = vld [vmem:[%s1 + $0x18] sm:$0xf]
      %v1244 = vld [vmem:[%s1 + $0x1c] sm:$0xf]
      %v1245 = vld [vmem:[%s1 + $0x20] sm:$0xf]
      %v1246 = vld [vmem:[%s1 + $0x24] sm:$0xf]
      %v1247 = vld [vmem:[%s1 + $0x28] sm:$0xf]
      %v1248 = vld [vmem:[%s1 + $0x2c] sm:$0xf]
      %v1249 = vld [vmem:[%s1 + $0x30] sm:$0xf]
      %v1250 = vld [vmem:[%s1 + $0x34] sm:$0xf]
      %v1251 = vld [vmem:[%s1 + $0x38] sm:$0xf]
      %v1252 = vld [vmem:[%s1 + $0x3c] sm:$0xf]
      %v1253 = vld [vmem:[%s1 + $0x40] sm:$0xf]
      %v1254 = vld [vmem:[%s1 + $0x44] sm:$0xf]
      %v1255 = vld [vmem:[%s1 + $0x48] sm:$0xf]
      %v1256 = vld [vmem:[%s1 + $0x4c] sm:$0xf]
      %v1257 = vld [vmem:[%s1 + $0x50] sm:$0xf]
      %v1258 = vld [vmem:[%s1 + $0x54] sm:$0xf]
      %v1259 = vld [vmem:[%s1 + $0x58] sm:$0xf]
      %v1260 = vld [vmem:[%s1 + $0x5c] sm:$0xf]
      %v1261 = vld [vmem:[%s1 + $0x60] sm:$0xf]
      %v1262 = vld [vmem:[%s1 + $0x64] sm:$0xf]
      %v1263 = vld [vmem:[%s1 + $0x68] sm:$0xf]
      %v1264 = vld [vmem:[%s1 + $0x6c] sm:$0xf]
      %v1265 = vld [vmem:[%s1 + $0x70] sm:$0xf]
      %v1266 = vld [vmem:[%s1 + $0x74] sm:$0xf]
      %v1267 = vld [vmem:[%s1 + $0x78] sm:$0xf]
      %v1268 = vld [vmem:[%s1 + $0x7c] sm:$0xf]
      %v1269 = vld [vmem:[%s1 + $0x80] sm:$0xf]
      %v1270 = vld [vmem:[%s1 + $0x84] sm:$0xf]
      %v1271 = vld [vmem:[%s1 + $0x88] sm:$0xf]
      %v1272 = vld [vmem:[%s1 + $0x8c] sm:$0xf]
      %v1273 = vld [vmem:[%s1 + $0x90] sm:$0xf]
      %v1274 = vld [vmem:[%s1 + $0x94] sm:$0xf]
      %v1275 = vld [vmem:[%s1 + $0x98] sm:$0xf]
      %v1276 = vld [vmem:[%s1 + $0x9c] sm:$0xf]
      %v1277 = vld [vmem:[%s1 + $0xa0] sm:$0xf]
      %v1278 = vld [vmem:[%s1 + $0xa4] sm:$0xf]
      %v1279 = vld [vmem:[%s1 + $0xa8] sm:$0xf]
      %v1280 = vld [vmem:[%s1 + $0xac] sm:$0xf]
      %v1281 = vld [vmem:[%s1 + $0xb0] sm:$0xf]
      %v1282 = vld [vmem:[%s1 + $0xb4] sm:$0xf]
      %v1283 = vld [vmem:[%s1 + $0xb8] sm:$0xf]
      %v1284 = vld [vmem:[%s1 + $0xbc] sm:$0xf]
      %v1285 = vld [vmem:[%s1 + $0xc0] sm:$0xf]
      %v1286 = vld [vmem:[%s1 + $0xc4] sm:$0xf]
      %v1287 = vld [vmem:[%s1 + $0xc8] sm:$0xf]
      %v1288 = vld [vmem:[%s1 + $0xcc] sm:$0xf]
      %v1289 = vld [vmem:[%s1 + $0xd0] sm:$0xf]
      %v1290 = vld [vmem:[%s1 + $0xd4] sm:$0xf]
      %v1291 = vld [vmem:[%s1 + $0xd8] sm:$0xf]
      %v1292 = vld [vmem:[%s1 + $0xdc] sm:$0xf]
      %v1293 = vld [vmem:[%s1 + $0xe0] sm:$0xf]
      %v1294 = vld [vmem:[%s1 + $0xe4] sm:$0xf]
      %v1295 = vld [vmem:[%s1 + $0xe8] sm:$0xf]
      %v1296 = vld [vmem:[%s1 + $0xec] sm:$0xf]
      %v1297 = vld [vmem:[%s1 + $0xf0] sm:$0xf]
      %v1298 = vld [vmem:[%s1 + $0xf4] sm:$0xf]
      %v1299 = vld [vmem:[%s1 + $0xf8] sm:$0xf]
      %v1300 = vld [vmem:[%s1 + $0xfc] sm:$0xf]
      %v1301 = vld [vmem:[%s1 + $0x100] sm:$0xf]
      %v1302 = vld [vmem:[%s1 + $0x104] sm:$0xf]
      %v1303 = vld [vmem:[%s1 + $0x108] sm:$0xf]
      %v1304 = vld [vmem:[%s1 + $0x10c] sm:$0xf]
      %v1305 = vld [vmem:[%s1 + $0x110] sm:$0xf]
      %v1306 = vld [vmem:[%s1 + $0x114] sm:$0xf]
      %v1307 = vld [vmem:[%s1 + $0x118] sm:$0xf]
      %v1308 = vld [vmem:[%s1 + $0x11c] sm:$0xf]
      %v1309 = vld [vmem:[%s2] sm:$0x1]
      %v1311 = vlaneseq
      %v1312 = vshrl.u32 %v1311, 7
      %v1313 = vsub.s32 0, %v1312
      %v1314 = vrot.slane %v1309, %v1313
      %v1388 = vunpack.c.l.b16 %v1237
      %v1389 = vunpack.c.l.b16 %v1238
      %v1390 = vunpack.c.l.b16 %v1239
      %v1391 = vunpack.c.l.b16 %v1240
      %v1392 = vunpack.c.l.b16 %v1241
      %v1393 = vunpack.c.l.b16 %v1242
      %v1394 = vunpack.c.l.b16 %v1243
      %v1395 = vunpack.c.l.b16 %v1244
      %v1396 = vunpack.c.l.b16 %v1245
      %v1397 = vunpack.c.l.b16 %v1246
      %v1398 = vunpack.c.l.b16 %v1247
      %v1399 = vunpack.c.l.b16 %v1248
      %v1400 = vunpack.c.l.b16 %v1249
      %v1401 = vunpack.c.l.b16 %v1250
      %v1402 = vunpack.c.l.b16 %v1251
      %v1403 = vunpack.c.l.b16 %v1252
      %v1404 = vunpack.c.l.b16 %v1253
      %v1405 = vunpack.c.l.b16 %v1254
      %v1406 = vunpack.c.l.b16 %v1255
      %v1407 = vunpack.c.l.b16 %v1256
      %v1408 = vunpack.c.l.b16 %v1257
      %v1409 = vunpack.c.l.b16 %v1258
      %v1410 = vunpack.c.l.b16 %v1259
      %v1411 = vunpack.c.l.b16 %v1260
      %v1412 = vunpack.c.l.b16 %v1261
      %v1413 = vunpack.c.l.b16 %v1262
      %v1414 = vunpack.c.l.b16 %v1263
      %v1415 = vunpack.c.l.b16 %v1264
      %v1416 = vunpack.c.l.b16 %v1265
      %v1417 = vunpack.c.l.b16 %v1266
      %v1418 = vunpack.c.l.b16 %v1267
      %v1419 = vunpack.c.l.b16 %v1268
      %v1420 = vunpack.c.l.b16 %v1269
      %v1421 = vunpack.c.l.b16 %v1270
      %v1422 = vunpack.c.l.b16 %v1271
      %v1423 = vunpack.c.l.b16 %v1272
      %v1424 = vunpack.c.l.b16 %v1273
      %v1425 = vunpack.c.l.b16 %v1274
      %v1426 = vunpack.c.l.b16 %v1275
      %v1427 = vunpack.c.l.b16 %v1276
      %v1428 = vunpack.c.l.b16 %v1277
      %v1429 = vunpack.c.l.b16 %v1278
      %v1430 = vunpack.c.l.b16 %v1279
      %v1431 = vunpack.c.l.b16 %v1280
      %v1432 = vunpack.c.l.b16 %v1281
      %v1433 = vunpack.c.l.b16 %v1282
      %v1434 = vunpack.c.l.b16 %v1283
      %v1435 = vunpack.c.l.b16 %v1284
      %v1436 = vunpack.c.l.b16 %v1285
      %v1437 = vunpack.c.l.b16 %v1286
      %v1438 = vunpack.c.l.b16 %v1287
      %v1439 = vunpack.c.l.b16 %v1288
      %v1440 = vunpack.c.l.b16 %v1289
      %v1441 = vunpack.c.l.b16 %v1290
      %v1442 = vunpack.c.l.b16 %v1291
      %v1443 = vunpack.c.l.b16 %v1292
      %v1444 = vunpack.c.l.b16 %v1293
      %v1445 = vunpack.c.l.b16 %v1294
      %v1446 = vunpack.c.l.b16 %v1295
      %v1447 = vunpack.c.l.b16 %v1296
      %v1448 = vunpack.c.l.b16 %v1297
      %v1449 = vunpack.c.l.b16 %v1298
      %v1450 = vunpack.c.l.b16 %v1299
      %v1451 = vunpack.c.l.b16 %v1300
      %v1452 = vunpack.c.l.b16 %v1301
      %v1453 = vunpack.c.l.b16 %v1302
      %v1454 = vunpack.c.l.b16 %v1303
      %v1455 = vunpack.c.l.b16 %v1304
      %v1456 = vunpack.c.l.b16 %v1305
      %v1457 = vunpack.c.l.b16 %v1306
      %v1458 = vunpack.c.l.b16 %v1307
      %v1459 = vunpack.c.l.b16 %v1308
      %v1460 = vpack.c.b16 %v1389, %v1388
      %v1461 = vpack.c.b16 %v1391, %v1390
      %v1462 = vpack.c.b16 %v1393, %v1392
      %v1463 = vpack.c.b16 %v1395, %v1394
      %v1464 = vpack.c.b16 %v1397, %v1396
      %v1465 = vpack.c.b16 %v1399, %v1398
      %v1466 = vpack.c.b16 %v1401, %v1400
      %v1467 = vpack.c.b16 %v1403, %v1402
      %v1468 = vpack.c.b16 %v1405, %v1404
      %v1469 = vpack.c.b16 %v1407, %v1406
      %v1470 = vpack.c.b16 %v1409, %v1408
      %v1471 = vpack.c.b16 %v1411, %v1410
      %v1472 = vpack.c.b16 %v1413, %v1412
      %v1473 = vpack.c.b16 %v1415, %v1414
      %v1474 = vpack.c.b16 %v1417, %v1416
      %v1475 = vpack.c.b16 %v1419, %v1418
      %v1476 = vpack.c.b16 %v1421, %v1420
      %v1477 = vpack.c.b16 %v1423, %v1422
      %v1478 = vpack.c.b16 %v1425, %v1424
      %v1479 = vpack.c.b16 %v1427, %v1426
      %v1480 = vpack.c.b16 %v1429, %v1428
      %v1481 = vpack.c.b16 %v1431, %v1430
      %v1482 = vpack.c.b16 %v1433, %v1432
      %v1483 = vpack.c.b16 %v1435, %v1434
      %v1484 = vpack.c.b16 %v1437, %v1436
      %v1485 = vpack.c.b16 %v1439, %v1438
      %v1486 = vpack.c.b16 %v1441, %v1440
      %v1487 = vpack.c.b16 %v1443, %v1442
      %v1488 = vpack.c.b16 %v1445, %v1444
      %v1489 = vpack.c.b16 %v1447, %v1446
      %v1490 = vpack.c.b16 %v1449, %v1448
      %v1491 = vpack.c.b16 %v1451, %v1450
      %v1492 = vpack.c.b16 %v1453, %v1452
      %v1493 = vpack.c.b16 %v1455, %v1454
      %v1494 = vpack.c.b16 %v1457, %v1456
      %v1495 = vpack.c.b16 %v1459, %v1458
      %v1533 = vsel %vm345, %v337, 0
      %1535 = vmatprep.subr.bf16.mxu0 0
      %1536 = vmatpush1.bf16.msra.mxu0 %v1460
      %1537 = vmatprep.subr.bf16.mxu0 0
      %1538 = vmatpush1.bf16.msra.mxu0 %v1461
      %1539 = vmatprep.subr.bf16.mxu0 0
      %1540 = vmatpush1.bf16.msra.mxu0 %v1462
      %1541 = vmatprep.subr.bf16.mxu0 0
      %1542 = vmatpush1.bf16.msra.mxu0 %v1463
      %1543 = vmatprep.subr.bf16.mxu0 0
      %1544 = vmatpush1.bf16.msra.mxu0 %v1464
      %1545 = vmatprep.subr.bf16.mxu0 0
      %1546 = vmatpush1.bf16.msra.mxu0 %v1465
      %1547 = vmatprep.subr.bf16.mxu0 0
      %1548 = vmatpush1.bf16.msra.mxu0 %v1466
      %1549 = vmatprep.subr.bf16.mxu0 0
      %1550 = vmatpush1.bf16.msra.mxu0 %v1467
      %1551 = vmatprep.subr.bf16.mxu0 0
      %1552 = vmatpush1.bf16.msra.mxu0 %v1468
      %1553 = vmatprep.subr.bf16.mxu0 0
      %1554 = vmatpush1.bf16.msra.mxu0 %v1469
      %1555 = vmatprep.subr.bf16.mxu0 0
      %1556 = vmatpush1.bf16.msra.mxu0 %v1470
      %1557 = vmatprep.subr.bf16.mxu0 0
      %1558 = vmatpush1.bf16.msra.mxu0 %v1471
      %1559 = vmatprep.subr.bf16.mxu0 0
      %1560 = vmatpush1.bf16.msra.mxu0 %v1472
      %1561 = vmatprep.subr.bf16.mxu0 0
      %1562 = vmatpush1.bf16.msra.mxu0 %v1473
      %1563 = vmatprep.subr.bf16.mxu0 0
      %1564 = vmatpush1.bf16.msra.mxu0 %v1474
      %1565 = vmatprep.subr.bf16.mxu0 0
      %1566 = vmatpush1.bf16.msra.mxu0 %v1475
      %1567 = vmatprep.mubr.bf16.mxu0 %v364
      %1568 = vmatmul.mubr.bf16.gmra.mrb[0].mxu0 %v174
      %v1569 = vpop.f32.mrb[0].mxu0
      %v1570 = vadd.f32 %v1314, %v1569
      %v1571 = vpop.f32.mrb[0].mxu0
      %v1572 = vpop.f32.mrb[0].mxu0
      %v1573 = vpop.f32.mrb[0].mxu0
      %1574 = vdwg.mxu0
      %1575 = vmatprep.subr.bf16.mxu0 0
      %1576 = vmatpush1.bf16.msra.mxu0 %v1476
      %1577 = vmatprep.subr.bf16.mxu0 0
      %1578 = vmatpush1.bf16.msra.mxu0 %v1477
      %1579 = vmatprep.subr.bf16.mxu0 0
      %1580 = vmatpush1.bf16.msra.mxu0 %v1478
      %1581 = vmatprep.subr.bf16.mxu0 0
      %1582 = vmatpush1.bf16.msra.mxu0 %v1479
      %1583 = vmatprep.subr.bf16.mxu0 0
      %1584 = vmatpush1.bf16.msra.mxu0 %v1480
      %1585 = vmatprep.subr.bf16.mxu0 0
      %1586 = vmatpush1.bf16.msra.mxu0 %v1481
      %1587 = vmatprep.subr.bf16.mxu0 0
      %1588 = vmatpush1.bf16.msra.mxu0 %v1482
      %1589 = vmatprep.subr.bf16.mxu0 0
      %1590 = vmatpush1.bf16.msra.mxu0 %v1483
      %1591 = vmatprep.subr.bf16.mxu0 0
      %1592 = vmatpush1.bf16.msra.mxu0 %v1484
      %1593 = vmatprep.subr.bf16.mxu0 0
      %1594 = vmatpush1.bf16.msra.mxu0 %v1485
      %1595 = vmatprep.subr.bf16.mxu0 0
      %1596 = vmatpush1.bf16.msra.mxu0 %v1486
      %1597 = vmatprep.subr.bf16.mxu0 0
      %1598 = vmatpush1.bf16.msra.mxu0 %v1487
      %1599 = vmatprep.subr.bf16.mxu0 0
      %1600 = vmatpush1.bf16.msra.mxu0 %v1488
      %1601 = vmatprep.subr.bf16.mxu0 0
      %1602 = vmatpush1.bf16.msra.mxu0 %v1489
      %1603 = vmatprep.subr.bf16.mxu0 0
      %1604 = vmatpush1.bf16.msra.mxu0 %v1490
      %1605 = vmatprep.subr.bf16.mxu0 0
      %1606 = vmatpush1.bf16.msra.mxu0 %v1491
      %1607 = vmatprep.mubr.bf16.mxu0 %v191
      %1608 = vmatmul.mubr.bf16.gmra.mrb[0].mxu0 %v377
      %v1609 = vpop.f32.mrb[0].mxu0
      %v1610 = vadd.f32 %v1570, %v1609
      %v1611 = vpop.f32.mrb[0].mxu0
      %v1612 = vpop.f32.mrb[0].mxu0
      %v1613 = vpop.f32.mrb[0].mxu0
      %1614 = vdwg.mxu0
      %1615 = vmatprep.subr.bf16.mxu0 0
      %1616 = vmatpush1.bf16.msra.mxu0 %v1492
      %1617 = vmatprep.subr.bf16.mxu0 0
      %1618 = vmatpush1.bf16.msra.mxu0 %v1493
      %1619 = vmatprep.subr.bf16.mxu0 0
      %1620 = vmatpush1.bf16.msra.mxu0 %v1494
      %1621 = vmatprep.subr.bf16.mxu0 0
      %1622 = vmatpush1.bf16.msra.mxu0 %v1495
      %1623 = vmatprep.subr.bf16.mxu0 0
      %1624 = vmatpush1.bf16.msra.mxu0 0
      %1625 = vmatprep.subr.bf16.mxu0 0
      %1626 = vmatpush1.bf16.msra.mxu0 0
      %1627 = vmatprep.subr.bf16.mxu0 0
      %1628 = vmatpush1.bf16.msra.mxu0 0
      %1629 = vmatprep.subr.bf16.mxu0 0
      %1630 = vmatpush1.bf16.msra.mxu0 0
      %1631 = vmatprep.subr.bf16.mxu0 0
      %1632 = vmatpush1.bf16.msra.mxu0 0
      %1633 = vmatprep.subr.bf16.mxu0 0
      %1634 = vmatpush1.bf16.msra.mxu0 0
      %1635 = vmatprep.subr.bf16.mxu0 0
      %1636 = vmatpush1.bf16.msra.mxu0 0
      %1637 = vmatprep.subr.bf16.mxu0 0
      %1638 = vmatpush1.bf16.msra.mxu0 0
      %1639 = vmatprep.subr.bf16.mxu0 0
      %1640 = vmatpush1.bf16.msra.mxu0 0
      %1641 = vmatprep.subr.bf16.mxu0 0
      %1642 = vmatpush1.bf16.msra.mxu0 0
      %1643 = vmatprep.subr.bf16.mxu0 0
      %1644 = vmatpush1.bf16.msra.mxu0 0
      %1645 = vmatprep.subr.bf16.mxu0 0
      %1646 = vmatpush1.bf16.msra.mxu0 0
      %1647 = vmatprep.mubr.bf16.mxu0 0
      %1648 = vmatmul.mubr.bf16.gmra.mrb[0].mxu0 %v1533
      %v1649 = vpop.f32.mrb[0].mxu0
      %v1650 = vadd.f32 %v1610, %v1649
      %v1651 = vpop.f32.mrb[0].mxu0
      %v1652 = vpop.f32.mrb[0].mxu0
      %v1653 = vpop.f32.mrb[0].mxu0
      %1654 = vdwg.mxu0
      %v1655 = vmax.f32 %v1650, 0.0
      %v1656 = vpack.c.bf16 %v1655, %v1655
      %1657 = vst [vmem:[%s170 + $0x4] sm:$0x3] %v1656
      %v1658 = vld [vmem:[%s1] sm:$0xf]
      %v1659 = vld [vmem:[%s1 + $0x4] sm:$0xf]
      %v1660 = vld [vmem:[%s1 + $0x8] sm:$0xf]
      %v1661 = vld [vmem:[%s1 + $0xc] sm:$0xf]
      %v1662 = vld [vmem:[%s1 + $0x10] sm:$0xf]
      %v1663 = vld [vmem:[%s1 + $0x14] sm:$0xf]
      %v1664 = vld [vmem:[%s1 + $0x18] sm:$0xf]
      %v1665 = vld [vmem:[%s1 + $0x1c] sm:$0xf]
      %v1666 = vld [vmem:[%s1 + $0x20] sm:$0xf]
      %v1667 = vld [vmem:[%s1 + $0x24] sm:$0xf]
      %v1668 = vld [vmem:[%s1 + $0x28] sm:$0xf]
      %v1669 = vld [vmem:[%s1 + $0x2c] sm:$0xf]
      %v1670 = vld [vmem:[%s1 + $0x30] sm:$0xf]
      %v1671 = vld [vmem:[%s1 + $0x34] sm:$0xf]
      %v1672 = vld [vmem:[%s1 + $0x38] sm:$0xf]
      %v1673 = vld [vmem:[%s1 + $0x3c] sm:$0xf]
      %v1674 = vld [vmem:[%s1 + $0x40] sm:$0xf]
      %v1675 = vld [vmem:[%s1 + $0x44] sm:$0xf]
      %v1676 = vld [vmem:[%s1 + $0x48] sm:$0xf]
      %v1677 = vld [vmem:[%s1 + $0x4c] sm:$0xf]
      %v1678 = vld [vmem:[%s1 + $0x50] sm:$0xf]
      %v1679 = vld [vmem:[%s1 + $0x54] sm:$0xf]
      %v1680 = vld [vmem:[%s1 + $0x58] sm:$0xf]
      %v1681 = vld [vmem:[%s1 + $0x5c] sm:$0xf]
      %v1682 = vld [vmem:[%s1 + $0x60] sm:$0xf]
      %v1683 = vld [vmem:[%s1 + $0x64] sm:$0xf]
      %v1684 = vld [vmem:[%s1 + $0x68] sm:$0xf]
      %v1685 = vld [vmem:[%s1 + $0x6c] sm:$0xf]
      %v1686 = vld [vmem:[%s1 + $0x70] sm:$0xf]
      %v1687 = vld [vmem:[%s1 + $0x74] sm:$0xf]
      %v1688 = vld [vmem:[%s1 + $0x78] sm:$0xf]
      %v1689 = vld [vmem:[%s1 + $0x7c] sm:$0xf]
      %v1690 = vld [vmem:[%s1 + $0x80] sm:$0xf]
      %v1691 = vld [vmem:[%s1 + $0x84] sm:$0xf]
      %v1692 = vld [vmem:[%s1 + $0x88] sm:$0xf]
      %v1693 = vld [vmem:[%s1 + $0x8c] sm:$0xf]
      %v1694 = vld [vmem:[%s1 + $0x90] sm:$0xf]
      %v1695 = vld [vmem:[%s1 + $0x94] sm:$0xf]
      %v1696 = vld [vmem:[%s1 + $0x98] sm:$0xf]
      %v1697 = vld [vmem:[%s1 + $0x9c] sm:$0xf]
      %v1698 = vld [vmem:[%s1 + $0xa0] sm:$0xf]
      %v1699 = vld [vmem:[%s1 + $0xa4] sm:$0xf]
      %v1700 = vld [vmem:[%s1 + $0xa8] sm:$0xf]
      %v1701 = vld [vmem:[%s1 + $0xac] sm:$0xf]
      %v1702 = vld [vmem:[%s1 + $0xb0] sm:$0xf]
      %v1703 = vld [vmem:[%s1 + $0xb4] sm:$0xf]
      %v1704 = vld [vmem:[%s1 + $0xb8] sm:$0xf]
      %v1705 = vld [vmem:[%s1 + $0xbc] sm:$0xf]
      %v1706 = vld [vmem:[%s1 + $0xc0] sm:$0xf]
      %v1707 = vld [vmem:[%s1 + $0xc4] sm:$0xf]
      %v1708 = vld [vmem:[%s1 + $0xc8] sm:$0xf]
      %v1709 = vld [vmem:[%s1 + $0xcc] sm:$0xf]
      %v1710 = vld [vmem:[%s1 + $0xd0] sm:$0xf]
      %v1711 = vld [vmem:[%s1 + $0xd4] sm:$0xf]
      %v1712 = vld [vmem:[%s1 + $0xd8] sm:$0xf]
      %v1713 = vld [vmem:[%s1 + $0xdc] sm:$0xf]
      %v1714 = vld [vmem:[%s1 + $0xe0] sm:$0xf]
      %v1715 = vld [vmem:[%s1 + $0xe4] sm:$0xf]
      %v1716 = vld [vmem:[%s1 + $0xe8] sm:$0xf]
      %v1717 = vld [vmem:[%s1 + $0xec] sm:$0xf]
      %v1718 = vld [vmem:[%s1 + $0xf0] sm:$0xf]
      %v1719 = vld [vmem:[%s1 + $0xf4] sm:$0xf]
      %v1720 = vld [vmem:[%s1 + $0xf8] sm:$0xf]
      %v1721 = vld [vmem:[%s1 + $0xfc] sm:$0xf]
      %v1722 = vld [vmem:[%s1 + $0x100] sm:$0xf]
      %v1723 = vld [vmem:[%s1 + $0x104] sm:$0xf]
      %v1724 = vld [vmem:[%s1 + $0x108] sm:$0xf]
      %v1725 = vld [vmem:[%s1 + $0x10c] sm:$0xf]
      %v1726 = vld [vmem:[%s1 + $0x110] sm:$0xf]
      %v1727 = vld [vmem:[%s1 + $0x114] sm:$0xf]
      %v1728 = vld [vmem:[%s1 + $0x118] sm:$0xf]
      %v1729 = vld [vmem:[%s1 + $0x11c] sm:$0xf]
      %v1730 = vld [vmem:[%s2] sm:$0x1]
      %v1732 = vlaneseq
      %v1733 = vshrl.u32 %v1732, 7
      %v1734 = vsub.s32 0, %v1733
      %v1735 = vrot.slane %v1730, %v1734
      %v1809 = vunpack.c.l.b16 %v1658
      %v1810 = vunpack.c.l.b16 %v1659
      %v1811 = vunpack.c.l.b16 %v1660
      %v1812 = vunpack.c.l.b16 %v1661
      %v1813 = vunpack.c.l.b16 %v1662
      %v1814 = vunpack.c.l.b16 %v1663
      %v1815 = vunpack.c.l.b16 %v1664
      %v1816 = vunpack.c.l.b16 %v1665
      %v1817 = vunpack.c.l.b16 %v1666
      %v1818 = vunpack.c.l.b16 %v1667
      %v1819 = vunpack.c.l.b16 %v1668
      %v1820 = vunpack.c.l.b16 %v1669
      %v1821 = vunpack.c.l.b16 %v1670
      %v1822 = vunpack.c.l.b16 %v1671
      %v1823 = vunpack.c.l.b16 %v1672
      %v1824 = vunpack.c.l.b16 %v1673
      %v1825 = vunpack.c.l.b16 %v1674
      %v1826 = vunpack.c.l.b16 %v1675
      %v1827 = vunpack.c.l.b16 %v1676
      %v1828 = vunpack.c.l.b16 %v1677
      %v1829 = vunpack.c.l.b16 %v1678
      %v1830 = vunpack.c.l.b16 %v1679
      %v1831 = vunpack.c.l.b16 %v1680
      %v1832 = vunpack.c.l.b16 %v1681
      %v1833 = vunpack.c.l.b16 %v1682
      %v1834 = vunpack.c.l.b16 %v1683
      %v1835 = vunpack.c.l.b16 %v1684
      %v1836 = vunpack.c.l.b16 %v1685
      %v1837 = vunpack.c.l.b16 %v1686
      %v1838 = vunpack.c.l.b16 %v1687
      %v1839 = vunpack.c.l.b16 %v1688
      %v1840 = vunpack.c.l.b16 %v1689
      %v1841 = vunpack.c.l.b16 %v1690
      %v1842 = vunpack.c.l.b16 %v1691
      %v1843 = vunpack.c.l.b16 %v1692
      %v1844 = vunpack.c.l.b16 %v1693
      %v1845 = vunpack.c.l.b16 %v1694
      %v1846 = vunpack.c.l.b16 %v1695
      %v1847 = vunpack.c.l.b16 %v1696
      %v1848 = vunpack.c.l.b16 %v1697
      %v1849 = vunpack.c.l.b16 %v1698
      %v1850 = vunpack.c.l.b16 %v1699
      %v1851 = vunpack.c.l.b16 %v1700
      %v1852 = vunpack.c.l.b16 %v1701
      %v1853 = vunpack.c.l.b16 %v1702
      %v1854 = vunpack.c.l.b16 %v1703
      %v1855 = vunpack.c.l.b16 %v1704
      %v1856 = vunpack.c.l.b16 %v1705
      %v1857 = vunpack.c.l.b16 %v1706
      %v1858 = vunpack.c.l.b16 %v1707
      %v1859 = vunpack.c.l.b16 %v1708
      %v1860 = vunpack.c.l.b16 %v1709
      %v1861 = vunpack.c.l.b16 %v1710
      %v1862 = vunpack.c.l.b16 %v1711
      %v1863 = vunpack.c.l.b16 %v1712
      %v1864 = vunpack.c.l.b16 %v1713
      %v1865 = vunpack.c.l.b16 %v1714
      %v1866 = vunpack.c.l.b16 %v1715
      %v1867 = vunpack.c.l.b16 %v1716
      %v1868 = vunpack.c.l.b16 %v1717
      %v1869 = vunpack.c.l.b16 %v1718
      %v1870 = vunpack.c.l.b16 %v1719
      %v1871 = vunpack.c.l.b16 %v1720
      %v1872 = vunpack.c.l.b16 %v1721
      %v1873 = vunpack.c.l.b16 %v1722
      %v1874 = vunpack.c.l.b16 %v1723
      %v1875 = vunpack.c.l.b16 %v1724
      %v1876 = vunpack.c.l.b16 %v1725
      %v1877 = vunpack.c.l.b16 %v1726
      %v1878 = vunpack.c.l.b16 %v1727
      %v1879 = vunpack.c.l.b16 %v1728
      %v1880 = vunpack.c.l.b16 %v1729
      %v1881 = vpack.c.b16 %v1810, %v1809
      %v1882 = vpack.c.b16 %v1812, %v1811
      %v1883 = vpack.c.b16 %v1814, %v1813
      %v1884 = vpack.c.b16 %v1816, %v1815
      %v1885 = vpack.c.b16 %v1818, %v1817
      %v1886 = vpack.c.b16 %v1820, %v1819
      %v1887 = vpack.c.b16 %v1822, %v1821
      %v1888 = vpack.c.b16 %v1824, %v1823
      %v1889 = vpack.c.b16 %v1826, %v1825
      %v1890 = vpack.c.b16 %v1828, %v1827
      %v1891 = vpack.c.b16 %v1830, %v1829
      %v1892 = vpack.c.b16 %v1832, %v1831
      %v1893 = vpack.c.b16 %v1834, %v1833
      %v1894 = vpack.c.b16 %v1836, %v1835
      %v1895 = vpack.c.b16 %v1838, %v1837
      %v1896 = vpack.c.b16 %v1840, %v1839
      %v1897 = vpack.c.b16 %v1842, %v1841
      %v1898 = vpack.c.b16 %v1844, %v1843
      %v1899 = vpack.c.b16 %v1846, %v1845
      %v1900 = vpack.c.b16 %v1848, %v1847
      %v1901 = vpack.c.b16 %v1850, %v1849
      %v1902 = vpack.c.b16 %v1852, %v1851
      %v1903 = vpack.c.b16 %v1854, %v1853
      %v1904 = vpack.c.b16 %v1856, %v1855
      %v1905 = vpack.c.b16 %v1858, %v1857
      %v1906 = vpack.c.b16 %v1860, %v1859
      %v1907 = vpack.c.b16 %v1862, %v1861
      %v1908 = vpack.c.b16 %v1864, %v1863
      %v1909 = vpack.c.b16 %v1866, %v1865
      %v1910 = vpack.c.b16 %v1868, %v1867
      %v1911 = vpack.c.b16 %v1870, %v1869
      %v1912 = vpack.c.b16 %v1872, %v1871
      %v1913 = vpack.c.b16 %v1874, %v1873
      %v1914 = vpack.c.b16 %v1876, %v1875
      %v1915 = vpack.c.b16 %v1878, %v1877
      %v1916 = vpack.c.b16 %v1880, %v1879
      %v1954 = vsel %vm345, %v344, 0
      %1956 = vmatprep.subr.bf16.mxu0 0
      %1957 = vmatpush1.bf16.msra.mxu0 %v1881
      %1958 = vmatprep.subr.bf16.mxu0 0
      %1959 = vmatpush1.bf16.msra.mxu0 %v1882
      %1960 = vmatprep.subr.bf16.mxu0 0
      %1961 = vmatpush1.bf16.msra.mxu0 %v1883
      %1962 = vmatprep.subr.bf16.mxu0 0
      %1963 = vmatpush1.bf16.msra.mxu0 %v1884
      %1964 = vmatprep.subr.bf16.mxu0 0
      %1965 = vmatpush1.bf16.msra.mxu0 %v1885
      %1966 = vmatprep.subr.bf16.mxu0 0
      %1967 = vmatpush1.bf16.msra.mxu0 %v1886
      %1968 = vmatprep.subr.bf16.mxu0 0
      %1969 = vmatpush1.bf16.msra.mxu0 %v1887
      %1970 = vmatprep.subr.bf16.mxu0 0
      %1971 = vmatpush1.bf16.msra.mxu0 %v1888
      %1972 = vmatprep.subr.bf16.mxu0 0
      %1973 = vmatpush1.bf16.msra.mxu0 %v1889
      %1974 = vmatprep.subr.bf16.mxu0 0
      %1975 = vmatpush1.bf16.msra.mxu0 %v1890
      %1976 = vmatprep.subr.bf16.mxu0 0
      %1977 = vmatpush1.bf16.msra.mxu0 %v1891
      %1978 = vmatprep.subr.bf16.mxu0 0
      %1979 = vmatpush1.bf16.msra.mxu0 %v1892
      %1980 = vmatprep.subr.bf16.mxu0 0
      %1981 = vmatpush1.bf16.msra.mxu0 %v1893
      %1982 = vmatprep.subr.bf16.mxu0 0
      %1983 = vmatpush1.bf16.msra.mxu0 %v1894
      %1984 = vmatprep.subr.bf16.mxu0 0
      %1985 = vmatpush1.bf16.msra.mxu0 %v1895
      %1986 = vmatprep.subr.bf16.mxu0 0
      %1987 = vmatpush1.bf16.msra.mxu0 %v1896
      %1988 = vmatprep.mubr.bf16.mxu0 %v368
      %1989 = vmatmul.mubr.bf16.gmra.mrb[0].mxu0 %v175
      %v1990 = vpop.f32.mrb[0].mxu0
      %v1991 = vadd.f32 %v1735, %v1990
      %v1992 = vpop.f32.mrb[0].mxu0
      %v1993 = vpop.f32.mrb[0].mxu0
      %v1994 = vpop.f32.mrb[0].mxu0
      %1995 = vdwg.mxu0
      %1996 = vmatprep.subr.bf16.mxu0 0
      %1997 = vmatpush1.bf16.msra.mxu0 %v1897
      %1998 = vmatprep.subr.bf16.mxu0 0
      %1999 = vmatpush1.bf16.msra.mxu0 %v1898
      %2000 = vmatprep.subr.bf16.mxu0 0
      %2001 = vmatpush1.bf16.msra.mxu0 %v1899
      %2002 = vmatprep.subr.bf16.mxu0 0
      %2003 = vmatpush1.bf16.msra.mxu0 %v1900
      %2004 = vmatprep.subr.bf16.mxu0 0
      %2005 = vmatpush1.bf16.msra.mxu0 %v1901
      %2006 = vmatprep.subr.bf16.mxu0 0
      %2007 = vmatpush1.bf16.msra.mxu0 %v1902
      %2008 = vmatprep.subr.bf16.mxu0 0
      %2009 = vmatpush1.bf16.msra.mxu0 %v1903
      %2010 = vmatprep.subr.bf16.mxu0 0
      %2011 = vmatpush1.bf16.msra.mxu0 %v1904
      %2012 = vmatprep.subr.bf16.mxu0 0
      %2013 = vmatpush1.bf16.msra.mxu0 %v1905
      %2014 = vmatprep.subr.bf16.mxu0 0
      %2015 = vmatpush1.bf16.msra.mxu0 %v1906
      %2016 = vmatprep.subr.bf16.mxu0 0
      %2017 = vmatpush1.bf16.msra.mxu0 %v1907
      %2018 = vmatprep.subr.bf16.mxu0 0
      %2019 = vmatpush1.bf16.msra.mxu0 %v1908
      %2020 = vmatprep.subr.bf16.mxu0 0
      %2021 = vmatpush1.bf16.msra.mxu0 %v1909
      %2022 = vmatprep.subr.bf16.mxu0 0
      %2023 = vmatpush1.bf16.msra.mxu0 %v1910
      %2024 = vmatprep.subr.bf16.mxu0 0
      %2025 = vmatpush1.bf16.msra.mxu0 %v1911
      %2026 = vmatprep.subr.bf16.mxu0 0
      %2027 = vmatpush1.bf16.msra.mxu0 %v1912
      %2028 = vmatprep.mubr.bf16.mxu0 %v192
      %2029 = vmatmul.mubr.bf16.gmra.mrb[0].mxu0 %v380
      %v2030 = vpop.f32.mrb[0].mxu0
      %v2031 = vadd.f32 %v1991, %v2030
      %v2032 = vpop.f32.mrb[0].mxu0
      %v2033 = vpop.f32.mrb[0].mxu0
      %v2034 = vpop.f32.mrb[0].mxu0
      %2035 = vdwg.mxu0
      %2036 = vmatprep.subr.bf16.mxu0 0
      %2037 = vmatpush1.bf16.msra.mxu0 %v1913
      %2038 = vmatprep.subr.bf16.mxu0 0
      %2039 = vmatpush1.bf16.msra.mxu0 %v1914
      %2040 = vmatprep.subr.bf16.mxu0 0
      %2041 = vmatpush1.bf16.msra.mxu0 %v1915
      %2042 = vmatprep.subr.bf16.mxu0 0
      %2043 = vmatpush1.bf16.msra.mxu0 %v1916
      %2044 = vmatprep.subr.bf16.mxu0 0
      %2045 = vmatpush1.bf16.msra.mxu0 0
      %2046 = vmatprep.subr.bf16.mxu0 0
      %2047 = vmatpush1.bf16.msra.mxu0 0
      %2048 = vmatprep.subr.bf16.mxu0 0
      %2049 = vmatpush1.bf16.msra.mxu0 0
      %2050 = vmatprep.subr.bf16.mxu0 0
      %2051 = vmatpush1.bf16.msra.mxu0 0
      %2052 = vmatprep.subr.bf16.mxu0 0
      %2053 = vmatpush1.bf16.msra.mxu0 0
      %2054 = vmatprep.subr.bf16.mxu0 0
      %2055 = vmatpush1.bf16.msra.mxu0 0
      %2056 = vmatprep.subr.bf16.mxu0 0
      %2057 = vmatpush1.bf16.msra.mxu0 0
      %2058 = vmatprep.subr.bf16.mxu0 0
      %2059 = vmatpush1.bf16.msra.mxu0 0
      %2060 = vmatprep.subr.bf16.mxu0 0
      %2061 = vmatpush1.bf16.msra.mxu0 0
      %2062 = vmatprep.subr.bf16.mxu0 0
      %2063 = vmatpush1.bf16.msra.mxu0 0
      %2064 = vmatprep.subr.bf16.mxu0 0
      %2065 = vmatpush1.bf16.msra.mxu0 0
      %2066 = vmatprep.subr.bf16.mxu0 0
      %2067 = vmatpush1.bf16.msra.mxu0 0
      %2068 = vmatprep.mubr.bf16.mxu0 0
      %2069 = vmatmul.mubr.bf16.gmra.mrb[0].mxu0 %v1954
      %v2070 = vpop.f32.mrb[0].mxu0
      %v2071 = vadd.f32 %v2031, %v2070
      %v2072 = vpop.f32.mrb[0].mxu0
      %v2073 = vpop.f32.mrb[0].mxu0
      %v2074 = vpop.f32.mrb[0].mxu0
      %2075 = vdwg.mxu0
      %v2076 = vmax.f32 %v2071, 0.0
      %v2077 = vpack.c.bf16 %v2076, %v2076
      %v2079 = vunpack.c.l.b16 %v2077
      %v2080 = vpack.c.b16 %v2079, %v2079
      %v2081 = vrot.slane %v2080, 6
      %2083 = vst [vmem:[%s170 + $0x4] sm:$0xc] %v2081
      %p2084 = scmp.lt.s32.totalorder %s14, 1
      %s2085 = scalar_select %p2084, %s14, 1
      %s2086 = smul.addr %s2085, 2
      %s2087 = smul.addr %s2086, 4
      %s2088 = scalar_lea.vmem %s3, %s2087
      // Predicated region
      $region33: #{image_encoder_forward.4} parent=31 // pred_check
        %p2089 = pneg %p100
      $region34: #{image_encoder_forward.4} parent=31 // pred_check_branch
        %2091 = sbr.rel (%p2089) target = $region36
      $region35: #{image_encoder_forward.4} parent=31 // pred_region
        _
      $region36: #{image_encoder_forward.4} parent=31 // pred_fallthru
        _
    $region32: #{image_encoder_forward.4} parent=5 // pred_fallthru
      _
    %p2092 = scmp.le.s32.totalorder 2, %s9
    // Predicated region
    $region37: #{image_encoder_forward.4} parent=5 // pred_check
      %p2093 = pneg %p2092
    $region38: #{image_encoder_forward.4} parent=5 // pred_check_branch
      %2095 = sbr.rel (%p2093) target = $region40
    $region39: #{image_encoder_forward.4} parent=5 // pred_region
      %s2096 = ssub.s32 %s9, 2
      // Predicated region
      $region41: #{image_encoder_forward.4} parent=39 // pred_check
        %p2097 = pneg %p106
      $region42: #{image_encoder_forward.4} parent=39 // pred_check_branch
        %2099 = sbr.rel (%p2097) target = $region44
      $region43: #{image_encoder_forward.4} parent=39 // pred_region
        %p2100 = scmp.lt.s32.totalorder %s15, 1
        %s2101 = scalar_select %p2100, %s15, 1
        %s2102 = smul.addr %s2101, 2
        %s2103 = smul.addr %s2102, 4
        %s2104 = scalar_lea.vmem %s3, %s2103
      $region44: #{image_encoder_forward.4} parent=39 // pred_fallthru
        _
    $region40: #{image_encoder_forward.4} parent=5 // pred_fallthru
      _
  $region6: #{image_encoder_forward.4} parent=0 // loop_footer
    %s13 = sadd.s32 1, %s9
  $region7: #{image_encoder_forward.4} parent=0 // loop_footer_branch
    %8 = sbr.rel target = $region3
  $region8: #{image_encoder_forward.4} parent=0 // loop_exit
    _

// kernel: image_encoder_forward.5
$region0: #{image_encoder_forward.5}
  #allocation0 [shape = 'u32[]', space=smem, size = 0x4, offset = 0x4, fixed_abs, tag = 'smem constant byte address 0x4 - core index']
  #allocation1 [shape = 'u32[144,128]{1,0:T(1,128)}', space=vmem, size = 0x12000, scoped, tag = 'internal scratch']
  %s0 = inlined_call_operand.vmem [shape: bf16[2,3,3,512], index: 0, kind: input, shape index: {}]
  %s1 = inlined_call_operand.vmem [shape: bf16[1152,256], index: 1, kind: input, shape index: {}]
  %s2 = inlined_call_operand.vmem [shape: f32[1,256], index: 2, kind: input, shape index: {}]
  %s3 = inlined_call_operand.vmem [shape: bf16[1024,128], index: 3, kind: input, shape index: {}]
  %s4 = inlined_call_operand.vmem [shape: f32[1,128], index: 4, kind: input, shape index: {}]
  %s5 = inlined_call_operand.vmem [shape: f32[2,1,128], index: 5, kind: output, shape index: {}]
  %s6 = sld [smem:[#allocation0]]
  $region53: #{image_encoder_forward.5} parent=0
    _
  %s8 = ssub.s32 1, %s6
  %s9 = scalar_select 0, %s8, %s6
  loop: start=0, step=1, limit=4
  $region2: #{image_encoder_forward.5} parent=0 // loop_pre_header
    _
  $region3: #{image_encoder_forward.5} parent=0 // loop_header
    %s11 = sphi 0, %s15
    %p12 = scmp.ge.s32.totalorder %s11, 4
    %s21 = sphi 0, %s23
    %s24 = sphi 0, %s21
    %s25 = sphi 0, %s24
    %s41 = sphi 0, %s25
    %s45 = sphi 0, %s45
    %s47 = sphi 0, %s45
    %s48 = sphi 0, %s47
    %s62 = sphi 0, %s48
    %s66 = sphi 0, %s66
    %s68 = sphi 0, %s66
    %s69 = sphi 0, %s68
    %s83 = sphi 0, %s69
    %s87 = sphi 0, %s87
    %s89 = sphi 0, %s87
    %s90 = sphi 0, %s89
    %s104 = sphi 0, %s90
    %s108 = sphi 0, %s108
    %s110 = sphi 0, %s108
    %s111 = sphi 0, %s110
    %s125 = sphi 0, %s111
    %s131 = sphi 0, %s133
    %s134 = sphi 0, %s131
    %s135 = sphi 0, %s134
    %s151 = sphi 0, %s135
  $region4: #{image_encoder_forward.5} parent=0 // loop_header_branch
    %14 = sbr.rel (%p12) target = $region8
  $region5: #{image_encoder_forward.5} parent=0 // loop_body
    %s16 = ssub.s32 %s11, 1
    %s17 = ssub.s32 %s11, 2
    %s18 = sadd.s32 %s11, 1
    %s19 = ssub.s32 %s11, %s18
    %p20 = scmp.eq.s32.totalorder %s19, 0
    %s22 = sadd.s32 %s21, 1
    %s23 = scalar_select %p20, %s21, %s22
    %p26 = pneg %p20
    %p27 = scmp.eq.s32.totalorder %s11, 1
    %p28 = por %p26, %p27
    %p29 = scmp.ne.s32.totalorder %s21, %s24
    %p30 = scmp.eq.s32.totalorder %s11, 0
    %p31 = por %p29, %p30
    %p32 = scmp.ne.s32.totalorder %s21, %s24
    %p33 = scmp.eq.s32.totalorder %s16, 1
    %p34 = por %p32, %p33
    %p35 = scmp.ne.s32.totalorder %s24, %s25
    %p36 = scmp.eq.s32.totalorder %s16, 0
    %p37 = por %p35, %p36
    %p38 = scmp.ne.s32.totalorder %s24, %s25
    %p39 = scmp.eq.s32.totalorder %s17, 1
    %p40 = por %p38, %p39
    %p42 = scmp.ne.s32.totalorder %s25, %s41
    %p43 = scmp.eq.s32.totalorder %s17, 0
    %p44 = por %p42, %p43
    %s46 = sadd.s32 %s45, 1
    %p49 = scmp.eq.s32.totalorder %s11, 1
    %p50 = scmp.ne.s32.totalorder %s45, %s47
    %p51 = scmp.eq.s32.totalorder %s11, 0
    %p52 = por %p50, %p51
    %p53 = scmp.ne.s32.totalorder %s45, %s47
    %p54 = scmp.eq.s32.totalorder %s16, 1
    %p55 = por %p53, %p54
    %p56 = scmp.ne.s32.totalorder %s47, %s48
    %p57 = scmp.eq.s32.totalorder %s16, 0
    %p58 = por %p56, %p57
    %p59 = scmp.ne.s32.totalorder %s47, %s48
    %p60 = scmp.eq.s32.totalorder %s17, 1
    %p61 = por %p59, %p60
    %p63 = scmp.ne.s32.totalorder %s48, %s62
    %p64 = scmp.eq.s32.totalorder %s17, 0
    %p65 = por %p63, %p64
    %s67 = sadd.s32 %s66, 1
    %p70 = scmp.eq.s32.totalorder %s11, 1
    %p71 = scmp.ne.s32.totalorder %s66, %s68
    %p72 = scmp.eq.s32.totalorder %s11, 0
    %p73 = por %p71, %p72
    %p74 = scmp.ne.s32.totalorder %s66, %s68
    %p75 = scmp.eq.s32.totalorder %s16, 1
    %p76 = por %p74, %p75
    %p77 = scmp.ne.s32.totalorder %s68, %s69
    %p78 = scmp.eq.s32.totalorder %s16, 0
    %p79 = por %p77, %p78
    %p80 = scmp.ne.s32.totalorder %s68, %s69
    %p81 = scmp.eq.s32.totalorder %s17, 1
    %p82 = por %p80, %p81
    %p84 = scmp.ne.s32.totalorder %s69, %s83
    %p85 = scmp.eq.s32.totalorder %s17, 0
    %p86 = por %p84, %p85
    %s88 = sadd.s32 %s87, 1
    %p91 = scmp.eq.s32.totalorder %s11, 1
    %p92 = scmp.ne.s32.totalorder %s87, %s89
    %p93 = scmp.eq.s32.totalorder %s11, 0
    %p94 = por %p92, %p93
    %p95 = scmp.ne.s32.totalorder %s87, %s89
    %p96 = scmp.eq.s32.totalorder %s16, 1
    %p97 = por %p95, %p96
    %p98 = scmp.ne.s32.totalorder %s89, %s90
    %p99 = scmp.eq.s32.totalorder %s16, 0
    %p100 = por %p98, %p99
    %p101 = scmp.ne.s32.totalorder %s89, %s90
    %p102 = scmp.eq.s32.totalorder %s17, 1
    %p103 = por %p101, %p102
    %p105 = scmp.ne.s32.totalorder %s90, %s104
    %p106 = scmp.eq.s32.totalorder %s17, 0
    %p107 = por %p105, %p106
    %s109 = sadd.s32 %s108, 1
    %p112 = scmp.eq.s32.totalorder %s11, 1
    %p113 = scmp.ne.s32.totalorder %s108, %s110
    %p114 = scmp.eq.s32.totalorder %s11, 0
    %p115 = por %p113, %p114
    %p116 = scmp.ne.s32.totalorder %s108, %s110
    %p117 = scmp.eq.s32.totalorder %s16, 1
    %p118 = por %p116, %p117
    %p119 = scmp.ne.s32.totalorder %s110, %s111
    %p120 = scmp.eq.s32.totalorder %s16, 0
    %p121 = por %p119, %p120
    %p122 = scmp.ne.s32.totalorder %s110, %s111
    %p123 = scmp.eq.s32.totalorder %s17, 1
    %p124 = por %p122, %p123
    %p126 = scmp.ne.s32.totalorder %s111, %s125
    %p127 = scmp.eq.s32.totalorder %s17, 0
    %p128 = por %p126, %p127
    %s129 = ssub.s32 %s11, %s18
    %p130 = scmp.eq.s32.totalorder %s129, 0
    %s132 = sadd.s32 %s131, 1
    %s133 = scalar_select %p130, %s131, %s132
    %p136 = pneg %p130
    %p137 = scmp.eq.s32.totalorder %s11, 1
    %p138 = por %p136, %p137
    %p139 = scmp.ne.s32.totalorder %s131, %s134
    %p140 = scmp.eq.s32.totalorder %s11, 0
    %p141 = por %p139, %p140
    %p142 = scmp.ne.s32.totalorder %s131, %s134
    %p143 = scmp.eq.s32.totalorder %s16, 1
    %p144 = por %p142, %p143
    %p145 = scmp.ne.s32.totalorder %s134, %s135
    %p146 = scmp.eq.s32.totalorder %s16, 0
    %p147 = por %p145, %p146
    %p148 = scmp.ne.s32.totalorder %s134, %s135
    %p149 = scmp.eq.s32.totalorder %s17, 1
    %p150 = por %p148, %p149
    %p152 = scmp.ne.s32.totalorder %s135, %s151
    %p153 = scmp.eq.s32.totalorder %s17, 0
    %p154 = por %p152, %p153
    %p155 = scmp.le.s32.totalorder 1, %s11
    %p156 = scmp.lt.s32.totalorder %s11, 3
    %p157 = pnand %p155, %p156
    %p158 = pneg %p157
    // Predicated region
    $region9: #{image_encoder_forward.5} parent=5 // pred_check
      _
    $region10: #{image_encoder_forward.5} parent=5 // pred_check_branch
      %160 = sbr.rel (%p157) target = $region12
    $region11: #{image_encoder_forward.5} parent=5 // pred_region
      %s161 = ssub.s32 %s11, 1
      // Predicated region
      $region13: #{image_encoder_forward.5} parent=11 // pred_check
        %p162 = pneg %p58
      $region14: #{image_encoder_forward.5} parent=11 // pred_check_branch
        %164 = sbr.rel (%p162) target = $region16
      $region15: #{image_encoder_forward.5} parent=11 // pred_region
        _
      $region16: #{image_encoder_forward.5} parent=11 // pred_fallthru
        _
      // Predicated region
      $region17: #{image_encoder_forward.5} parent=11 // pred_check
        %p165 = pneg %p79
      $region18: #{image_encoder_forward.5} parent=11 // pred_check_branch
        %167 = sbr.rel (%p165) target = $region20
      $region19: #{image_encoder_forward.5} parent=11 // pred_region
        _
      $region20: #{image_encoder_forward.5} parent=11 // pred_fallthru
        _
      // Predicated region
      $region21: #{image_encoder_forward.5} parent=11 // pred_check
        %p168 = pneg %p100
      $region22: #{image_encoder_forward.5} parent=11 // pred_check_branch
        %170 = sbr.rel (%p168) target = $region24
      $region23: #{image_encoder_forward.5} parent=11 // pred_region
        _
      $region24: #{image_encoder_forward.5} parent=11 // pred_fallthru
        _
      // Predicated region
      $region25: #{image_encoder_forward.5} parent=11 // pred_check
        %p171 = pneg %p121
      $region26: #{image_encoder_forward.5} parent=11 // pred_check_branch
        %173 = sbr.rel (%p171) target = $region28
      $region27: #{image_encoder_forward.5} parent=11 // pred_region
        _
      $region28: #{image_encoder_forward.5} parent=11 // pred_fallthru
        _
    $region12: #{image_encoder_forward.5} parent=5 // pred_fallthru
      _
    %p174 = scmp.lt.s32.totalorder %s11, 2
    // Predicated region
    $region29: #{image_encoder_forward.5} parent=5 // pred_check
      %p175 = pneg %p174
    $region30: #{image_encoder_forward.5} parent=5 // pred_check_branch
      %177 = sbr.rel (%p175) target = $region32
    $region31: #{image_encoder_forward.5} parent=5 // pred_region
      // Predicated region
      $region33: #{image_encoder_forward.5} parent=31 // pred_check
        %p178 = pneg %p31
      $region34: #{image_encoder_forward.5} parent=31 // pred_check_branch
        %180 = sbr.rel (%p178) target = $region36
      $region35: #{image_encoder_forward.5} parent=31 // pred_region
        %p181 = scmp.lt.s32.totalorder %s11, 1
        %s182 = scalar_select %p181, %s11, 1
        %s183 = smul.addr %s182, 12
        %s184 = smul.addr %s183, 2
        %s185 = scalar_lea.vmem %s0, %s184
      $region36: #{image_encoder_forward.5} parent=31 // pred_fallthru
        _
    $region32: #{image_encoder_forward.5} parent=5 // pred_fallthru
      _
    %p186 = scmp.le.s32.totalorder 1, %s11
    %p187 = scmp.lt.s32.totalorder %s11, 3
    %p188 = pnand %p186, %p187
    %p189 = pneg %p188
    // Predicated region
    $region37: #{image_encoder_forward.5} parent=5 // pred_check
      _
    $region38: #{image_encoder_forward.5} parent=5 // pred_check_branch
      %191 = sbr.rel (%p188) target = $region40
    $region39: #{image_encoder_forward.5} parent=5 // pred_region
      %s192 = ssub.s32 %s11, 1
      %p193 = scmp.lt.s32.totalorder %s16, 1
      %s194 = scalar_select %p193, %s16, 1
      %s195 = smul.addr %s194, 12
      %s196 = smul.addr %s195, 2
      %s197 = scalar_lea.vmem %s0, %s196
      %p198 = pneg %p37
      %p199 = pneg %p34
      %p200 = pneg %p58
      %p201 = pneg %p55
      %p202 = pneg %p79
      %p203 = pneg %p76
      %p204 = pneg %p100
      %p205 = pneg %p97
      %p206 = pneg %p121
      %p207 = pneg %p118
      %p208 = pneg %p147
      %p209 = pneg %p144
      %p210 = scmp.lt.s32.totalorder %s16, 1
      %s211 = scalar_select %p210, %s16, 1
      %s212 = scalar_lea.vmem %s5, %s211
      %p213 = scmp.lt.s32.totalorder %s16, 1
      %s214 = scalar_select %p213, %s16, 1
      %s215 = smul.addr %s214, 12
      %s216 = smul.addr %s215, 2
      %s217 = scalar_lea.vmem %s0, %s216
      %p218 = scmp.lt.s32.totalorder %s16, 1
      %s219 = scalar_select %p218, %s16, 1
      %s220 = scalar_lea.vmem %s5, %s219
      %v222 = vld [vmem:[%s217] sm:$0x1]
      %v223 = vld [vmem:[%s217 + $0x8] sm:$0x1]
      %v224 = vld [vmem:[%s217 + $0x2] sm:$0x1]
      %v225 = vld [vmem:[%s217 + $0xa] sm:$0x1]
      %v226 = vld [vmem:[%s217] sm:$0x3]
      %v227 = vld [vmem:[%s217 + $0x8] sm:$0x3]
      %v228 = vld [vmem:[%s217 + $0x4] sm:$0x1]
      %v229 = vld [vmem:[%s217 + $0xc] sm:$0x1]
      %v230 = vld [vmem:[%s217 + $0x6] sm:$0x1]
      %v231 = vld [vmem:[%s217 + $0xe] sm:$0x1]
      %v232 = vld [vmem:[%s217 + $0x4] sm:$0x3]
      %v233 = vld [vmem:[%s217 + $0xc] sm:$0x3]
      %s234 = scalar_lea.vmem %s217, 8
      %v235 = vld [vmem:[%s234] sm:$0x1]
      %v236 = vld [vmem:[%s234 + $0x8] sm:$0x1]
      %v237 = vld [vmem:[%s234 + $0x2] sm:$0x1]
      %v238 = vld [vmem:[%s234 + $0xa] sm:$0x1]
      %v239 = vld [vmem:[%s234] sm:$0x3]
      %v240 = vld [vmem:[%s234 + $0x8] sm:$0x3]
      %v244 = vunpack.c.l.s4 1983009808
      %v245 = vunpack.c.0.s8 %v244
      %v246 = vlaneseq
      %v247 = vshrl.u32 %v246, 7
      %v248 = vsub.s32 %v245, %v247
      %v249 = vrot.slane %v226, %v248
      %v251 = vunpack.c.l.s4 1983009808
      %v252 = vunpack.c.0.s8 %v251
      %v253 = vlaneseq
      %v254 = vshrl.u32 %v253, 7
      %v255 = vsub.s32 %v252, %v254
      %v256 = vrot.slane %v227, %v255
      %v258 = vshrl.u32 %v249, 16
      %v260 = vshll.u32 %v249, 16
      %v262 = vrot.slane %v260, 1
      %v263 = vor.u32 %v258, %v262
      %v265 = vshrl.u32 %v256, 16
      %v267 = vshll.u32 %v256, 16
      %v269 = vrot.slane %v267, 1
      %v270 = vor.u32 %v265, %v269
      %v276 = vunpack.c.l.s4 1983009808
      %v277 = vunpack.c.0.s8 %v276
      %v278 = vlaneseq
      %v279 = vshrl.u32 %v278, 7
      %v280 = vsub.s32 %v277, %v279
      %v281 = vrot.slane %v232, %v280
      %v283 = vunpack.c.l.s4 1983009808
      %v284 = vunpack.c.0.s8 %v283
      %v285 = vlaneseq
      %v286 = vshrl.u32 %v285, 7
      %v287 = vsub.s32 %v284, %v286
      %v288 = vrot.slane %v233, %v287
      %v290 = vshrl.u32 %v281, 16
      %v292 = vshll.u32 %v281, 16
      %v294 = vrot.slane %v292, 1
      %v295 = vor.u32 %v290, %v294
      %v297 = vshrl.u32 %v288, 16
      %v299 = vshll.u32 %v288, 16
      %v301 = vrot.slane %v299, 1
      %v302 = vor.u32 %v297, %v301
      %v308 = vunpack.c.l.s4 1983009808
      %v309 = vunpack.c.0.s8 %v308
      %v310 = vlaneseq
      %v311 = vshrl.u32 %v310, 7
      %v312 = vsub.s32 %v309, %v311
      %v313 = vrot.slane %v239, %v312
      %v315 = vunpack.c.l.s4 1983009808
      %v316 = vunpack.c.0.s8 %v315
      %v317 = vlaneseq
      %v318 = vshrl.u32 %v317, 7
      %v319 = vsub.s32 %v316, %v318
      %v320 = vrot.slane %v240, %v319
      %v322 = vshrl.u32 %v313, 16
      %v324 = vshll.u32 %v313, 16
      %v326 = vrot.slane %v324, 1
      %v327 = vor.u32 %v322, %v326
      %v329 = vshrl.u32 %v320, 16
      %v331 = vshll.u32 %v320, 16
      %v333 = vrot.slane %v331, 1
      %v334 = vor.u32 %v329, %v333
      %v337 = vld [vmem:[%s4] sm:$0x1]
      %v338 = vld [vmem:[%s1] sm:$0xff]
      %v339 = vld [vmem:[%s1 + $0x8] sm:$0xff]
      %v340 = vld [vmem:[%s1 + $0x10] sm:$0xff]
      %v341 = vld [vmem:[%s1 + $0x18] sm:$0xff]
      %v342 = vld [vmem:[%s1 + $0x20] sm:$0xff]
      %v343 = vld [vmem:[%s1 + $0x28] sm:$0xff]
      %v344 = vld [vmem:[%s1 + $0x30] sm:$0xff]
      %v345 = vld [vmem:[%s1 + $0x38] sm:$0xff]
      %v346 = vld [vmem:[%s1 + $0x40] sm:$0xff]
      %v347 = vld [vmem:[%s1 + $0x48] sm:$0xff]
      %v348 = vld [vmem:[%s1 + $0x50] sm:$0xff]
      %v349 = vld [vmem:[%s1 + $0x58] sm:$0xff]
      %v350 = vld [vmem:[%s1 + $0x60] sm:$0xff]
      %v351 = vld [vmem:[%s1 + $0x68] sm:$0xff]
      %v352 = vld [vmem:[%s1 + $0x70] sm:$0xff]
      %v353 = vld [vmem:[%s1 + $0x78] sm:$0xff]
      %v354 = vld [vmem:[%s1 + $0x80] sm:$0xff]
      %v355 = vld [vmem:[%s1 + $0x88] sm:$0xff]
      %v356 = vld [vmem:[%s1 + $0x90] sm:$0xff]
      %v357 = vld [vmem:[%s1 + $0x98] sm:$0xff]
      %v358 = vld [vmem:[%s1 + $0xa0] sm:$0xff]
      %v359 = vld [vmem:[%s1 + $0xa8] sm:$0xff]
      %v360 = vld [vmem:[%s1 + $0xb0] sm:$0xff]
      %v361 = vld [vmem:[%s1 + $0xb8] sm:$0xff]
      %v362 = vld [vmem:[%s1 + $0xc0] sm:$0xff]
      %v363 = vld [vmem:[%s1 + $0xc8] sm:$0xff]
      %v364 = vld [vmem:[%s1 + $0xd0] sm:$0xff]
      %v365 = vld [vmem:[%s1 + $0xd8] sm:$0xff]
      %v366 = vld [vmem:[%s1 + $0xe0] sm:$0xff]
      %v367 = vld [vmem:[%s1 + $0xe8] sm:$0xff]
      %v368 = vld [vmem:[%s1 + $0xf0] sm:$0xff]
      %v369 = vld [vmem:[%s1 + $0xf8] sm:$0xff]
      %v370 = vld [vmem:[%s1 + $0x100] sm:$0xff]
      %v371 = vld [vmem:[%s1 + $0x108] sm:$0xff]
      %v372 = vld [vmem:[%s1 + $0x110] sm:$0xff]
      %v373 = vld [vmem:[%s1 + $0x118] sm:$0xff]
      %v374 = vld [vmem:[%s1 + $0x120] sm:$0xff]
      %v375 = vld [vmem:[%s1 + $0x128] sm:$0xff]
      %v376 = vld [vmem:[%s1 + $0x130] sm:$0xff]
      %v377 = vld [vmem:[%s1 + $0x138] sm:$0xff]
      %v378 = vld [vmem:[%s1 + $0x140] sm:$0xff]
      %v379 = vld [vmem:[%s1 + $0x148] sm:$0xff]
      %v380 = vld [vmem:[%s1 + $0x150] sm:$0xff]
      %v381 = vld [vmem:[%s1 + $0x158] sm:$0xff]
      %v382 = vld [vmem:[%s1 + $0x160] sm:$0xff]
      %v383 = vld [vmem:[%s1 + $0x168] sm:$0xff]
      %v384 = vld [vmem:[%s1 + $0x170] sm:$0xff]
      %v385 = vld [vmem:[%s1 + $0x178] sm:$0xff]
      %v386 = vld [vmem:[%s1 + $0x180] sm:$0xff]
      %v387 = vld [vmem:[%s1 + $0x188] sm:$0xff]
      %v388 = vld [vmem:[%s1 + $0x190] sm:$0xff]
      %v389 = vld [vmem:[%s1 + $0x198] sm:$0xff]
      %v390 = vld [vmem:[%s1 + $0x1a0] sm:$0xff]
      %v391 = vld [vmem:[%s1 + $0x1a8] sm:$0xff]
      %v392 = vld [vmem:[%s1 + $0x1b0] sm:$0xff]
      %v393 = vld [vmem:[%s1 + $0x1b8] sm:$0xff]
      %v394 = vld [vmem:[%s1 + $0x1c0] sm:$0xff]
      %v395 = vld [vmem:[%s1 + $0x1c8] sm:$0xff]
      %v396 = vld [vmem:[%s1 + $0x1d0] sm:$0xff]
      %v397 = vld [vmem:[%s1 + $0x1d8] sm:$0xff]
      %v398 = vld [vmem:[%s1 + $0x1e0] sm:$0xff]
      %v399 = vld [vmem:[%s1 + $0x1e8] sm:$0xff]
      %v400 = vld [vmem:[%s1 + $0x1f0] sm:$0xff]
      %v401 = vld [vmem:[%s1 + $0x1f8] sm:$0xff]
      %v402 = vld [vmem:[%s1 + $0x200] sm:$0xff]
      %v403 = vld [vmem:[%s1 + $0x208] sm:$0xff]
      %v404 = vld [vmem:[%s1 + $0x210] sm:$0xff]
      %v405 = vld [vmem:[%s1 + $0x218] sm:$0xff]
      %v406 = vld [vmem:[%s1 + $0x220] sm:$0xff]
      %v407 = vld [vmem:[%s1 + $0x228] sm:$0xff]
      %v408 = vld [vmem:[%s1 + $0x230] sm:$0xff]
      %v409 = vld [vmem:[%s1 + $0x238] sm:$0xff]
      %v410 = vld [vmem:[%s1 + $0x240] sm:$0xff]
      %v411 = vld [vmem:[%s1 + $0x248] sm:$0xff]
      %v412 = vld [vmem:[%s1 + $0x250] sm:$0xff]
      %v413 = vld [vmem:[%s1 + $0x258] sm:$0xff]
      %v414 = vld [vmem:[%s1 + $0x260] sm:$0xff]
      %v415 = vld [vmem:[%s1 + $0x268] sm:$0xff]
      %v416 = vld [vmem:[%s1 + $0x270] sm:$0xff]
      %v417 = vld [vmem:[%s1 + $0x278] sm:$0xff]
      %v418 = vld [vmem:[%s1 + $0x280] sm:$0xff]
      %v419 = vld [vmem:[%s1 + $0x288] sm:$0xff]
      %v420 = vld [vmem:[%s1 + $0x290] sm:$0xff]
      %v421 = vld [vmem:[%s1 + $0x298] sm:$0xff]
      %v422 = vld [vmem:[%s1 + $0x2a0] sm:$0xff]
      %v423 = vld [vmem:[%s1 + $0x2a8] sm:$0xff]
      %v424 = vld [vmem:[%s1 + $0x2b0] sm:$0xff]
      %v425 = vld [vmem:[%s1 + $0x2b8] sm:$0xff]
      %v426 = vld [vmem:[%s1 + $0x2c0] sm:$0xff]
      %v427 = vld [vmem:[%s1 + $0x2c8] sm:$0xff]
      %v428 = vld [vmem:[%s1 + $0x2d0] sm:$0xff]
      %v429 = vld [vmem:[%s1 + $0x2d8] sm:$0xff]
      %v430 = vld [vmem:[%s1 + $0x2e0] sm:$0xff]
      %v431 = vld [vmem:[%s1 + $0x2e8] sm:$0xff]
      %v432 = vld [vmem:[%s1 + $0x2f0] sm:$0xff]
      %v433 = vld [vmem:[%s1 + $0x2f8] sm:$0xff]
      %v434 = vld [vmem:[%s1 + $0x300] sm:$0xff]
      %v435 = vld [vmem:[%s1 + $0x308] sm:$0xff]
      %v436 = vld [vmem:[%s1 + $0x310] sm:$0xff]
      %v437 = vld [vmem:[%s1 + $0x318] sm:$0xff]
      %v438 = vld [vmem:[%s1 + $0x320] sm:$0xff]
      %v439 = vld [vmem:[%s1 + $0x328] sm:$0xff]
      %v440 = vld [vmem:[%s1 + $0x330] sm:$0xff]
      %v441 = vld [vmem:[%s1 + $0x338] sm:$0xff]
      %v442 = vld [vmem:[%s1 + $0x340] sm:$0xff]
      %v443 = vld [vmem:[%s1 + $0x348] sm:$0xff]
      %v444 = vld [vmem:[%s1 + $0x350] sm:$0xff]
      %v445 = vld [vmem:[%s1 + $0x358] sm:$0xff]
      %v446 = vld [vmem:[%s1 + $0x360] sm:$0xff]
      %v447 = vld [vmem:[%s1 + $0x368] sm:$0xff]
      %v448 = vld [vmem:[%s1 + $0x370] sm:$0xff]
      %v449 = vld [vmem:[%s1 + $0x378] sm:$0xff]
      %v450 = vld [vmem:[%s1 + $0x380] sm:$0xff]
      %v451 = vld [vmem:[%s1 + $0x388] sm:$0xff]
      %v452 = vld [vmem:[%s1 + $0x390] sm:$0xff]
      %v453 = vld [vmem:[%s1 + $0x398] sm:$0xff]
      %v454 = vld [vmem:[%s1 + $0x3a0] sm:$0xff]
      %v455 = vld [vmem:[%s1 + $0x3a8] sm:$0xff]
      %v456 = vld [vmem:[%s1 + $0x3b0] sm:$0xff]
      %v457 = vld [vmem:[%s1 + $0x3b8] sm:$0xff]
      %v458 = vld [vmem:[%s1 + $0x3c0] sm:$0xff]
      %v459 = vld [vmem:[%s1 + $0x3c8] sm:$0xff]
      %v460 = vld [vmem:[%s1 + $0x3d0] sm:$0xff]
      %v461 = vld [vmem:[%s1 + $0x3d8] sm:$0xff]
      %v462 = vld [vmem:[%s1 + $0x3e0] sm:$0xff]
      %v463 = vld [vmem:[%s1 + $0x3e8] sm:$0xff]
      %v464 = vld [vmem:[%s1 + $0x3f0] sm:$0xff]
      %v465 = vld [vmem:[%s1 + $0x3f8] sm:$0xff]
      %v466 = vld [vmem:[%s1 + $0x400] sm:$0xff]
      %v467 = vld [vmem:[%s1 + $0x408] sm:$0xff]
      %v468 = vld [vmem:[%s1 + $0x410] sm:$0xff]
      %v469 = vld [vmem:[%s1 + $0x418] sm:$0xff]
      %v470 = vld [vmem:[%s1 + $0x420] sm:$0xff]
      %v471 = vld [vmem:[%s1 + $0x428] sm:$0xff]
      %v472 = vld [vmem:[%s1 + $0x430] sm:$0xff]
      %v473 = vld [vmem:[%s1 + $0x438] sm:$0xff]
      %v474 = vld [vmem:[%s1 + $0x440] sm:$0xff]
      %v475 = vld [vmem:[%s1 + $0x448] sm:$0xff]
      %v476 = vld [vmem:[%s1 + $0x450] sm:$0xff]
      %v477 = vld [vmem:[%s1 + $0x458] sm:$0xff]
      %v478 = vld [vmem:[%s1 + $0x460] sm:$0xff]
      %v479 = vld [vmem:[%s1 + $0x468] sm:$0xff]
      %v480 = vld [vmem:[%s1 + $0x470] sm:$0xff]
      %v481 = vld [vmem:[%s1 + $0x478] sm:$0xff]
      %v482 = vld [vmem:[%s2] sm:$0x3]
      %v484 = vlaneseq
      %v485 = vshrl.u32 %v484, 7
      %v486 = vsub.s32 0, %v485
      %v487 = vrot.slane %v482, %v486
      %v488 = vlaneseq
      %v489 = vshrl.u32 %v488, 7
      %v490 = vsub.s32 1, %v489
      %v491 = vrot.slane %v482, %v490
      %v638 = vunpack.c.l.b16 %v338
      %v639 = vunpack.c.h.b16 %v338
      %v640 = vunpack.c.l.b16 %v339
      %v641 = vunpack.c.h.b16 %v339
      %v642 = vunpack.c.l.b16 %v340
      %v643 = vunpack.c.h.b16 %v340
      %v644 = vunpack.c.l.b16 %v341
      %v645 = vunpack.c.h.b16 %v341
      %v646 = vunpack.c.l.b16 %v342
      %v647 = vunpack.c.h.b16 %v342
      %v648 = vunpack.c.l.b16 %v343
      %v649 = vunpack.c.h.b16 %v343
      %v650 = vunpack.c.l.b16 %v344
      %v651 = vunpack.c.h.b16 %v344
      %v652 = vunpack.c.l.b16 %v345
      %v653 = vunpack.c.h.b16 %v345
      %v654 = vunpack.c.l.b16 %v346
      %v655 = vunpack.c.h.b16 %v346
      %v656 = vunpack.c.l.b16 %v347
      %v657 = vunpack.c.h.b16 %v347
      %v658 = vunpack.c.l.b16 %v348
      %v659 = vunpack.c.h.b16 %v348
      %v660 = vunpack.c.l.b16 %v349
      %v661 = vunpack.c.h.b16 %v349
      %v662 = vunpack.c.l.b16 %v350
      %v663 = vunpack.c.h.b16 %v350
      %v664 = vunpack.c.l.b16 %v351
      %v665 = vunpack.c.h.b16 %v351
      %v666 = vunpack.c.l.b16 %v352
      %v667 = vunpack.c.h.b16 %v352
      %v668 = vunpack.c.l.b16 %v353
      %v669 = vunpack.c.h.b16 %v353
      %v670 = vunpack.c.l.b16 %v354
      %v671 = vunpack.c.h.b16 %v354
      %v672 = vunpack.c.l.b16 %v355
      %v673 = vunpack.c.h.b16 %v355
      %v674 = vunpack.c.l.b16 %v356
      %v675 = vunpack.c.h.b16 %v356
      %v676 = vunpack.c.l.b16 %v357
      %v677 = vunpack.c.h.b16 %v357
      %v678 = vunpack.c.l.b16 %v358
      %v679 = vunpack.c.h.b16 %v358
      %v680 = vunpack.c.l.b16 %v359
      %v681 = vunpack.c.h.b16 %v359
      %v682 = vunpack.c.l.b16 %v360
      %v683 = vunpack.c.h.b16 %v360
      %v684 = vunpack.c.l.b16 %v361
      %v685 = vunpack.c.h.b16 %v361
      %v686 = vunpack.c.l.b16 %v362
      %v687 = vunpack.c.h.b16 %v362
      %v688 = vunpack.c.l.b16 %v363
      %v689 = vunpack.c.h.b16 %v363
      %v690 = vunpack.c.l.b16 %v364
      %v691 = vunpack.c.h.b16 %v364
      %v692 = vunpack.c.l.b16 %v365
      %v693 = vunpack.c.h.b16 %v365
      %v694 = vunpack.c.l.b16 %v366
      %v695 = vunpack.c.h.b16 %v366
      %v696 = vunpack.c.l.b16 %v367
      %v697 = vunpack.c.h.b16 %v367
      %v698 = vunpack.c.l.b16 %v368
      %v699 = vunpack.c.h.b16 %v368
      %v700 = vunpack.c.l.b16 %v369
      %v701 = vunpack.c.h.b16 %v369
      %v702 = vunpack.c.l.b16 %v370
      %v703 = vunpack.c.h.b16 %v370
      %v704 = vunpack.c.l.b16 %v371
      %v705 = vunpack.c.h.b16 %v371
      %v706 = vunpack.c.l.b16 %v372
      %v707 = vunpack.c.h.b16 %v372
      %v708 = vunpack.c.l.b16 %v373
      %v709 = vunpack.c.h.b16 %v373
      %v710 = vunpack.c.l.b16 %v374
      %v711 = vunpack.c.h.b16 %v374
      %v712 = vunpack.c.l.b16 %v375
      %v713 = vunpack.c.h.b16 %v375
      %v714 = vunpack.c.l.b16 %v376
      %v715 = vunpack.c.h.b16 %v376
      %v716 = vunpack.c.l.b16 %v377
      %v717 = vunpack.c.h.b16 %v377
      %v718 = vunpack.c.l.b16 %v378
      %v719 = vunpack.c.h.b16 %v378
      %v720 = vunpack.c.l.b16 %v379
      %v721 = vunpack.c.h.b16 %v379
      %v722 = vunpack.c.l.b16 %v380
      %v723 = vunpack.c.h.b16 %v380
      %v724 = vunpack.c.l.b16 %v381
      %v725 = vunpack.c.h.b16 %v381
      %v726 = vunpack.c.l.b16 %v382
      %v727 = vunpack.c.h.b16 %v382
      %v728 = vunpack.c.l.b16 %v383
      %v729 = vunpack.c.h.b16 %v383
      %v730 = vunpack.c.l.b16 %v384
      %v731 = vunpack.c.h.b16 %v384
      %v732 = vunpack.c.l.b16 %v385
      %v733 = vunpack.c.h.b16 %v385
      %v734 = vunpack.c.l.b16 %v386
      %v735 = vunpack.c.h.b16 %v386
      %v736 = vunpack.c.l.b16 %v387
      %v737 = vunpack.c.h.b16 %v387
      %v738 = vunpack.c.l.b16 %v388
      %v739 = vunpack.c.h.b16 %v388
      %v740 = vunpack.c.l.b16 %v389
      %v741 = vunpack.c.h.b16 %v389
      %v742 = vunpack.c.l.b16 %v390
      %v743 = vunpack.c.h.b16 %v390
      %v744 = vunpack.c.l.b16 %v391
      %v745 = vunpack.c.h.b16 %v391
      %v746 = vunpack.c.l.b16 %v392
      %v747 = vunpack.c.h.b16 %v392
      %v748 = vunpack.c.l.b16 %v393
      %v749 = vunpack.c.h.b16 %v393
      %v750 = vunpack.c.l.b16 %v394
      %v751 = vunpack.c.h.b16 %v394
      %v752 = vunpack.c.l.b16 %v395
      %v753 = vunpack.c.h.b16 %v395
      %v754 = vunpack.c.l.b16 %v396
      %v755 = vunpack.c.h.b16 %v396
      %v756 = vunpack.c.l.b16 %v397
      %v757 = vunpack.c.h.b16 %v397
      %v758 = vunpack.c.l.b16 %v398
      %v759 = vunpack.c.h.b16 %v398
      %v760 = vunpack.c.l.b16 %v399
      %v761 = vunpack.c.h.b16 %v399
      %v762 = vunpack.c.l.b16 %v400
      %v763 = vunpack.c.h.b16 %v400
      %v764 = vunpack.c.l.b16 %v401
      %v765 = vunpack.c.h.b16 %v401
      %v766 = vunpack.c.l.b16 %v402
      %v767 = vunpack.c.h.b16 %v402
      %v768 = vunpack.c.l.b16 %v403
      %v769 = vunpack.c.h.b16 %v403
      %v770 = vunpack.c.l.b16 %v404
      %v771 = vunpack.c.h.b16 %v404
      %v772 = vunpack.c.l.b16 %v405
      %v773 = vunpack.c.h.b16 %v405
      %v774 = vunpack.c.l.b16 %v406
      %v775 = vunpack.c.h.b16 %v406
      %v776 = vunpack.c.l.b16 %v407
      %v777 = vunpack.c.h.b16 %v407
      %v778 = vunpack.c.l.b16 %v408
      %v779 = vunpack.c.h.b16 %v408
      %v780 = vunpack.c.l.b16 %v409
      %v781 = vunpack.c.h.b16 %v409
      %v782 = vunpack.c.l.b16 %v410
      %v783 = vunpack.c.h.b16 %v410
      %v784 = vunpack.c.l.b16 %v411
      %v785 = vunpack.c.h.b16 %v411
      %v786 = vunpack.c.l.b16 %v412
      %v787 = vunpack.c.h.b16 %v412
      %v788 = vunpack.c.l.b16 %v413
      %v789 = vunpack.c.h.b16 %v413
      %v790 = vunpack.c.l.b16 %v414
      %v791 = vunpack.c.h.b16 %v414
      %v792 = vunpack.c.l.b16 %v415
      %v793 = vunpack.c.h.b16 %v415
      %v794 = vunpack.c.l.b16 %v416
      %v795 = vunpack.c.h.b16 %v416
      %v796 = vunpack.c.l.b16 %v417
      %v797 = vunpack.c.h.b16 %v417
      %v798 = vunpack.c.l.b16 %v418
      %v799 = vunpack.c.h.b16 %v418
      %v800 = vunpack.c.l.b16 %v419
      %v801 = vunpack.c.h.b16 %v419
      %v802 = vunpack.c.l.b16 %v420
      %v803 = vunpack.c.h.b16 %v420
      %v804 = vunpack.c.l.b16 %v421
      %v805 = vunpack.c.h.b16 %v421
      %v806 = vunpack.c.l.b16 %v422
      %v807 = vunpack.c.h.b16 %v422
      %v808 = vunpack.c.l.b16 %v423
      %v809 = vunpack.c.h.b16 %v423
      %v810 = vunpack.c.l.b16 %v424
      %v811 = vunpack.c.h.b16 %v424
      %v812 = vunpack.c.l.b16 %v425
      %v813 = vunpack.c.h.b16 %v425
      %v814 = vunpack.c.l.b16 %v426
      %v815 = vunpack.c.h.b16 %v426
      %v816 = vunpack.c.l.b16 %v427
      %v817 = vunpack.c.h.b16 %v427
      %v818 = vunpack.c.l.b16 %v428
      %v819 = vunpack.c.h.b16 %v428
      %v820 = vunpack.c.l.b16 %v429
      %v821 = vunpack.c.h.b16 %v429
      %v822 = vunpack.c.l.b16 %v430
      %v823 = vunpack.c.h.b16 %v430
      %v824 = vunpack.c.l.b16 %v431
      %v825 = vunpack.c.h.b16 %v431
      %v826 = vunpack.c.l.b16 %v432
      %v827 = vunpack.c.h.b16 %v432
      %v828 = vunpack.c.l.b16 %v433
      %v829 = vunpack.c.h.b16 %v433
      %v830 = vunpack.c.l.b16 %v434
      %v831 = vunpack.c.h.b16 %v434
      %v832 = vunpack.c.l.b16 %v435
      %v833 = vunpack.c.h.b16 %v435
      %v834 = vunpack.c.l.b16 %v436
      %v835 = vunpack.c.h.b16 %v436
      %v836 = vunpack.c.l.b16 %v437
      %v837 = vunpack.c.h.b16 %v437
      %v838 = vunpack.c.l.b16 %v438
      %v839 = vunpack.c.h.b16 %v438
      %v840 = vunpack.c.l.b16 %v439
      %v841 = vunpack.c.h.b16 %v439
      %v842 = vunpack.c.l.b16 %v440
      %v843 = vunpack.c.h.b16 %v440
      %v844 = vunpack.c.l.b16 %v441
      %v845 = vunpack.c.h.b16 %v441
      %v846 = vunpack.c.l.b16 %v442
      %v847 = vunpack.c.h.b16 %v442
      %v848 = vunpack.c.l.b16 %v443
      %v849 = vunpack.c.h.b16 %v443
      %v850 = vunpack.c.l.b16 %v444
      %v851 = vunpack.c.h.b16 %v444
      %v852 = vunpack.c.l.b16 %v445
      %v853 = vunpack.c.h.b16 %v445
      %v854 = vunpack.c.l.b16 %v446
      %v855 = vunpack.c.h.b16 %v446
      %v856 = vunpack.c.l.b16 %v447
      %v857 = vunpack.c.h.b16 %v447
      %v858 = vunpack.c.l.b16 %v448
      %v859 = vunpack.c.h.b16 %v448
      %v860 = vunpack.c.l.b16 %v449
      %v861 = vunpack.c.h.b16 %v449
      %v862 = vunpack.c.l.b16 %v450
      %v863 = vunpack.c.h.b16 %v450
      %v864 = vunpack.c.l.b16 %v451
      %v865 = vunpack.c.h.b16 %v451
      %v866 = vunpack.c.l.b16 %v452
      %v867 = vunpack.c.h.b16 %v452
      %v868 = vunpack.c.l.b16 %v453
      %v869 = vunpack.c.h.b16 %v453
      %v870 = vunpack.c.l.b16 %v454
      %v871 = vunpack.c.h.b16 %v454
      %v872 = vunpack.c.l.b16 %v455
      %v873 = vunpack.c.h.b16 %v455
      %v874 = vunpack.c.l.b16 %v456
      %v875 = vunpack.c.h.b16 %v456
      %v876 = vunpack.c.l.b16 %v457
      %v877 = vunpack.c.h.b16 %v457
      %v878 = vunpack.c.l.b16 %v458
      %v879 = vunpack.c.h.b16 %v458
      %v880 = vunpack.c.l.b16 %v459
      %v881 = vunpack.c.h.b16 %v459
      %v882 = vunpack.c.l.b16 %v460
      %v883 = vunpack.c.h.b16 %v460
      %v884 = vunpack.c.l.b16 %v461
      %v885 = vunpack.c.h.b16 %v461
      %v886 = vunpack.c.l.b16 %v462
      %v887 = vunpack.c.h.b16 %v462
      %v888 = vunpack.c.l.b16 %v463
      %v889 = vunpack.c.h.b16 %v463
      %v890 = vunpack.c.l.b16 %v464
      %v891 = vunpack.c.h.b16 %v464
      %v892 = vunpack.c.l.b16 %v465
      %v893 = vunpack.c.h.b16 %v465
      %v894 = vunpack.c.l.b16 %v466
      %v895 = vunpack.c.h.b16 %v466
      %v896 = vunpack.c.l.b16 %v467
      %v897 = vunpack.c.h.b16 %v467
      %v898 = vunpack.c.l.b16 %v468
      %v899 = vunpack.c.h.b16 %v468
      %v900 = vunpack.c.l.b16 %v469
      %v901 = vunpack.c.h.b16 %v469
      %v902 = vunpack.c.l.b16 %v470
      %v903 = vunpack.c.h.b16 %v470
      %v904 = vunpack.c.l.b16 %v471
      %v905 = vunpack.c.h.b16 %v471
      %v906 = vunpack.c.l.b16 %v472
      %v907 = vunpack.c.h.b16 %v472
      %v908 = vunpack.c.l.b16 %v473
      %v909 = vunpack.c.h.b16 %v473
      %v910 = vunpack.c.l.b16 %v474
      %v911 = vunpack.c.h.b16 %v474
      %v912 = vunpack.c.l.b16 %v475
      %v913 = vunpack.c.h.b16 %v475
      %v914 = vunpack.c.l.b16 %v476
      %v915 = vunpack.c.h.b16 %v476
      %v916 = vunpack.c.l.b16 %v477
      %v917 = vunpack.c.h.b16 %v477
      %v918 = vunpack.c.l.b16 %v478
      %v919 = vunpack.c.h.b16 %v478
      %v920 = vunpack.c.l.b16 %v479
      %v921 = vunpack.c.h.b16 %v479
      %v922 = vunpack.c.l.b16 %v480
      %v923 = vunpack.c.h.b16 %v480
      %v924 = vunpack.c.l.b16 %v481
      %v925 = vunpack.c.h.b16 %v481
      %v926 = vpack.c.b16 %v640, %v638
      %v927 = vpack.c.b16 %v641, %v639
      %v928 = vpack.c.b16 %v644, %v642
      %v929 = vpack.c.b16 %v645, %v643
      %v930 = vpack.c.b16 %v648, %v646
      %v931 = vpack.c.b16 %v649, %v647
      %v932 = vpack.c.b16 %v652, %v650
      %v933 = vpack.c.b16 %v653, %v651
      %v934 = vpack.c.b16 %v656, %v654
      %v935 = vpack.c.b16 %v657, %v655
      %v936 = vpack.c.b16 %v660, %v658
      %v937 = vpack.c.b16 %v661, %v659
      %v938 = vpack.c.b16 %v664, %v662
      %v939 = vpack.c.b16 %v665, %v663
      %v940 = vpack.c.b16 %v668, %v666
      %v941 = vpack.c.b16 %v669, %v667
      %v942 = vpack.c.b16 %v672, %v670
      %v943 = vpack.c.b16 %v673, %v671
      %v944 = vpack.c.b16 %v676, %v674
      %v945 = vpack.c.b16 %v677, %v675
      %v946 = vpack.c.b16 %v680, %v678
      %v947 = vpack.c.b16 %v681, %v679
      %v948 = vpack.c.b16 %v684, %v682
      %v949 = vpack.c.b16 %v685, %v683
      %v950 = vpack.c.b16 %v688, %v686
      %v951 = vpack.c.b16 %v689, %v687
      %v952 = vpack.c.b16 %v692, %v690
      %v953 = vpack.c.b16 %v693, %v691
      %v954 = vpack.c.b16 %v696, %v694
      %v955 = vpack.c.b16 %v697, %v695
      %v956 = vpack.c.b16 %v700, %v698
      %v957 = vpack.c.b16 %v701, %v699
      %v958 = vpack.c.b16 %v704, %v702
      %v959 = vpack.c.b16 %v705, %v703
      %v960 = vpack.c.b16 %v708, %v706
      %v961 = vpack.c.b16 %v709, %v707
      %v962 = vpack.c.b16 %v712, %v710
      %v963 = vpack.c.b16 %v713, %v711
      %v964 = vpack.c.b16 %v716, %v714
      %v965 = vpack.c.b16 %v717, %v715
      %v966 = vpack.c.b16 %v720, %v718
      %v967 = vpack.c.b16 %v721, %v719
      %v968 = vpack.c.b16 %v724, %v722
      %v969 = vpack.c.b16 %v725, %v723
      %v970 = vpack.c.b16 %v728, %v726
      %v971 = vpack.c.b16 %v729, %v727
      %v972 = vpack.c.b16 %v732, %v730
      %v973 = vpack.c.b16 %v733, %v731
      %v974 = vpack.c.b16 %v736, %v734
      %v975 = vpack.c.b16 %v737, %v735
      %v976 = vpack.c.b16 %v740, %v738
      %v977 = vpack.c.b16 %v741, %v739
      %v978 = vpack.c.b16 %v744, %v742
      %v979 = vpack.c.b16 %v745, %v743
      %v980 = vpack.c.b16 %v748, %v746
      %v981 = vpack.c.b16 %v749, %v747
      %v982 = vpack.c.b16 %v752, %v750
      %v983 = vpack.c.b16 %v753, %v751
      %v984 = vpack.c.b16 %v756, %v754
      %v985 = vpack.c.b16 %v757, %v755
      %v986 = vpack.c.b16 %v760, %v758
      %v987 = vpack.c.b16 %v761, %v759
      %v988 = vpack.c.b16 %v764, %v762
      %v989 = vpack.c.b16 %v765, %v763
      %v990 = vpack.c.b16 %v768, %v766
      %v991 = vpack.c.b16 %v769, %v767
      %v992 = vpack.c.b16 %v772, %v770
      %v993 = vpack.c.b16 %v773, %v771
      %v994 = vpack.c.b16 %v776, %v774
      %v995 = vpack.c.b16 %v777, %v775
      %v996 = vpack.c.b16 %v780, %v778
      %v997 = vpack.c.b16 %v781, %v779
      %v998 = vpack.c.b16 %v784, %v782
      %v999 = vpack.c.b16 %v785, %v783
      %v1000 = vpack.c.b16 %v788, %v786
      %v1001 = vpack.c.b16 %v789, %v787
      %v1002 = vpack.c.b16 %v792, %v790
      %v1003 = vpack.c.b16 %v793, %v791
      %v1004 = vpack.c.b16 %v796, %v794
      %v1005 = vpack.c.b16 %v797, %v795
      %v1006 = vpack.c.b16 %v800, %v798
      %v1007 = vpack.c.b16 %v801, %v799
      %v1008 = vpack.c.b16 %v804, %v802
      %v1009 = vpack.c.b16 %v805, %v803
      %v1010 = vpack.c.b16 %v808, %v806
      %v1011 = vpack.c.b16 %v809, %v807
      %v1012 = vpack.c.b16 %v812, %v810
      %v1013 = vpack.c.b16 %v813, %v811
      %v1014 = vpack.c.b16 %v816, %v814
      %v1015 = vpack.c.b16 %v817, %v815
      %v1016 = vpack.c.b16 %v820, %v818
      %v1017 = vpack.c.b16 %v821, %v819
      %v1018 = vpack.c.b16 %v824, %v822
      %v1019 = vpack.c.b16 %v825, %v823
      %v1020 = vpack.c.b16 %v828, %v826
      %v1021 = vpack.c.b16 %v829, %v827
      %v1022 = vpack.c.b16 %v832, %v830
      %v1023 = vpack.c.b16 %v833, %v831
      %v1024 = vpack.c.b16 %v836, %v834
      %v1025 = vpack.c.b16 %v837, %v835
      %v1026 = vpack.c.b16 %v840, %v838
      %v1027 = vpack.c.b16 %v841, %v839
      %v1028 = vpack.c.b16 %v844, %v842
      %v1029 = vpack.c.b16 %v845, %v843
      %v1030 = vpack.c.b16 %v848, %v846
      %v1031 = vpack.c.b16 %v849, %v847
      %v1032 = vpack.c.b16 %v852, %v850
      %v1033 = vpack.c.b16 %v853, %v851
      %v1034 = vpack.c.b16 %v856, %v854
      %v1035 = vpack.c.b16 %v857, %v855
      %v1036 = vpack.c.b16 %v860, %v858
      %v1037 = vpack.c.b16 %v861, %v859
      %v1038 = vpack.c.b16 %v864, %v862
      %v1039 = vpack.c.b16 %v865, %v863
      %v1040 = vpack.c.b16 %v868, %v866
      %v1041 = vpack.c.b16 %v869, %v867
      %v1042 = vpack.c.b16 %v872, %v870
      %v1043 = vpack.c.b16 %v873, %v871
      %v1044 = vpack.c.b16 %v876, %v874
      %v1045 = vpack.c.b16 %v877, %v875
      %v1046 = vpack.c.b16 %v880, %v878
      %v1047 = vpack.c.b16 %v881, %v879
      %v1048 = vpack.c.b16 %v884, %v882
      %v1049 = vpack.c.b16 %v885, %v883
      %v1050 = vpack.c.b16 %v888, %v886
      %v1051 = vpack.c.b16 %v889, %v887
      %v1052 = vpack.c.b16 %v892, %v890
      %v1053 = vpack.c.b16 %v893, %v891
      %v1054 = vpack.c.b16 %v896, %v894
      %v1055 = vpack.c.b16 %v897, %v895
      %v1056 = vpack.c.b16 %v900, %v898
      %v1057 = vpack.c.b16 %v901, %v899
      %v1058 = vpack.c.b16 %v904, %v902
      %v1059 = vpack.c.b16 %v905, %v903
      %v1060 = vpack.c.b16 %v908, %v906
      %v1061 = vpack.c.b16 %v909, %v907
      %v1062 = vpack.c.b16 %v912, %v910
      %v1063 = vpack.c.b16 %v913, %v911
      %v1064 = vpack.c.b16 %v916, %v914
      %v1065 = vpack.c.b16 %v917, %v915
      %v1066 = vpack.c.b16 %v920, %v918
      %v1067 = vpack.c.b16 %v921, %v919
      %v1068 = vpack.c.b16 %v924, %v922
      %v1069 = vpack.c.b16 %v925, %v923
      %1214 = vmatprep.subr.bf16.mxu0 %v927
      %1215 = vmatpush1.bf16.msra.mxu0 %v926
      %1216 = vmatprep.subr.bf16.mxu0 %v929
      %1217 = vmatpush1.bf16.msra.mxu0 %v928
      %1218 = vmatprep.subr.bf16.mxu0 %v931
      %1219 = vmatpush1.bf16.msra.mxu0 %v930
      %1220 = vmatprep.subr.bf16.mxu0 %v933
      %1221 = vmatpush1.bf16.msra.mxu0 %v932
      %1222 = vmatprep.subr.bf16.mxu0 %v935
      %1223 = vmatpush1.bf16.msra.mxu0 %v934
      %1224 = vmatprep.subr.bf16.mxu0 %v937
      %1225 = vmatpush1.bf16.msra.mxu0 %v936
      %1226 = vmatprep.subr.bf16.mxu0 %v939
      %1227 = vmatpush1.bf16.msra.mxu0 %v938
      %1228 = vmatprep.subr.bf16.mxu0 %v941
      %1229 = vmatpush1.bf16.msra.mxu0 %v940
      %1230 = vmatprep.subr.bf16.mxu0 %v943
      %1231 = vmatpush1.bf16.msra.mxu0 %v942
      %1232 = vmatprep.subr.bf16.mxu0 %v945
      %1233 = vmatpush1.bf16.msra.mxu0 %v944
      %1234 = vmatprep.subr.bf16.mxu0 %v947
      %1235 = vmatpush1.bf16.msra.mxu0 %v946
      %1236 = vmatprep.subr.bf16.mxu0 %v949
      %1237 = vmatpush1.bf16.msra.mxu0 %v948
      %1238 = vmatprep.subr.bf16.mxu0 %v951
      %1239 = vmatpush1.bf16.msra.mxu0 %v950
      %1240 = vmatprep.subr.bf16.mxu0 %v953
      %1241 = vmatpush1.bf16.msra.mxu0 %v952
      %1242 = vmatprep.subr.bf16.mxu0 %v955
      %1243 = vmatpush1.bf16.msra.mxu0 %v954
      %1244 = vmatprep.subr.bf16.mxu0 %v957
      %1245 = vmatpush1.bf16.msra.mxu0 %v956
      %1246 = vmatprep.mubr.bf16.mxu0 %v224
      %1247 = vmatmul.mubr.bf16.gmra.mrb[0].mxu0 %v222
      %v1248 = vpop.f32.mrb[0].mxu0
      %v1249 = vadd.f32 %v487, %v1248
      %v1250 = vpop.f32.mrb[0].mxu0
      %v1251 = vadd.f32 %v491, %v1250
      %v1252 = vpop.f32.mrb[0].mxu0
      %v1253 = vpop.f32.mrb[0].mxu0
      %1254 = vdwg.mxu0
      %1255 = vmatprep.subr.bf16.mxu0 %v959
      %1256 = vmatpush1.bf16.msra.mxu0 %v958
      %1257 = vmatprep.subr.bf16.mxu0 %v961
      %1258 = vmatpush1.bf16.msra.mxu0 %v960
      %1259 = vmatprep.subr.bf16.mxu0 %v963
      %1260 = vmatpush1.bf16.msra.mxu0 %v962
      %1261 = vmatprep.subr.bf16.mxu0 %v965
      %1262 = vmatpush1.bf16.msra.mxu0 %v964
      %1263 = vmatprep.subr.bf16.mxu0 %v967
      %1264 = vmatpush1.bf16.msra.mxu0 %v966
      %1265 = vmatprep.subr.bf16.mxu0 %v969
      %1266 = vmatpush1.bf16.msra.mxu0 %v968
      %1267 = vmatprep.subr.bf16.mxu0 %v971
      %1268 = vmatpush1.bf16.msra.mxu0 %v970
      %1269 = vmatprep.subr.bf16.mxu0 %v973
      %1270 = vmatpush1.bf16.msra.mxu0 %v972
      %1271 = vmatprep.subr.bf16.mxu0 %v975
      %1272 = vmatpush1.bf16.msra.mxu0 %v974
      %1273 = vmatprep.subr.bf16.mxu0 %v977
      %1274 = vmatpush1.bf16.msra.mxu0 %v976
      %1275 = vmatprep.subr.bf16.mxu0 %v979
      %1276 = vmatpush1.bf16.msra.mxu0 %v978
      %1277 = vmatprep.subr.bf16.mxu0 %v981
      %1278 = vmatpush1.bf16.msra.mxu0 %v980
      %1279 = vmatprep.subr.bf16.mxu0 %v983
      %1280 = vmatpush1.bf16.msra.mxu0 %v982
      %1281 = vmatprep.subr.bf16.mxu0 %v985
      %1282 = vmatpush1.bf16.msra.mxu0 %v984
      %1283 = vmatprep.subr.bf16.mxu0 %v987
      %1284 = vmatpush1.bf16.msra.mxu0 %v986
      %1285 = vmatprep.subr.bf16.mxu0 %v989
      %1286 = vmatpush1.bf16.msra.mxu0 %v988
      %1287 = vmatprep.mubr.bf16.mxu0 %v228
      %1288 = vmatmul.mubr.bf16.gmra.mrb[0].mxu0 %v263
      %v1289 = vpop.f32.mrb[0].mxu0
      %v1290 = vadd.f32 %v1249, %v1289
      %v1291 = vpop.f32.mrb[0].mxu0
      %v1292 = vadd.f32 %v1251, %v1291
      %v1293 = vpop.f32.mrb[0].mxu0
      %v1294 = vpop.f32.mrb[0].mxu0
      %1295 = vdwg.mxu0
      %1296 = vmatprep.subr.bf16.mxu0 %v991
      %1297 = vmatpush1.bf16.msra.mxu0 %v990
      %1298 = vmatprep.subr.bf16.mxu0 %v993
      %1299 = vmatpush1.bf16.msra.mxu0 %v992
      %1300 = vmatprep.subr.bf16.mxu0 %v995
      %1301 = vmatpush1.bf16.msra.mxu0 %v994
      %1302 = vmatprep.subr.bf16.mxu0 %v997
      %1303 = vmatpush1.bf16.msra.mxu0 %v996
      %1304 = vmatprep.subr.bf16.mxu0 %v999
      %1305 = vmatpush1.bf16.msra.mxu0 %v998
      %1306 = vmatprep.subr.bf16.mxu0 %v1001
      %1307 = vmatpush1.bf16.msra.mxu0 %v1000
      %1308 = vmatprep.subr.bf16.mxu0 %v1003
      %1309 = vmatpush1.bf16.msra.mxu0 %v1002
      %1310 = vmatprep.subr.bf16.mxu0 %v1005
      %1311 = vmatpush1.bf16.msra.mxu0 %v1004
      %1312 = vmatprep.subr.bf16.mxu0 %v1007
      %1313 = vmatpush1.bf16.msra.mxu0 %v1006
      %1314 = vmatprep.subr.bf16.mxu0 %v1009
      %1315 = vmatpush1.bf16.msra.mxu0 %v1008
      %1316 = vmatprep.subr.bf16.mxu0 %v1011
      %1317 = vmatpush1.bf16.msra.mxu0 %v1010
      %1318 = vmatprep.subr.bf16.mxu0 %v1013
      %1319 = vmatpush1.bf16.msra.mxu0 %v1012
      %1320 = vmatprep.subr.bf16.mxu0 %v1015
      %1321 = vmatpush1.bf16.msra.mxu0 %v1014
      %1322 = vmatprep.subr.bf16.mxu0 %v1017
      %1323 = vmatpush1.bf16.msra.mxu0 %v1016
      %1324 = vmatprep.subr.bf16.mxu0 %v1019
      %1325 = vmatpush1.bf16.msra.mxu0 %v1018
      %1326 = vmatprep.subr.bf16.mxu0 %v1021
      %1327 = vmatpush1.bf16.msra.mxu0 %v1020
      %1328 = vmatprep.mubr.bf16.mxu0 %v295
      %1329 = vmatmul.mubr.bf16.gmra.mrb[0].mxu0 %v230
      %v1330 = vpop.f32.mrb[0].mxu0
      %v1331 = vadd.f32 %v1290, %v1330
      %v1332 = vpop.f32.mrb[0].mxu0
      %v1333 = vadd.f32 %v1292, %v1332
      %v1334 = vpop.f32.mrb[0].mxu0
      %v1335 = vpop.f32.mrb[0].mxu0
      %1336 = vdwg.mxu0
      %1337 = vmatprep.subr.bf16.mxu0 %v1023
      %1338 = vmatpush1.bf16.msra.mxu0 %v1022
      %1339 = vmatprep.subr.bf16.mxu0 %v1025
      %1340 = vmatpush1.bf16.msra.mxu0 %v1024
      %1341 = vmatprep.subr.bf16.mxu0 %v1027
      %1342 = vmatpush1.bf16.msra.mxu0 %v1026
      %1343 = vmatprep.subr.bf16.mxu0 %v1029
      %1344 = vmatpush1.bf16.msra.mxu0 %v1028
      %1345 = vmatprep.subr.bf16.mxu0 %v1031
      %1346 = vmatpush1.bf16.msra.mxu0 %v1030
      %1347 = vmatprep.subr.bf16.mxu0 %v1033
      %1348 = vmatpush1.bf16.msra.mxu0 %v1032
      %1349 = vmatprep.subr.bf16.mxu0 %v1035
      %1350 = vmatpush1.bf16.msra.mxu0 %v1034
      %1351 = vmatprep.subr.bf16.mxu0 %v1037
      %1352 = vmatpush1.bf16.msra.mxu0 %v1036
      %1353 = vmatprep.subr.bf16.mxu0 %v1039
      %1354 = vmatpush1.bf16.msra.mxu0 %v1038
      %1355 = vmatprep.subr.bf16.mxu0 %v1041
      %1356 = vmatpush1.bf16.msra.mxu0 %v1040
      %1357 = vmatprep.subr.bf16.mxu0 %v1043
      %1358 = vmatpush1.bf16.msra.mxu0 %v1042
      %1359 = vmatprep.subr.bf16.mxu0 %v1045
      %1360 = vmatpush1.bf16.msra.mxu0 %v1044
      %1361 = vmatprep.subr.bf16.mxu0 %v1047
      %1362 = vmatpush1.bf16.msra.mxu0 %v1046
      %1363 = vmatprep.subr.bf16.mxu0 %v1049
      %1364 = vmatpush1.bf16.msra.mxu0 %v1048
      %1365 = vmatprep.subr.bf16.mxu0 %v1051
      %1366 = vmatpush1.bf16.msra.mxu0 %v1050
      %1367 = vmatprep.subr.bf16.mxu0 %v1053
      %1368 = vmatpush1.bf16.msra.mxu0 %v1052
      %1369 = vmatprep.mubr.bf16.mxu0 %v237
      %1370 = vmatmul.mubr.bf16.gmra.mrb[0].mxu0 %v235
      %v1371 = vpop.f32.mrb[0].mxu0
      %v1372 = vadd.f32 %v1331, %v1371
      %v1373 = vpop.f32.mrb[0].mxu0
      %v1374 = vadd.f32 %v1333, %v1373
      %v1375 = vpop.f32.mrb[0].mxu0
      %v1376 = vpop.f32.mrb[0].mxu0
      %1377 = vdwg.mxu0
      %1378 = vmatprep.subr.bf16.mxu0 %v1055
      %1379 = vmatpush1.bf16.msra.mxu0 %v1054
      %1380 = vmatprep.subr.bf16.mxu0 %v1057
      %1381 = vmatpush1.bf16.msra.mxu0 %v1056
      %1382 = vmatprep.subr.bf16.mxu0 %v1059
      %1383 = vmatpush1.bf16.msra.mxu0 %v1058
      %1384 = vmatprep.subr.bf16.mxu0 %v1061
      %1385 = vmatpush1.bf16.msra.mxu0 %v1060
      %1386 = vmatprep.subr.bf16.mxu0 %v1063
      %1387 = vmatpush1.bf16.msra.mxu0 %v1062
      %1388 = vmatprep.subr.bf16.mxu0 %v1065
      %1389 = vmatpush1.bf16.msra.mxu0 %v1064
      %1390 = vmatprep.subr.bf16.mxu0 %v1067
      %1391 = vmatpush1.bf16.msra.mxu0 %v1066
      %1392 = vmatprep.subr.bf16.mxu0 %v1069
      %1393 = vmatpush1.bf16.msra.mxu0 %v1068
      %1394 = vmatprep.subr.bf16.mxu0 0
      %1395 = vmatpush1.bf16.msra.mxu0 0
      %1396 = vmatprep.subr.bf16.mxu0 0
      %1397 = vmatpush1.bf16.msra.mxu0 0
      %1398 = vmatprep.subr.bf16.mxu0 0
      %1399 = vmatpush1.bf16.msra.mxu0 0
      %1400 = vmatprep.subr.bf16.mxu0 0
      %1401 = vmatpush1.bf16.msra.mxu0 0
      %1402 = vmatprep.subr.bf16.mxu0 0
      %1403 = vmatpush1.bf16.msra.mxu0 0
      %1404 = vmatprep.subr.bf16.mxu0 0
      %1405 = vmatpush1.bf16.msra.mxu0 0
      %1406 = vmatprep.subr.bf16.mxu0 0
      %1407 = vmatpush1.bf16.msra.mxu0 0
      %1408 = vmatprep.subr.bf16.mxu0 0
      %1409 = vmatpush1.bf16.msra.mxu0 0
      %1410 = vmatprep.mubr.bf16.mxu0 0
      %1411 = vmatmul.mubr.bf16.gmra.mrb[0].mxu0 %v327
      %v1412 = vpop.f32.mrb[0].mxu0
      %v1413 = vadd.f32 %v1372, %v1412
      %v1414 = vpop.f32.mrb[0].mxu0
      %v1415 = vadd.f32 %v1374, %v1414
      %v1416 = vpop.f32.mrb[0].mxu0
      %v1417 = vpop.f32.mrb[0].mxu0
      %1418 = vdwg.mxu0
      %v1419 = vmax.f32 %v1413, 0.0
      %v1420 = vmax.f32 %v1415, 0.0
      %v1421 = vpack.c.bf16 %v1419, %v1419
      %v1422 = vpack.c.bf16 %v1420, %v1420
      %v1423 = vld [vmem:[%s3] sm:$0xf]
      %v1424 = vld [vmem:[%s3 + $0x4] sm:$0xf]
      %v1425 = vld [vmem:[%s3 + $0x8] sm:$0xf]
      %v1426 = vld [vmem:[%s3 + $0xc] sm:$0xf]
      %v1427 = vld [vmem:[%s3 + $0x10] sm:$0xf]
      %v1428 = vld [vmem:[%s3 + $0x14] sm:$0xf]
      %v1429 = vld [vmem:[%s3 + $0x18] sm:$0xf]
      %v1430 = vld [vmem:[%s3 + $0x1c] sm:$0xf]
      %v1431 = vld [vmem:[%s3 + $0x20] sm:$0xf]
      %v1432 = vld [vmem:[%s3 + $0x24] sm:$0xf]
      %v1433 = vld [vmem:[%s3 + $0x28] sm:$0xf]
      %v1434 = vld [vmem:[%s3 + $0x2c] sm:$0xf]
      %v1435 = vld [vmem:[%s3 + $0x30] sm:$0xf]
      %v1436 = vld [vmem:[%s3 + $0x34] sm:$0xf]
      %v1437 = vld [vmem:[%s3 + $0x38] sm:$0xf]
      %v1438 = vld [vmem:[%s3 + $0x3c] sm:$0xf]
      %v1439 = vld [vmem:[%s3 + $0x40] sm:$0xf]
      %v1440 = vld [vmem:[%s3 + $0x44] sm:$0xf]
      %v1441 = vld [vmem:[%s3 + $0x48] sm:$0xf]
      %v1442 = vld [vmem:[%s3 + $0x4c] sm:$0xf]
      %v1443 = vld [vmem:[%s3 + $0x50] sm:$0xf]
      %v1444 = vld [vmem:[%s3 + $0x54] sm:$0xf]
      %v1445 = vld [vmem:[%s3 + $0x58] sm:$0xf]
      %v1446 = vld [vmem:[%s3 + $0x5c] sm:$0xf]
      %v1447 = vld [vmem:[%s3 + $0x60] sm:$0xf]
      %v1448 = vld [vmem:[%s3 + $0x64] sm:$0xf]
      %v1449 = vld [vmem:[%s3 + $0x68] sm:$0xf]
      %v1450 = vld [vmem:[%s3 + $0x6c] sm:$0xf]
      %v1451 = vld [vmem:[%s3 + $0x70] sm:$0xf]
      %v1452 = vld [vmem:[%s3 + $0x74] sm:$0xf]
      %v1453 = vld [vmem:[%s3 + $0x78] sm:$0xf]
      %v1454 = vld [vmem:[%s3 + $0x7c] sm:$0xf]
      %v1487 = vunpack.c.l.b16 %v1423
      %v1488 = vunpack.c.l.b16 %v1424
      %v1489 = vunpack.c.l.b16 %v1425
      %v1490 = vunpack.c.l.b16 %v1426
      %v1491 = vunpack.c.l.b16 %v1427
      %v1492 = vunpack.c.l.b16 %v1428
      %v1493 = vunpack.c.l.b16 %v1429
      %v1494 = vunpack.c.l.b16 %v1430
      %v1495 = vunpack.c.l.b16 %v1431
      %v1496 = vunpack.c.l.b16 %v1432
      %v1497 = vunpack.c.l.b16 %v1433
      %v1498 = vunpack.c.l.b16 %v1434
      %v1499 = vunpack.c.l.b16 %v1435
      %v1500 = vunpack.c.l.b16 %v1436
      %v1501 = vunpack.c.l.b16 %v1437
      %v1502 = vunpack.c.l.b16 %v1438
      %v1503 = vunpack.c.l.b16 %v1439
      %v1504 = vunpack.c.l.b16 %v1440
      %v1505 = vunpack.c.l.b16 %v1441
      %v1506 = vunpack.c.l.b16 %v1442
      %v1507 = vunpack.c.l.b16 %v1443
      %v1508 = vunpack.c.l.b16 %v1444
      %v1509 = vunpack.c.l.b16 %v1445
      %v1510 = vunpack.c.l.b16 %v1446
      %v1511 = vunpack.c.l.b16 %v1447
      %v1512 = vunpack.c.l.b16 %v1448
      %v1513 = vunpack.c.l.b16 %v1449
      %v1514 = vunpack.c.l.b16 %v1450
      %v1515 = vunpack.c.l.b16 %v1451
      %v1516 = vunpack.c.l.b16 %v1452
      %v1517 = vunpack.c.l.b16 %v1453
      %v1518 = vunpack.c.l.b16 %v1454
      %v1519 = vpack.c.b16 %v1488, %v1487
      %v1520 = vpack.c.b16 %v1490, %v1489
      %v1521 = vpack.c.b16 %v1492, %v1491
      %v1522 = vpack.c.b16 %v1494, %v1493
      %v1523 = vpack.c.b16 %v1496, %v1495
      %v1524 = vpack.c.b16 %v1498, %v1497
      %v1525 = vpack.c.b16 %v1500, %v1499
      %v1526 = vpack.c.b16 %v1502, %v1501
      %v1527 = vpack.c.b16 %v1504, %v1503
      %v1528 = vpack.c.b16 %v1506, %v1505
      %v1529 = vpack.c.b16 %v1508, %v1507
      %v1530 = vpack.c.b16 %v1510, %v1509
      %v1531 = vpack.c.b16 %v1512, %v1511
      %v1532 = vpack.c.b16 %v1514, %v1513
      %v1533 = vpack.c.b16 %v1516, %v1515
      %v1534 = vpack.c.b16 %v1518, %v1517
      %1551 = vmatprep.subr.bf16.mxu0 0
      %1552 = vmatpush1.bf16.msra.mxu0 %v1519
      %1553 = vmatprep.subr.bf16.mxu0 0
      %1554 = vmatpush1.bf16.msra.mxu0 %v1520
      %1555 = vmatprep.subr.bf16.mxu0 0
      %1556 = vmatpush1.bf16.msra.mxu0 %v1521
      %1557 = vmatprep.subr.bf16.mxu0 0
      %1558 = vmatpush1.bf16.msra.mxu0 %v1522
      %1559 = vmatprep.subr.bf16.mxu0 0
      %1560 = vmatpush1.bf16.msra.mxu0 %v1523
      %1561 = vmatprep.subr.bf16.mxu0 0
      %1562 = vmatpush1.bf16.msra.mxu0 %v1524
      %1563 = vmatprep.subr.bf16.mxu0 0
      %1564 = vmatpush1.bf16.msra.mxu0 %v1525
      %1565 = vmatprep.subr.bf16.mxu0 0
      %1566 = vmatpush1.bf16.msra.mxu0 %v1526
      %1567 = vmatprep.subr.bf16.mxu0 0
      %1568 = vmatpush1.bf16.msra.mxu0 %v1527
      %1569 = vmatprep.subr.bf16.mxu0 0
      %1570 = vmatpush1.bf16.msra.mxu0 %v1528
      %1571 = vmatprep.subr.bf16.mxu0 0
      %1572 = vmatpush1.bf16.msra.mxu0 %v1529
      %1573 = vmatprep.subr.bf16.mxu0 0
      %1574 = vmatpush1.bf16.msra.mxu0 %v1530
      %1575 = vmatprep.subr.bf16.mxu0 0
      %1576 = vmatpush1.bf16.msra.mxu0 %v1531
      %1577 = vmatprep.subr.bf16.mxu0 0
      %1578 = vmatpush1.bf16.msra.mxu0 %v1532
      %1579 = vmatprep.subr.bf16.mxu0 0
      %1580 = vmatpush1.bf16.msra.mxu0 %v1533
      %1581 = vmatprep.subr.bf16.mxu0 0
      %1582 = vmatpush1.bf16.msra.mxu0 %v1534
      %1583 = vmatprep.mubr.bf16.mxu0 %v1422
      %1584 = vmatmul.mubr.bf16.gmra.mrb[0].mxu0 %v1421
      %v1585 = vpop.f32.mrb[0].mxu0
      %v1586 = vadd.f32 0.0, %v1585
      %v1587 = vpop.f32.mrb[0].mxu0
      %v1588 = vpop.f32.mrb[0].mxu0
      %v1589 = vpop.f32.mrb[0].mxu0
      %1590 = vdwg.mxu0
      %v1591 = vadd.f32 %v337, %v1586
      %v1592 = vld [vmem:[%s3 + $0x80] sm:$0xf]
      %v1593 = vld [vmem:[%s3 + $0x84] sm:$0xf]
      %v1594 = vld [vmem:[%s3 + $0x88] sm:$0xf]
      %v1595 = vld [vmem:[%s3 + $0x8c] sm:$0xf]
      %v1596 = vld [vmem:[%s3 + $0x90] sm:$0xf]
      %v1597 = vld [vmem:[%s3 + $0x94] sm:$0xf]
      %v1598 = vld [vmem:[%s3 + $0x98] sm:$0xf]
      %v1599 = vld [vmem:[%s3 + $0x9c] sm:$0xf]
      %v1600 = vld [vmem:[%s3 + $0xa0] sm:$0xf]
      %v1601 = vld [vmem:[%s3 + $0xa4] sm:$0xf]
      %v1602 = vld [vmem:[%s3 + $0xa8] sm:$0xf]
      %v1603 = vld [vmem:[%s3 + $0xac] sm:$0xf]
      %v1604 = vld [vmem:[%s3 + $0xb0] sm:$0xf]
      %v1605 = vld [vmem:[%s3 + $0xb4] sm:$0xf]
      %v1606 = vld [vmem:[%s3 + $0xb8] sm:$0xf]
      %v1607 = vld [vmem:[%s3 + $0xbc] sm:$0xf]
      %v1608 = vld [vmem:[%s3 + $0xc0] sm:$0xf]
      %v1609 = vld [vmem:[%s3 + $0xc4] sm:$0xf]
      %v1610 = vld [vmem:[%s3 + $0xc8] sm:$0xf]
      %v1611 = vld [vmem:[%s3 + $0xcc] sm:$0xf]
      %v1612 = vld [vmem:[%s3 + $0xd0] sm:$0xf]
      %v1613 = vld [vmem:[%s3 + $0xd4] sm:$0xf]
      %v1614 = vld [vmem:[%s3 + $0xd8] sm:$0xf]
      %v1615 = vld [vmem:[%s3 + $0xdc] sm:$0xf]
      %v1616 = vld [vmem:[%s3 + $0xe0] sm:$0xf]
      %v1617 = vld [vmem:[%s3 + $0xe4] sm:$0xf]
      %v1618 = vld [vmem:[%s3 + $0xe8] sm:$0xf]
      %v1619 = vld [vmem:[%s3 + $0xec] sm:$0xf]
      %v1620 = vld [vmem:[%s3 + $0xf0] sm:$0xf]
      %v1621 = vld [vmem:[%s3 + $0xf4] sm:$0xf]
      %v1622 = vld [vmem:[%s3 + $0xf8] sm:$0xf]
      %v1623 = vld [vmem:[%s3 + $0xfc] sm:$0xf]
      %v1625 = vshrl.u32 %v1421, 16
      %v1628 = vshrl.u32 %v1422, 16
      %v1664 = vunpack.c.l.b16 %v1592
      %v1665 = vunpack.c.l.b16 %v1593
      %v1666 = vunpack.c.l.b16 %v1594
      %v1667 = vunpack.c.l.b16 %v1595
      %v1668 = vunpack.c.l.b16 %v1596
      %v1669 = vunpack.c.l.b16 %v1597
      %v1670 = vunpack.c.l.b16 %v1598
      %v1671 = vunpack.c.l.b16 %v1599
      %v1672 = vunpack.c.l.b16 %v1600
      %v1673 = vunpack.c.l.b16 %v1601
      %v1674 = vunpack.c.l.b16 %v1602
      %v1675 = vunpack.c.l.b16 %v1603
      %v1676 = vunpack.c.l.b16 %v1604
      %v1677 = vunpack.c.l.b16 %v1605
      %v1678 = vunpack.c.l.b16 %v1606
      %v1679 = vunpack.c.l.b16 %v1607
      %v1680 = vunpack.c.l.b16 %v1608
      %v1681 = vunpack.c.l.b16 %v1609
      %v1682 = vunpack.c.l.b16 %v1610
      %v1683 = vunpack.c.l.b16 %v1611
      %v1684 = vunpack.c.l.b16 %v1612
      %v1685 = vunpack.c.l.b16 %v1613
      %v1686 = vunpack.c.l.b16 %v1614
      %v1687 = vunpack.c.l.b16 %v1615
      %v1688 = vunpack.c.l.b16 %v1616
      %v1689 = vunpack.c.l.b16 %v1617
      %v1690 = vunpack.c.l.b16 %v1618
      %v1691 = vunpack.c.l.b16 %v1619
      %v1692 = vunpack.c.l.b16 %v1620
      %v1693 = vunpack.c.l.b16 %v1621
      %v1694 = vunpack.c.l.b16 %v1622
      %v1695 = vunpack.c.l.b16 %v1623
      %v1696 = vpack.c.b16 %v1665, %v1664
      %v1697 = vpack.c.b16 %v1667, %v1666
      %v1698 = vpack.c.b16 %v1669, %v1668
      %v1699 = vpack.c.b16 %v1671, %v1670
      %v1700 = vpack.c.b16 %v1673, %v1672
      %v1701 = vpack.c.b16 %v1675, %v1674
      %v1702 = vpack.c.b16 %v1677, %v1676
      %v1703 = vpack.c.b16 %v1679, %v1678
      %v1704 = vpack.c.b16 %v1681, %v1680
      %v1705 = vpack.c.b16 %v1683, %v1682
      %v1706 = vpack.c.b16 %v1685, %v1684
      %v1707 = vpack.c.b16 %v1687, %v1686
      %v1708 = vpack.c.b16 %v1689, %v1688
      %v1709 = vpack.c.b16 %v1691, %v1690
      %v1710 = vpack.c.b16 %v1693, %v1692
      %v1711 = vpack.c.b16 %v1695, %v1694
      %1728 = vmatprep.subr.bf16.mxu0 0
      %1729 = vmatpush1.bf16.msra.mxu0 %v1696
      %1730 = vmatprep.subr.bf16.mxu0 0
      %1731 = vmatpush1.bf16.msra.mxu0 %v1697
      %1732 = vmatprep.subr.bf16.mxu0 0
      %1733 = vmatpush1.bf16.msra.mxu0 %v1698
      %1734 = vmatprep.subr.bf16.mxu0 0
      %1735 = vmatpush1.bf16.msra.mxu0 %v1699
      %1736 = vmatprep.subr.bf16.mxu0 0
      %1737 = vmatpush1.bf16.msra.mxu0 %v1700
      %1738 = vmatprep.subr.bf16.mxu0 0
      %1739 = vmatpush1.bf16.msra.mxu0 %v1701
      %1740 = vmatprep.subr.bf16.mxu0 0
      %1741 = vmatpush1.bf16.msra.mxu0 %v1702
      %1742 = vmatprep.subr.bf16.mxu0 0
      %1743 = vmatpush1.bf16.msra.mxu0 %v1703
      %1744 = vmatprep.subr.bf16.mxu0 0
      %1745 = vmatpush1.bf16.msra.mxu0 %v1704
      %1746 = vmatprep.subr.bf16.mxu0 0
      %1747 = vmatpush1.bf16.msra.mxu0 %v1705
      %1748 = vmatprep.subr.bf16.mxu0 0
      %1749 = vmatpush1.bf16.msra.mxu0 %v1706
      %1750 = vmatprep.subr.bf16.mxu0 0
      %1751 = vmatpush1.bf16.msra.mxu0 %v1707
      %1752 = vmatprep.subr.bf16.mxu0 0
      %1753 = vmatpush1.bf16.msra.mxu0 %v1708
      %1754 = vmatprep.subr.bf16.mxu0 0
      %1755 = vmatpush1.bf16.msra.mxu0 %v1709
      %1756 = vmatprep.subr.bf16.mxu0 0
      %1757 = vmatpush1.bf16.msra.mxu0 %v1710
      %1758 = vmatprep.subr.bf16.mxu0 0
      %1759 = vmatpush1.bf16.msra.mxu0 %v1711
      %1760 = vmatprep.mubr.bf16.mxu0 %v1628
      %1761 = vmatmul.mubr.bf16.gmra.mrb[0].mxu0 %v1625
      %v1762 = vpop.f32.mrb[0].mxu0
      %v1763 = vadd.f32 0.0, %v1762
      %v1764 = vpop.f32.mrb[0].mxu0
      %v1765 = vpop.f32.mrb[0].mxu0
      %v1766 = vpop.f32.mrb[0].mxu0
      %1767 = vdwg.mxu0
      %v1768 = vadd.f32 %v1591, %v1763
      %1769 = vmatprep.subr.bf16.mxu0 %v927
      %1770 = vmatpush1.bf16.msra.mxu0 %v926
      %1771 = vmatprep.subr.bf16.mxu0 %v929
      %1772 = vmatpush1.bf16.msra.mxu0 %v928
      %1773 = vmatprep.subr.bf16.mxu0 %v931
      %1774 = vmatpush1.bf16.msra.mxu0 %v930
      %1775 = vmatprep.subr.bf16.mxu0 %v933
      %1776 = vmatpush1.bf16.msra.mxu0 %v932
      %1777 = vmatprep.subr.bf16.mxu0 %v935
      %1778 = vmatpush1.bf16.msra.mxu0 %v934
      %1779 = vmatprep.subr.bf16.mxu0 %v937
      %1780 = vmatpush1.bf16.msra.mxu0 %v936
      %1781 = vmatprep.subr.bf16.mxu0 %v939
      %1782 = vmatpush1.bf16.msra.mxu0 %v938
      %1783 = vmatprep.subr.bf16.mxu0 %v941
      %1784 = vmatpush1.bf16.msra.mxu0 %v940
      %1785 = vmatprep.subr.bf16.mxu0 %v943
      %1786 = vmatpush1.bf16.msra.mxu0 %v942
      %1787 = vmatprep.subr.bf16.mxu0 %v945
      %1788 = vmatpush1.bf16.msra.mxu0 %v944
      %1789 = vmatprep.subr.bf16.mxu0 %v947
      %1790 = vmatpush1.bf16.msra.mxu0 %v946
      %1791 = vmatprep.subr.bf16.mxu0 %v949
      %1792 = vmatpush1.bf16.msra.mxu0 %v948
      %1793 = vmatprep.subr.bf16.mxu0 %v951
      %1794 = vmatpush1.bf16.msra.mxu0 %v950
      %1795 = vmatprep.subr.bf16.mxu0 %v953
      %1796 = vmatpush1.bf16.msra.mxu0 %v952
      %1797 = vmatprep.subr.bf16.mxu0 %v955
      %1798 = vmatpush1.bf16.msra.mxu0 %v954
      %1799 = vmatprep.subr.bf16.mxu0 %v957
      %1800 = vmatpush1.bf16.msra.mxu0 %v956
      %1801 = vmatprep.mubr.bf16.mxu0 %v225
      %1802 = vmatmul.mubr.bf16.gmra.mrb[0].mxu0 %v223
      %v1803 = vpop.f32.mrb[0].mxu0
      %v1804 = vadd.f32 %v487, %v1803
      %v1805 = vpop.f32.mrb[0].mxu0
      %v1806 = vadd.f32 %v491, %v1805
      %v1807 = vpop.f32.mrb[0].mxu0
      %v1808 = vpop.f32.mrb[0].mxu0
      %1809 = vdwg.mxu0
      %1810 = vmatprep.subr.bf16.mxu0 %v959
      %1811 = vmatpush1.bf16.msra.mxu0 %v958
      %1812 = vmatprep.subr.bf16.mxu0 %v961
      %1813 = vmatpush1.bf16.msra.mxu0 %v960
      %1814 = vmatprep.subr.bf16.mxu0 %v963
      %1815 = vmatpush1.bf16.msra.mxu0 %v962
      %1816 = vmatprep.subr.bf16.mxu0 %v965
      %1817 = vmatpush1.bf16.msra.mxu0 %v964
      %1818 = vmatprep.subr.bf16.mxu0 %v967
      %1819 = vmatpush1.bf16.msra.mxu0 %v966
      %1820 = vmatprep.subr.bf16.mxu0 %v969
      %1821 = vmatpush1.bf16.msra.mxu0 %v968
      %1822 = vmatprep.subr.bf16.mxu0 %v971
      %1823 = vmatpush1.bf16.msra.mxu0 %v970
      %1824 = vmatprep.subr.bf16.mxu0 %v973
      %1825 = vmatpush1.bf16.msra.mxu0 %v972
      %1826 = vmatprep.subr.bf16.mxu0 %v975
      %1827 = vmatpush1.bf16.msra.mxu0 %v974
      %1828 = vmatprep.subr.bf16.mxu0 %v977
      %1829 = vmatpush1.bf16.msra.mxu0 %v976
      %1830 = vmatprep.subr.bf16.mxu0 %v979
      %1831 = vmatpush1.bf16.msra.mxu0 %v978
      %1832 = vmatprep.subr.bf16.mxu0 %v981
      %1833 = vmatpush1.bf16.msra.mxu0 %v980
      %1834 = vmatprep.subr.bf16.mxu0 %v983
      %1835 = vmatpush1.bf16.msra.mxu0 %v982
      %1836 = vmatprep.subr.bf16.mxu0 %v985
      %1837 = vmatpush1.bf16.msra.mxu0 %v984
      %1838 = vmatprep.subr.bf16.mxu0 %v987
      %1839 = vmatpush1.bf16.msra.mxu0 %v986
      %1840 = vmatprep.subr.bf16.mxu0 %v989
      %1841 = vmatpush1.bf16.msra.mxu0 %v988
      %1842 = vmatprep.mubr.bf16.mxu0 %v229
      %1843 = vmatmul.mubr.bf16.gmra.mrb[0].mxu0 %v270
      %v1844 = vpop.f32.mrb[0].mxu0
      %v1845 = vadd.f32 %v1804, %v1844
      %v1846 = vpop.f32.mrb[0].mxu0
      %v1847 = vadd.f32 %v1806, %v1846
      %v1848 = vpop.f32.mrb[0].mxu0
      %v1849 = vpop.f32.mrb[0].mxu0
      %1850 = vdwg.mxu0
      %1851 = vmatprep.subr.bf16.mxu0 %v991
      %1852 = vmatpush1.bf16.msra.mxu0 %v990
      %1853 = vmatprep.subr.bf16.mxu0 %v993
      %1854 = vmatpush1.bf16.msra.mxu0 %v992
      %1855 = vmatprep.subr.bf16.mxu0 %v995
      %1856 = vmatpush1.bf16.msra.mxu0 %v994
      %1857 = vmatprep.subr.bf16.mxu0 %v997
      %1858 = vmatpush1.bf16.msra.mxu0 %v996
      %1859 = vmatprep.subr.bf16.mxu0 %v999
      %1860 = vmatpush1.bf16.msra.mxu0 %v998
      %1861 = vmatprep.subr.bf16.mxu0 %v1001
      %1862 = vmatpush1.bf16.msra.mxu0 %v1000
      %1863 = vmatprep.subr.bf16.mxu0 %v1003
      %1864 = vmatpush1.bf16.msra.mxu0 %v1002
      %1865 = vmatprep.subr.bf16.mxu0 %v1005
      %1866 = vmatpush1.bf16.msra.mxu0 %v1004
      %1867 = vmatprep.subr.bf16.mxu0 %v1007
      %1868 = vmatpush1.bf16.msra.mxu0 %v1006
      %1869 = vmatprep.subr.bf16.mxu0 %v1009
      %1870 = vmatpush1.bf16.msra.mxu0 %v1008
      %1871 = vmatprep.subr.bf16.mxu0 %v1011
      %1872 = vmatpush1.bf16.msra.mxu0 %v1010
      %1873 = vmatprep.subr.bf16.mxu0 %v1013
      %1874 = vmatpush1.bf16.msra.mxu0 %v1012
      %1875 = vmatprep.subr.bf16.mxu0 %v1015
      %1876 = vmatpush1.bf16.msra.mxu0 %v1014
      %1877 = vmatprep.subr.bf16.mxu0 %v1017
      %1878 = vmatpush1.bf16.msra.mxu0 %v1016
      %1879 = vmatprep.subr.bf16.mxu0 %v1019
      %1880 = vmatpush1.bf16.msra.mxu0 %v1018
      %1881 = vmatprep.subr.bf16.mxu0 %v1021
      %1882 = vmatpush1.bf16.msra.mxu0 %v1020
      %1883 = vmatprep.mubr.bf16.mxu0 %v302
      %1884 = vmatmul.mubr.bf16.gmra.mrb[0].mxu0 %v231
      %v1885 = vpop.f32.mrb[0].mxu0
      %v1886 = vadd.f32 %v1845, %v1885
      %v1887 = vpop.f32.mrb[0].mxu0
      %v1888 = vadd.f32 %v1847, %v1887
      %v1889 = vpop.f32.mrb[0].mxu0
      %v1890 = vpop.f32.mrb[0].mxu0
      %1891 = vdwg.mxu0
      %1892 = vmatprep.subr.bf16.mxu0 %v1023
      %1893 = vmatpush1.bf16.msra.mxu0 %v1022
      %1894 = vmatprep.subr.bf16.mxu0 %v1025
      %1895 = vmatpush1.bf16.msra.mxu0 %v1024
      %1896 = vmatprep.subr.bf16.mxu0 %v1027
      %1897 = vmatpush1.bf16.msra.mxu0 %v1026
      %1898 = vmatprep.subr.bf16.mxu0 %v1029
      %1899 = vmatpush1.bf16.msra.mxu0 %v1028
      %1900 = vmatprep.subr.bf16.mxu0 %v1031
      %1901 = vmatpush1.bf16.msra.mxu0 %v1030
      %1902 = vmatprep.subr.bf16.mxu0 %v1033
      %1903 = vmatpush1.bf16.msra.mxu0 %v1032
      %1904 = vmatprep.subr.bf16.mxu0 %v1035
      %1905 = vmatpush1.bf16.msra.mxu0 %v1034
      %1906 = vmatprep.subr.bf16.mxu0 %v1037
      %1907 = vmatpush1.bf16.msra.mxu0 %v1036
      %1908 = vmatprep.subr.bf16.mxu0 %v1039
      %1909 = vmatpush1.bf16.msra.mxu0 %v1038
      %1910 = vmatprep.subr.bf16.mxu0 %v1041
      %1911 = vmatpush1.bf16.msra.mxu0 %v1040
      %1912 = vmatprep.subr.bf16.mxu0 %v1043
      %1913 = vmatpush1.bf16.msra.mxu0 %v1042
      %1914 = vmatprep.subr.bf16.mxu0 %v1045
      %1915 = vmatpush1.bf16.msra.mxu0 %v1044
      %1916 = vmatprep.subr.bf16.mxu0 %v1047
      %1917 = vmatpush1.bf16.msra.mxu0 %v1046
      %1918 = vmatprep.subr.bf16.mxu0 %v1049
      %1919 = vmatpush1.bf16.msra.mxu0 %v1048
      %1920 = vmatprep.subr.bf16.mxu0 %v1051
      %1921 = vmatpush1.bf16.msra.mxu0 %v1050
      %1922 = vmatprep.subr.bf16.mxu0 %v1053
      %1923 = vmatpush1.bf16.msra.mxu0 %v1052
      %1924 = vmatprep.mubr.bf16.mxu0 %v238
      %1925 = vmatmul.mubr.bf16.gmra.mrb[0].mxu0 %v236
      %v1926 = vpop.f32.mrb[0].mxu0
      %v1927 = vadd.f32 %v1886, %v1926
      %v1928 = vpop.f32.mrb[0].mxu0
      %v1929 = vadd.f32 %v1888, %v1928
      %v1930 = vpop.f32.mrb[0].mxu0
      %v1931 = vpop.f32.mrb[0].mxu0
      %1932 = vdwg.mxu0
      %1933 = vmatprep.subr.bf16.mxu0 %v1055
      %1934 = vmatpush1.bf16.msra.mxu0 %v1054
      %1935 = vmatprep.subr.bf16.mxu0 %v1057
      %1936 = vmatpush1.bf16.msra.mxu0 %v1056
      %1937 = vmatprep.subr.bf16.mxu0 %v1059
      %1938 = vmatpush1.bf16.msra.mxu0 %v1058
      %1939 = vmatprep.subr.bf16.mxu0 %v1061
      %1940 = vmatpush1.bf16.msra.mxu0 %v1060
      %1941 = vmatprep.subr.bf16.mxu0 %v1063
      %1942 = vmatpush1.bf16.msra.mxu0 %v1062
      %1943 = vmatprep.subr.bf16.mxu0 %v1065
      %1944 = vmatpush1.bf16.msra.mxu0 %v1064
      %1945 = vmatprep.subr.bf16.mxu0 %v1067
      %1946 = vmatpush1.bf16.msra.mxu0 %v1066
      %1947 = vmatprep.subr.bf16.mxu0 %v1069
      %1948 = vmatpush1.bf16.msra.mxu0 %v1068
      %1949 = vmatprep.subr.bf16.mxu0 0
      %1950 = vmatpush1.bf16.msra.mxu0 0
      %1951 = vmatprep.subr.bf16.mxu0 0
      %1952 = vmatpush1.bf16.msra.mxu0 0
      %1953 = vmatprep.subr.bf16.mxu0 0
      %1954 = vmatpush1.bf16.msra.mxu0 0
      %1955 = vmatprep.subr.bf16.mxu0 0
      %1956 = vmatpush1.bf16.msra.mxu0 0
      %1957 = vmatprep.subr.bf16.mxu0 0
      %1958 = vmatpush1.bf16.msra.mxu0 0
      %1959 = vmatprep.subr.bf16.mxu0 0
      %1960 = vmatpush1.bf16.msra.mxu0 0
      %1961 = vmatprep.subr.bf16.mxu0 0
      %1962 = vmatpush1.bf16.msra.mxu0 0
      %1963 = vmatprep.subr.bf16.mxu0 0
      %1964 = vmatpush1.bf16.msra.mxu0 0
      %1965 = vmatprep.mubr.bf16.mxu0 0
      %1966 = vmatmul.mubr.bf16.gmra.mrb[0].mxu0 %v334
      %v1967 = vpop.f32.mrb[0].mxu0
      %v1968 = vadd.f32 %v1927, %v1967
      %v1969 = vpop.f32.mrb[0].mxu0
      %v1970 = vadd.f32 %v1929, %v1969
      %v1971 = vpop.f32.mrb[0].mxu0
      %v1972 = vpop.f32.mrb[0].mxu0
      %1973 = vdwg.mxu0
      %v1974 = vmax.f32 %v1968, 0.0
      %v1975 = vmax.f32 %v1970, 0.0
      %v1976 = vpack.c.bf16 %v1974, %v1974
      %v1977 = vpack.c.bf16 %v1975, %v1975
      %v1978 = vld [vmem:[%s3 + $0x100] sm:$0xf]
      %v1979 = vld [vmem:[%s3 + $0x104] sm:$0xf]
      %v1980 = vld [vmem:[%s3 + $0x108] sm:$0xf]
      %v1981 = vld [vmem:[%s3 + $0x10c] sm:$0xf]
      %v1982 = vld [vmem:[%s3 + $0x110] sm:$0xf]
      %v1983 = vld [vmem:[%s3 + $0x114] sm:$0xf]
      %v1984 = vld [vmem:[%s3 + $0x118] sm:$0xf]
      %v1985 = vld [vmem:[%s3 + $0x11c] sm:$0xf]
      %v1986 = vld [vmem:[%s3 + $0x120] sm:$0xf]
      %v1987 = vld [vmem:[%s3 + $0x124] sm:$0xf]
      %v1988 = vld [vmem:[%s3 + $0x128] sm:$0xf]
      %v1989 = vld [vmem:[%s3 + $0x12c] sm:$0xf]
      %v1990 = vld [vmem:[%s3 + $0x130] sm:$0xf]
      %v1991 = vld [vmem:[%s3 + $0x134] sm:$0xf]
      %v1992 = vld [vmem:[%s3 + $0x138] sm:$0xf]
      %v1993 = vld [vmem:[%s3 + $0x13c] sm:$0xf]
      %v1994 = vld [vmem:[%s3 + $0x140] sm:$0xf]
      %v1995 = vld [vmem:[%s3 + $0x144] sm:$0xf]
      %v1996 = vld [vmem:[%s3 + $0x148] sm:$0xf]
      %v1997 = vld [vmem:[%s3 + $0x14c] sm:$0xf]
      %v1998 = vld [vmem:[%s3 + $0x150] sm:$0xf]
      %v1999 = vld [vmem:[%s3 + $0x154] sm:$0xf]
      %v2000 = vld [vmem:[%s3 + $0x158] sm:$0xf]
      %v2001 = vld [vmem:[%s3 + $0x15c] sm:$0xf]
      %v2002 = vld [vmem:[%s3 + $0x160] sm:$0xf]
      %v2003 = vld [vmem:[%s3 + $0x164] sm:$0xf]
      %v2004 = vld [vmem:[%s3 + $0x168] sm:$0xf]
      %v2005 = vld [vmem:[%s3 + $0x16c] sm:$0xf]
      %v2006 = vld [vmem:[%s3 + $0x170] sm:$0xf]
      %v2007 = vld [vmem:[%s3 + $0x174] sm:$0xf]
      %v2008 = vld [vmem:[%s3 + $0x178] sm:$0xf]
      %v2009 = vld [vmem:[%s3 + $0x17c] sm:$0xf]
      %v2042 = vunpack.c.l.b16 %v1978
      %v2043 = vunpack.c.l.b16 %v1979
      %v2044 = vunpack.c.l.b16 %v1980
      %v2045 = vunpack.c.l.b16 %v1981
      %v2046 = vunpack.c.l.b16 %v1982
      %v2047 = vunpack.c.l.b16 %v1983
      %v2048 = vunpack.c.l.b16 %v1984
      %v2049 = vunpack.c.l.b16 %v1985
      %v2050 = vunpack.c.l.b16 %v1986
      %v2051 = vunpack.c.l.b16 %v1987
      %v2052 = vunpack.c.l.b16 %v1988
      %v2053 = vunpack.c.l.b16 %v1989
      %v2054 = vunpack.c.l.b16 %v1990
      %v2055 = vunpack.c.l.b16 %v1991
      %v2056 = vunpack.c.l.b16 %v1992
      %v2057 = vunpack.c.l.b16 %v1993
      %v2058 = vunpack.c.l.b16 %v1994
      %v2059 = vunpack.c.l.b16 %v1995
      %v2060 = vunpack.c.l.b16 %v1996
      %v2061 = vunpack.c.l.b16 %v1997
      %v2062 = vunpack.c.l.b16 %v1998
      %v2063 = vunpack.c.l.b16 %v1999
      %v2064 = vunpack.c.l.b16 %v2000
      %v2065 = vunpack.c.l.b16 %v2001
      %v2066 = vunpack.c.l.b16 %v2002
      %v2067 = vunpack.c.l.b16 %v2003
      %v2068 = vunpack.c.l.b16 %v2004
      %v2069 = vunpack.c.l.b16 %v2005
      %v2070 = vunpack.c.l.b16 %v2006
      %v2071 = vunpack.c.l.b16 %v2007
      %v2072 = vunpack.c.l.b16 %v2008
      %v2073 = vunpack.c.l.b16 %v2009
      %v2074 = vpack.c.b16 %v2043, %v2042
      %v2075 = vpack.c.b16 %v2045, %v2044
      %v2076 = vpack.c.b16 %v2047, %v2046
      %v2077 = vpack.c.b16 %v2049, %v2048
      %v2078 = vpack.c.b16 %v2051, %v2050
      %v2079 = vpack.c.b16 %v2053, %v2052
      %v2080 = vpack.c.b16 %v2055, %v2054
      %v2081 = vpack.c.b16 %v2057, %v2056
      %v2082 = vpack.c.b16 %v2059, %v2058
      %v2083 = vpack.c.b16 %v2061, %v2060
      %v2084 = vpack.c.b16 %v2063, %v2062
      %v2085 = vpack.c.b16 %v2065, %v2064
      %v2086 = vpack.c.b16 %v2067, %v2066
      %v2087 = vpack.c.b16 %v2069, %v2068
      %v2088 = vpack.c.b16 %v2071, %v2070
      %v2089 = vpack.c.b16 %v2073, %v2072
      %2106 = vmatprep.subr.bf16.mxu0 0
      %2107 = vmatpush1.bf16.msra.mxu0 %v2074
      %2108 = vmatprep.subr.bf16.mxu0 0
      %2109 = vmatpush1.bf16.msra.mxu0 %v2075
      %2110 = vmatprep.subr.bf16.mxu0 0
      %2111 = vmatpush1.bf16.msra.mxu0 %v2076
      %2112 = vmatprep.subr.bf16.mxu0 0
      %2113 = vmatpush1.bf16.msra.mxu0 %v2077
      %2114 = vmatprep.subr.bf16.mxu0 0
      %2115 = vmatpush1.bf16.msra.mxu0 %v2078
      %2116 = vmatprep.subr.bf16.mxu0 0
      %2117 = vmatpush1.bf16.msra.mxu0 %v2079
      %2118 = vmatprep.subr.bf16.mxu0 0
      %2119 = vmatpush1.bf16.msra.mxu0 %v2080
      %2120 = vmatprep.subr.bf16.mxu0 0
      %2121 = vmatpush1.bf16.msra.mxu0 %v2081
      %2122 = vmatprep.subr.bf16.mxu0 0
      %2123 = vmatpush1.bf16.msra.mxu0 %v2082
      %2124 = vmatprep.subr.bf16.mxu0 0
      %2125 = vmatpush1.bf16.msra.mxu0 %v2083
      %2126 = vmatprep.subr.bf16.mxu0 0
      %2127 = vmatpush1.bf16.msra.mxu0 %v2084
      %2128 = vmatprep.subr.bf16.mxu0 0
      %2129 = vmatpush1.bf16.msra.mxu0 %v2085
      %2130 = vmatprep.subr.bf16.mxu0 0
      %2131 = vmatpush1.bf16.msra.mxu0 %v2086
      %2132 = vmatprep.subr.bf16.mxu0 0
      %2133 = vmatpush1.bf16.msra.mxu0 %v2087
      %2134 = vmatprep.subr.bf16.mxu0 0
      %2135 = vmatpush1.bf16.msra.mxu0 %v2088
      %2136 = vmatprep.subr.bf16.mxu0 0
      %2137 = vmatpush1.bf16.msra.mxu0 %v2089
      %2138 = vmatprep.mubr.bf16.mxu0 %v1977
      %2139 = vmatmul.mubr.bf16.gmra.mrb[0].mxu0 %v1976
      %v2140 = vpop.f32.mrb[0].mxu0
      %v2141 = vadd.f32 0.0, %v2140
      %v2142 = vpop.f32.mrb[0].mxu0
      %v2143 = vpop.f32.mrb[0].mxu0
      %v2144 = vpop.f32.mrb[0].mxu0
      %2145 = vdwg.mxu0
      %v2146 = vadd.f32 %v1768, %v2141
      %v2147 = vld [vmem:[%s3 + $0x180] sm:$0xf]
      %v2148 = vld [vmem:[%s3 + $0x184] sm:$0xf]
      %v2149 = vld [vmem:[%s3 + $0x188] sm:$0xf]
      %v2150 = vld [vmem:[%s3 + $0x18c] sm:$0xf]
      %v2151 = vld [vmem:[%s3 + $0x190] sm:$0xf]
      %v2152 = vld [vmem:[%s3 + $0x194] sm:$0xf]
      %v2153 = vld [vmem:[%s3 + $0x198] sm:$0xf]
      %v2154 = vld [vmem:[%s3 + $0x19c] sm:$0xf]
      %v2155 = vld [vmem:[%s3 + $0x1a0] sm:$0xf]
      %v2156 = vld [vmem:[%s3 + $0x1a4] sm:$0xf]
      %v2157 = vld [vmem:[%s3 + $0x1a8] sm:$0xf]
      %v2158 = vld [vmem:[%s3 + $0x1ac] sm:$0xf]
      %v2159 = vld [vmem:[%s3 + $0x1b0] sm:$0xf]
      %v2160 = vld [vmem:[%s3 + $0x1b4] sm:$0xf]
      %v2161 = vld [vmem:[%s3 + $0x1b8] sm:$0xf]
      %v2162 = vld [vmem:[%s3 + $0x1bc] sm:$0xf]
      %v2163 = vld [vmem:[%s3 + $0x1c0] sm:$0xf]
      %v2164 = vld [vmem:[%s3 + $0x1c4] sm:$0xf]
      %v2165 = vld [vmem:[%s3 + $0x1c8] sm:$0xf]
      %v2166 = vld [vmem:[%s3 + $0x1cc] sm:$0xf]
      %v2167 = vld [vmem:[%s3 + $0x1d0] sm:$0xf]
      %v2168 = vld [vmem:[%s3 + $0x1d4] sm:$0xf]
      %v2169 = vld [vmem:[%s3 + $0x1d8] sm:$0xf]
      %v2170 = vld [vmem:[%s3 + $0x1dc] sm:$0xf]
      %v2171 = vld [vmem:[%s3 + $0x1e0] sm:$0xf]
      %v2172 = vld [vmem:[%s3 + $0x1e4] sm:$0xf]
      %v2173 = vld [vmem:[%s3 + $0x1e8] sm:$0xf]
      %v2174 = vld [vmem:[%s3 + $0x1ec] sm:$0xf]
      %v2175 = vld [vmem:[%s3 + $0x1f0] sm:$0xf]
      %v2176 = vld [vmem:[%s3 + $0x1f4] sm:$0xf]
      %v2177 = vld [vmem:[%s3 + $0x1f8] sm:$0xf]
      %v2178 = vld [vmem:[%s3 + $0x1fc] sm:$0xf]
      %v2180 = vshrl.u32 %v1976, 16
      %v2183 = vshrl.u32 %v1977, 16
      %v2219 = vunpack.c.l.b16 %v2147
      %v2220 = vunpack.c.l.b16 %v2148
      %v2221 = vunpack.c.l.b16 %v2149
      %v2222 = vunpack.c.l.b16 %v2150
      %v2223 = vunpack.c.l.b16 %v2151
      %v2224 = vunpack.c.l.b16 %v2152
      %v2225 = vunpack.c.l.b16 %v2153
      %v2226 = vunpack.c.l.b16 %v2154
      %v2227 = vunpack.c.l.b16 %v2155
      %v2228 = vunpack.c.l.b16 %v2156
      %v2229 = vunpack.c.l.b16 %v2157
      %v2230 = vunpack.c.l.b16 %v2158
      %v2231 = vunpack.c.l.b16 %v2159
      %v2232 = vunpack.c.l.b16 %v2160
      %v2233 = vunpack.c.l.b16 %v2161
      %v2234 = vunpack.c.l.b16 %v2162
      %v2235 = vunpack.c.l.b16 %v2163
      %v2236 = vunpack.c.l.b16 %v2164
      %v2237 = vunpack.c.l.b16 %v2165
      %v2238 = vunpack.c.l.b16 %v2166
      %v2239 = vunpack.c.l.b16 %v2167
      %v2240 = vunpack.c.l.b16 %v2168
      %v2241 = vunpack.c.l.b16 %v2169
      %v2242 = vunpack.c.l.b16 %v2170
      %v2243 = vunpack.c.l.b16 %v2171
      %v2244 = vunpack.c.l.b16 %v2172
      %v2245 = vunpack.c.l.b16 %v2173
      %v2246 = vunpack.c.l.b16 %v2174
      %v2247 = vunpack.c.l.b16 %v2175
      %v2248 = vunpack.c.l.b16 %v2176
      %v2249 = vunpack.c.l.b16 %v2177
      %v2250 = vunpack.c.l.b16 %v2178
      %v2251 = vpack.c.b16 %v2220, %v2219
      %v2252 = vpack.c.b16 %v2222, %v2221
      %v2253 = vpack.c.b16 %v2224, %v2223
      %v2254 = vpack.c.b16 %v2226, %v2225
      %v2255 = vpack.c.b16 %v2228, %v2227
      %v2256 = vpack.c.b16 %v2230, %v2229
      %v2257 = vpack.c.b16 %v2232, %v2231
      %v2258 = vpack.c.b16 %v2234, %v2233
      %v2259 = vpack.c.b16 %v2236, %v2235
      %v2260 = vpack.c.b16 %v2238, %v2237
      %v2261 = vpack.c.b16 %v2240, %v2239
      %v2262 = vpack.c.b16 %v2242, %v2241
      %v2263 = vpack.c.b16 %v2244, %v2243
      %v2264 = vpack.c.b16 %v2246, %v2245
      %v2265 = vpack.c.b16 %v2248, %v2247
      %v2266 = vpack.c.b16 %v2250, %v2249
      %2283 = vmatprep.subr.bf16.mxu0 0
      %2284 = vmatpush1.bf16.msra.mxu0 %v2251
      %2285 = vmatprep.subr.bf16.mxu0 0
      %2286 = vmatpush1.bf16.msra.mxu0 %v2252
      %2287 = vmatprep.subr.bf16.mxu0 0
      %2288 = vmatpush1.bf16.msra.mxu0 %v2253
      %2289 = vmatprep.subr.bf16.mxu0 0
      %2290 = vmatpush1.bf16.msra.mxu0 %v2254
      %2291 = vmatprep.subr.bf16.mxu0 0
      %2292 = vmatpush1.bf16.msra.mxu0 %v2255
      %2293 = vmatprep.subr.bf16.mxu0 0
      %2294 = vmatpush1.bf16.msra.mxu0 %v2256
      %2295 = vmatprep.subr.bf16.mxu0 0
      %2296 = vmatpush1.bf16.msra.mxu0 %v2257
      %2297 = vmatprep.subr.bf16.mxu0 0
      %2298 = vmatpush1.bf16.msra.mxu0 %v2258
      %2299 = vmatprep.subr.bf16.mxu0 0
      %2300 = vmatpush1.bf16.msra.mxu0 %v2259
      %2301 = vmatprep.subr.bf16.mxu0 0
      %2302 = vmatpush1.bf16.msra.mxu0 %v2260
      %2303 = vmatprep.subr.bf16.mxu0 0
      %2304 = vmatpush1.bf16.msra.mxu0 %v2261
      %2305 = vmatprep.subr.bf16.mxu0 0
      %2306 = vmatpush1.bf16.msra.mxu0 %v2262
      %2307 = vmatprep.subr.bf16.mxu0 0
      %2308 = vmatpush1.bf16.msra.mxu0 %v2263
      %2309 = vmatprep.subr.bf16.mxu0 0
      %2310 = vmatpush1.bf16.msra.mxu0 %v2264
      %2311 = vmatprep.subr.bf16.mxu0 0
      %2312 = vmatpush1.bf16.msra.mxu0 %v2265
      %2313 = vmatprep.subr.bf16.mxu0 0
      %2314 = vmatpush1.bf16.msra.mxu0 %v2266
      %2315 = vmatprep.mubr.bf16.mxu0 %v2183
      %2316 = vmatmul.mubr.bf16.gmra.mrb[0].mxu0 %v2180
      %v2317 = vpop.f32.mrb[0].mxu0
      %v2318 = vadd.f32 0.0, %v2317
      %v2319 = vpop.f32.mrb[0].mxu0
      %v2320 = vpop.f32.mrb[0].mxu0
      %v2321 = vpop.f32.mrb[0].mxu0
      %2322 = vdwg.mxu0
      %v2323 = vadd.f32 %v2146, %v2318
      %2324 = vst [vmem:[%s220] sm:$0x1] %v2323
      %p2325 = scmp.lt.s32.totalorder %s16, 1
      %s2326 = scalar_select %p2325, %s16, 1
      %s2327 = scalar_lea.vmem %s5, %s2326
      // Predicated region
      $region41: #{image_encoder_forward.5} parent=39 // pred_check
        %p2328 = pneg %p144
      $region42: #{image_encoder_forward.5} parent=39 // pred_check_branch
        %2330 = sbr.rel (%p2328) target = $region44
      $region43: #{image_encoder_forward.5} parent=39 // pred_region
        _
      $region44: #{image_encoder_forward.5} parent=39 // pred_fallthru
        _
    $region40: #{image_encoder_forward.5} parent=5 // pred_fallthru
      _
    %p2331 = scmp.le.s32.totalorder 2, %s11
    // Predicated region
    $region45: #{image_encoder_forward.5} parent=5 // pred_check
      %p2332 = pneg %p2331
    $region46: #{image_encoder_forward.5} parent=5 // pred_check_branch
      %2334 = sbr.rel (%p2332) target = $region48
    $region47: #{image_encoder_forward.5} parent=5 // pred_region
      %s2335 = ssub.s32 %s11, 2
      // Predicated region
      $region49: #{image_encoder_forward.5} parent=47 // pred_check
        %p2336 = pneg %p150
      $region50: #{image_encoder_forward.5} parent=47 // pred_check_branch
        %2338 = sbr.rel (%p2336) target = $region52
      $region51: #{image_encoder_forward.5} parent=47 // pred_region
        %p2339 = scmp.lt.s32.totalorder %s17, 1
        %s2340 = scalar_select %p2339, %s17, 1
        %s2341 = scalar_lea.vmem %s5, %s2340
      $region52: #{image_encoder_forward.5} parent=47 // pred_fallthru
        _
    $region48: #{image_encoder_forward.5} parent=5 // pred_fallthru
      _
  $region6: #{image_encoder_forward.5} parent=0 // loop_footer
    %s15 = sadd.s32 1, %s11
  $region7: #{image_encoder_forward.5} parent=0 // loop_footer_branch
    %10 = sbr.rel target = $region3
  $region8: #{image_encoder_forward.5} parent=0 // loop_exit
    _

</llo_original>
